<compile_context>
chip_gen: v5e
topology: v5e:2x2
jax: 0.10.0
libtpu: 0.0.40
codegen_flags: <defaults>
</compile_context>

<pallas_src>
import functools

import jax
import jax.numpy as jnp
from jax.experimental import pallas as pl
from jax.experimental.pallas import tpu as pltpu

_EPS = 1e-5        # torch.nn.GroupNorm default
_GROUPS = 32       # GroupNorm(32, dim) per the module
_STATIC_T_MAX = 8  # static unroll of the frame loop up to this many frames


# ---------------------------------------------------------------------------
# In-kernel helpers (traced inside the Pallas kernel bodies)
# ---------------------------------------------------------------------------
def _run_frames(n, body, init, static):
    """Frame loop: static Python unroll for small T, fori_loop otherwise."""
    if static:
        carry = init
        for t in range(n):
            carry = body(t, carry)
        return carry
    return jax.lax.fori_loop(0, n, body, init, unroll=2)


def _conv_frame(a_pad, t, c_in, w_ref):
    """One output frame of the (3,1,1) temporal conv.

    a_pad : ((T+2)*C, P) zero-padded SiLU(GN(.)) activations (compute dtype).
    The K = 3*C operand is a contiguous row-slice of the scratch (no copies,
    no per-frame zero fills).  Returns (Cout, P) float32 (bias not added).
    """
    col = a_pad[pl.ds(t * c_in, 3 * c_in)]                       # (3C, P)
    return jnp.dot(w_ref[...], col, preferred_element_type=jnp.float32)


# ---------------------------------------------------------------------------
# Pass 1: per-channel sum / sum-of-squares of x (GroupNorm-1 statistics)
# ---------------------------------------------------------------------------
def _stats_kernel(x_ref, s_ref, q_ref, *, frame_static):
    @pl.when(pl.program_id(2) == 0)
    def _():
        s_ref[...] = jnp.zeros_like(s_ref)
        q_ref[...] = jnp.zeros_like(q_ref)

    T = x_ref.shape[1]
    C = x_ref.shape[2]

    def body(t, carry):
        s_a, q_a = carry
        xt = x_ref[0, pl.ds(t, 1)][0].astype(jnp.float32)        # (C, P)
        return (s_a + jnp.sum(xt, axis=1, keepdims=True),
                q_a + jnp.sum(xt * xt, axis=1, keepdims=True))

    init = (jnp.zeros((C, 1), jnp.float32), jnp.zeros((C, 1), jnp.float32))
    s_a, q_a = _run_frames(T, body, init, frame_static)
    s_ref[0, 0] += s_a
    q_ref[0, 0] += q_a


# ---------------------------------------------------------------------------
# Pass 2: GN1 -> SiLU -> temporal conv1, fused with GroupNorm-2 statistics
# ---------------------------------------------------------------------------
def _block1_kernel(sc_ref, sh_ref, x_ref, w_ref, b_ref,
                   h_ref, s_ref, q_ref, a_pad,
                   *, frame_static, padded, hw_real, n_inner):
    @pl.when(pl.program_id(2) == 0)
    def _():
        s_ref[...] = jnp.zeros_like(s_ref)
        q_ref[...] = jnp.zeros_like(q_ref)

    T = x_ref.shape[1]
    C = x_ref.shape[2]
    P = x_ref.shape[3]
    Cout = b_ref.shape[0]

    sc = sc_ref[0]                                               # (C, 1) f32
    sh = sh_ref[0]

    zeros_cp = jnp.zeros((C, P), a_pad.dtype)
    a_pad[pl.ds(0, C)] = zeros_cp                                # pad frame t=-1
    a_pad[pl.ds((T + 1) * C, C)] = zeros_cp                      # pad frame t=T

    # GN1 affine + SiLU per frame (f32 temps stay (C, P), not (T, C, P)).
    def fill(t, carry):
        xt = x_ref[0, pl.ds(t, 1)][0].astype(jnp.float32)
        xn = xt * sc + sh
        a_pad[pl.ds((t + 1) * C, C)] = (xn * jax.nn.sigmoid(xn)).astype(a_pad.dtype)
        return carry

    _run_frames(T, fill, 0, frame_static)

    if padded:
        lane = jax.lax.broadcasted_iota(jnp.int32, (1, P), 1)
        start = (pl.program_id(1) * n_inner + pl.program_id(2)) * P
        valid = (lane + start) < hw_real

    bias = b_ref[...]                                            # (Cout, 1) f32

    def body(t, carry):
        s_a, q_a = carry
        y = _conv_frame(a_pad, t, C, w_ref) + bias               # (Cout, P) f32
        if padded:
            y = jnp.where(valid, y, 0.0)                         # exact GN2 stats
        h_ref[0, pl.ds(t, 1)] = y.astype(h_ref.dtype)[None]
        return (s_a + jnp.sum(y, axis=1, keepdims=True),
                q_a + jnp.sum(y * y, axis=1, keepdims=True))

    init = (jnp.zeros((Cout, 1), jnp.float32), jnp.zeros((Cout, 1), jnp.float32))
    s_a, q_a = _run_frames(T, body, init, frame_static)
    s_ref[0, 0] += s_a
    q_ref[0, 0] += q_a


# ---------------------------------------------------------------------------
# Pass 3: GN2 -> SiLU -> temporal conv2 -> residual mix with clamped alpha
# ---------------------------------------------------------------------------
def _block2_kernel(alpha_ref, sc_ref, sh_ref, h_ref, x_ref, w_ref, b_ref,
                   o_ref, a_pad, *, frame_static):
    T = h_ref.shape[1]
    C = h_ref.shape[2]
    P = h_ref.shape[3]

    sc = sc_ref[0]
    sh = sh_ref[0]

    zeros_cp = jnp.zeros((C, P), a_pad.dtype)
    a_pad[pl.ds(0, C)] = zeros_cp
    a_pad[pl.ds((T + 1) * C, C)] = zeros_cp

    def fill(t, carry):
        ht = h_ref[0, pl.ds(t, 1)][0].astype(jnp.float32)
        hn = ht * sc + sh
        a_pad[pl.ds((t + 1) * C, C)] = (hn * jax.nn.sigmoid(hn)).astype(a_pad.dtype)
        return carry

    _run_frames(T, fill, 0, frame_static)

    bias = b_ref[...]                                            # (Cout, 1) f32
    alpha = jnp.clip(alpha_ref[0], 0.0, 1.0)                     # alpha.clamp_(0,1)

    def body(t, carry):
        y = _conv_frame(a_pad, t, C, w_ref) + bias               # (Cout, P) f32
        x_t = x_ref[0, pl.ds(t, 1)][0].astype(jnp.float32)
        o = alpha * x_t + (1.0 - alpha) * y
        o_ref[0, pl.ds(t, 1)] = o.astype(o_ref.dtype)[None]
        return carry

    _run_frames(T, body, 0, frame_static)


# ---------------------------------------------------------------------------
# Wrapper-side glue (tiny O(B*C) math between the Pallas passes)
# ---------------------------------------------------------------------------
def _gn_affine(s, q, gamma, beta, count_per_channel):
    """Group-reduce per-channel sums -> per-channel (scale, shift), f32."""
    s = jnp.sum(s, axis=1)                                       # (B, C, 1)
    q = jnp.sum(q, axis=1)
    B, C, _ = s.shape
    cpg = C // _GROUPS
    n = float(count_per_channel * cpg)
    sg = jnp.sum(s.reshape(B, _GROUPS, cpg), axis=-1, keepdims=True)
    qg = jnp.sum(q.reshape(B, _GROUPS, cpg), axis=-1, keepdims=True)
    mean = sg / n
    var = qg / n - mean * mean                                   # biased (torch)
    inv = jax.lax.rsqrt(var + _EPS)
    mean = jnp.broadcast_to(mean, (B, _GROUPS, cpg)).reshape(B, C, 1)
    inv = jnp.broadcast_to(inv, (B, _GROUPS, cpg)).reshape(B, C, 1)
    gamma = gamma.reshape(1, C, 1).astype(jnp.float32)
    beta = beta.reshape(1, C, 1).astype(jnp.float32)
    scale = inv * gamma
    shift = beta - mean * scale
    return scale, shift


def _round_up(x, m):
    return (x + m - 1) // m * m


def _vmem_capacity_bytes():
    try:
        cap = getattr(pltpu.get_tpu_info(), "vmem_capacity_bytes", None)
        if cap:
            return int(cap)
    except Exception:
        pass
    return 64 * 2**20           # conservative default (v7x per-core VMEM)


@functools.partial(jax.jit, static_argnames=("num_frames", "hw_tile",
                                             "compute_dtype"))
def conv3d_layer_pallas(x_nchw, params, *, num_frames, hw_tile=None,
                        compute_dtype=jnp.bfloat16):
    BT, C, H, W = x_nchw.shape
    T = num_frames
    assert BT % T == 0
    B = BT // T
    HW = H * W
    Cout = params["w1"].shape[0]
    in_dtype = x_nchw.dtype
    assert Cout == C, "residual mix requires in_dim == out_dim"
    assert C % _GROUPS == 0, "GroupNorm(32, C) requires C % 32 == 0"

    x_bytes = jnp.dtype(in_dtype).itemsize
    c_bytes = jnp.dtype(compute_dtype).itemsize

    # --- generation-aware spatial tiling -----------------------------------
    cap = _vmem_capacity_bytes()
    # Dominant (block2) per-lane footprint: double-buffered x/h/out blocks,
    # the ((T+2)*C, P) activation scratch and a few (C, P) f32 temps.
    per_p = C * (T * 2 * (x_bytes + c_bytes + x_bytes) + (T + 2) * c_bytes) + C * 64
    if hw_tile is None:
        budget = int(cap * 0.55)
        hw_ceil = _round_up(HW, 128)
        hw_tile = max(128, min(hw_ceil, 1024, (budget // per_p) // 128 * 128))
    assert hw_tile % 128 == 0, "hw_tile must be a multiple of 128 (lane width)"
    hw_padded = _round_up(HW, hw_tile)
    padded = hw_padded != HW
    vmem_limit = int(max(16 << 20,
                         min(cap - (4 << 20),
                             max(32 << 20, int(1.25 * per_p * hw_tile)))))

    n_hw = hw_padded // hw_tile
    n_outer = 2 if n_hw % 2 == 0 else 1     # extra 'parallel' axis (v7x 2 TCs)
    n_inner = n_hw // n_outer
    grid = (B, n_outer, n_inner)
    frame_static = T <= _STATIC_T_MAX

    # Free reshape to (B, T, C, HW); pad lanes only when HW % hw_tile != 0.
    x = x_nchw.reshape(B, T, C, HW)
    if padded:
        x = jnp.pad(x, ((0, 0), (0, 0), (0, 0), (0, hw_padded - HW)))

    # Temporal-conv weights as a single (Cout, 3*Cin) im2col matrix.
    def prep_w(w):                                  # torch layout (Cout, Cin, 3)
        return jnp.concatenate([w[:, :, 0], w[:, :, 1], w[:, :, 2]],
                               axis=1).astype(compute_dtype)

    w1 = prep_w(params["w1"])
    w2 = prep_w(params["w2"])
    b1 = params["b1"].reshape(Cout, 1).astype(jnp.float32)
    b2 = params["b2"].reshape(Cout, 1).astype(jnp.float32)
    alpha = params["alpha"].reshape(1).astype(jnp.float32)

    data_spec = pl.BlockSpec((1, T, C, hw_tile),
                             lambda b, o, i: (b, 0, 0, o * n_inner + i))
    vec_spec = pl.BlockSpec((1, C, 1), lambda b, o, i: (b, 0, 0))
    stat_spec = pl.BlockSpec((1, 1, C, 1), lambda b, o, i: (b, o, 0, 0))
    full = lambda a: pl.BlockSpec(a.shape, lambda b, o, i, _n=a.ndim: (0,) * _n)
    smem_spec = pl.BlockSpec(memory_space=pltpu.MemorySpace.SMEM)
    # NOTE: weights/bias are grid-invariant; default (double) buffering kept
    # for portability -- their footprint is tiny relative to the data blocks.

    cp_acc = pltpu.CompilerParams(
        dimension_semantics=("parallel", "parallel", "arbitrary"),
        vmem_limit_bytes=vmem_limit)
    cp_par = pltpu.CompilerParams(
        dimension_semantics=("parallel", "parallel", "parallel"),
        vmem_limit_bytes=vmem_limit)

    a_pad_scratch = pltpu.VMEM(((T + 2) * C, hw_tile), compute_dtype)

    # ---- pass 1: GroupNorm-1 statistics (f32 accumulation) ----------------
    s1, q1 = pl.pallas_call(
        functools.partial(_stats_kernel, frame_static=frame_static),
        grid=grid,
        in_specs=[data_spec],
        out_specs=(stat_spec, stat_spec),
        out_shape=(jax.ShapeDtypeStruct((B, n_outer, C, 1), jnp.float32),
                   jax.ShapeDtypeStruct((B, n_outer, C, 1), jnp.float32)),
        compiler_params=cp_acc,
    )(x)
    scale1, shift1 = _gn_affine(s1, q1, params["gn1_w"], params["gn1_b"], T * HW)

    # ---- pass 2: block1 (GN1 -> SiLU -> conv1) + GroupNorm-2 statistics ---
    kb1 = functools.partial(_block1_kernel, frame_static=frame_static,
                            padded=padded, hw_real=HW, n_inner=n_inner)
    h, s2, q2 = pl.pallas_call(
        kb1,
        grid=grid,
        in_specs=[vec_spec, vec_spec, data_spec, full(w1), full(b1)],
        out_specs=(data_spec, stat_spec, stat_spec),
        out_shape=(jax.ShapeDtypeStruct((B, T, Cout, hw_padded), compute_dtype),
                   jax.ShapeDtypeStruct((B, n_outer, Cout, 1), jnp.float32),
                   jax.ShapeDtypeStruct((B, n_outer, Cout, 1), jnp.float32)),
        scratch_shapes=[a_pad_scratch],
        compiler_params=cp_acc,
    )(scale1, shift1, x, w1, b1)
    scale2, shift2 = _gn_affine(s2, q2, params["gn2_w"], params["gn2_b"], T * HW)

    # ---- pass 3: block2 (GN2 -> SiLU -> conv2) + residual mix -------------
    kb2 = functools.partial(_block2_kernel, frame_static=frame_static)
    out = pl.pallas_call(
        kb2,
        grid=grid,
        in_specs=[smem_spec, vec_spec, vec_spec, data_spec, data_spec,
                  full(w2), full(b2)],
        out_specs=data_spec,
        out_shape=jax.ShapeDtypeStruct((B, T, C, hw_padded), in_dtype),
        scratch_shapes=[a_pad_scratch],
        compiler_params=cp_par,
    )(alpha, scale2, shift2, h, x, w2, b2)

    if padded:
        out = out[..., :HW]
    # Free reshape back to the module's (B*T, C, H, W); dtype == input dtype.
    return out.reshape(BT, C, H, W)


# ---------------------------------------------------------------------------
# Pure-JAX reference (XLA conv / groupnorm) for correctness check
# ---------------------------------------------------------------------------
def _ref_group_norm(x5, gamma, beta, groups):
    B, C, T, H, W = x5.shape
    xg = x5.reshape(B, groups, C // groups, T, H, W)
    mean = xg.mean(axis=(2, 3, 4, 5), keepdims=True)
    var = xg.var(axis=(2, 3, 4, 5), keepdims=True)
    xn = ((xg - mean) / jnp.sqrt(var + _EPS)).reshape(B, C, T, H, W)
    return xn * gamma.reshape(1, -1, 1, 1, 1) + beta.reshape(1, -1, 1, 1, 1)


def _ref_conv3d(x5, w, b):
    w5 = w[:, :, :, None, None]                     # (Cout, Cin, 3, 1, 1)
    y = jax.lax.conv_general_dilated(
        x5, w5, window_strides=(1, 1, 1),
        padding=((1, 1), (0, 0), (0, 0)),
        dimension_numbers=("NCDHW", "OIDHW", "NCDHW"))
    return y + b.reshape(1, -1, 1, 1, 1)


def conv3d_layer_reference(x_nchw, params, *, num_frames):
    BT, C, H, W = x_nchw.shape
    T = num_frames
    B = BT // T
    h = x_nchw.reshape(B, T, C, H, W).transpose(0, 2, 1, 3, 4)   # (B,C,T,H,W)
    h = _ref_group_norm(h, params["gn1_w"], params["gn1_b"], _GROUPS)
    h = h * jax.nn.sigmoid(h)
    h = _ref_conv3d(h, params["w1"], params["b1"])
    h = _ref_group_norm(h, params["gn2_w"], params["gn2_b"], _GROUPS)
    h = h * jax.nn.sigmoid(h)
    h = _ref_conv3d(h, params["w2"], params["b2"])
    h = h.transpose(0, 2, 1, 3, 4).reshape(BT, -1, H, W)
    alpha = jnp.clip(params["alpha"], 0.0, 1.0)
    return alpha * x_nchw + (1.0 - alpha) * h


# ---------------------------------------------------------------------------
if __name__ == "__main__":
    def make_params(key, C):
        ks = jax.random.split(key, 8)
        return {
            "gn1_w": 1.0 + 0.1 * jax.random.normal(ks[0], (C,), jnp.float32),
            "gn1_b": 0.1 * jax.random.normal(ks[1], (C,), jnp.float32),
            "w1":    0.1 * jax.random.normal(ks[2], (C, C, 3), jnp.float32),
            "b1":    0.1 * jax.random.normal(ks[3], (C,), jnp.float32),
            "gn2_w": 1.0 + 0.1 * jax.random.normal(ks[4], (C,), jnp.float32),
            "gn2_b": 0.1 * jax.random.normal(ks[5], (C,), jnp.float32),
            "w2":    0.1 * jax.random.normal(ks[6], (C, C, 3), jnp.float32),
            "b2":    0.1 * jax.random.normal(ks[7], (C,), jnp.float32),
            # module inits alpha=1 (identity mix); use 0.3 so the conv path matters
            "alpha": jnp.array([0.3], jnp.float32),
        }

    key = jax.random.PRNGKey(0)
    k_a, k_b, kp_a, kp_b = jax.random.split(key, 4)

    # --- Test A: multi-tile two-pass GN, static frame loop, no padding -----
    B, T, C, H, W = 2, 4, 32, 16, 16               # GroupNorm(32, C) => C >= 32
    x = jax.random.normal(k_a, (B * T, C, H, W), jnp.float32)
    params = make_params(kp_a, C)
    ref = jax.block_until_ready(conv3d_layer_reference(x, params, num_frames=T))

    # f32 MXU path: tight check; hw_tile=128 forces the multi-tile two-pass GN.
    out_f32 = jax.block_until_ready(
        conv3d_layer_pallas(x, params, num_frames=T, hw_tile=128,
                            compute_dtype=jnp.float32))
    assert out_f32.shape == x.shape and out_f32.dtype == x.dtype
    err_f32 = float(jnp.max(jnp.abs(out_f32 - ref)))
    assert err_f32 < 1e-3, f"f32 mismatch vs reference: {err_f32}"

    # bf16 MXU path (default): bf16 operands & bf16 h storage, f32 stats/affine.
    out_bfc = jax.block_until_ready(
        conv3d_layer_pallas(x, params, num_frames=T, hw_tile=128))
    assert out_bfc.dtype == x.dtype
    err_bfc = float(jnp.max(jnp.abs(out_bfc - ref)))
    assert err_bfc < 7e-2, f"bf16-compute mismatch vs reference: {err_bfc}"

    # --- Test B: bf16 input/output, T > 8 (fori frame loop), odd HW (padding)
    B, T, C, H, W = 1, 16, 32, 10, 10
    x32 = jax.random.normal(k_b, (B * T, C, H, W), jnp.float32)
    params_b = make_params(kp_b, C)
    x_bf16 = x32.astype(jnp.bfloat16)
    ref_b = jax.block_until_ready(
        conv3d_layer_reference(x_bf16.astype(jnp.float32), params_b, num_frames=T))
    out_b = jax.block_until_ready(
        conv3d_layer_pallas(x_bf16, params_b, num_frames=T))
    assert out_b.dtype == jnp.bfloat16 and out_b.shape == x_bf16.shape
    err_b = float(jnp.max(jnp.abs(out_b.astype(jnp.float32) - ref_b)))
    assert err_b < 1.5e-1, f"bf16 input/output mismatch vs reference: {err_b}"

    print("KERNEL_OK")
</pallas_src>

<mosaic_0001>
module attributes {stable_mosaic.version = 11 : i64} {
  func.func @_stats_kernel(%arg0: i32, %arg1: i32, %arg2: i32, %arg3: memref<1x4x32x128xf32, #tpu.memory_space<vmem>>, %arg4: memref<1x1x32x1xf32, #tpu.memory_space<vmem>>, %arg5: memref<1x1x32x1xf32, #tpu.memory_space<vmem>>) attributes {dimension_semantics = [#tpu.dimension_semantics<parallel>, #tpu.dimension_semantics<parallel>, #tpu.dimension_semantics<arbitrary>], iteration_bounds = array<i64: 2, 2, 1>, scalar_prefetch = 0 : i64, scratch_operands = 0 : i64, tpu.core_type = #tpu.core_type<tc>, window_params = [{transform_indices = @transform_0, window_bounds = array<i64: 1, 4, 32, 128>}, {transform_indices = @transform_1, window_bounds = array<i64: 1, 1, 32, 1>}, {transform_indices = @transform_2, window_bounds = array<i64: 1, 1, 32, 1>}]} {
    %c0_i32 = arith.constant 0 : i32
    %0 = arith.cmpi eq, %arg2, %c0_i32 : i32
    %1 = arith.extui %0 : i1 to i32
    %c0_i32_0 = arith.constant 0 : i32
    %2 = arith.cmpi ne, %1, %c0_i32_0 : i32
    scf.if %2 {
      %cst_38 = arith.constant 0.000000e+00 : f32
      %57 = vector.broadcast %cst_38 : f32 to vector<1x1x32x1xf32>
      %c0_39 = arith.constant 0 : index
      %c0_40 = arith.constant 0 : index
      %c0_41 = arith.constant 0 : index
      %c0_42 = arith.constant 0 : index
      %58 = vector.load %arg4[%c0_39, %c0_40, %c0_41, %c0_42] : memref<1x1x32x1xf32, #tpu.memory_space<vmem>>, vector<1x1x32x1xf32>
      tpu.vector_store %arg4[%c0_39, %c0_40, %c0_41, %c0_42], %57 {strides = array<i32>} : memref<1x1x32x1xf32, #tpu.memory_space<vmem>>, vector<1x1x32x1xf32>,
      %cst_43 = arith.constant 0.000000e+00 : f32
      %59 = vector.broadcast %cst_43 : f32 to vector<1x1x32x1xf32>
      %c0_44 = arith.constant 0 : index
      %c0_45 = arith.constant 0 : index
      %c0_46 = arith.constant 0 : index
      %c0_47 = arith.constant 0 : index
      %60 = vector.load %arg5[%c0_44, %c0_45, %c0_46, %c0_47] : memref<1x1x32x1xf32, #tpu.memory_space<vmem>>, vector<1x1x32x1xf32>
      tpu.vector_store %arg5[%c0_44, %c0_45, %c0_46, %c0_47], %59 {strides = array<i32>} : memref<1x1x32x1xf32, #tpu.memory_space<vmem>>, vector<1x1x32x1xf32>,
    } else {
    }
    %cst = arith.constant 0.000000e+00 : f32
    %3 = vector.broadcast %cst : f32 to vector<32x1xf32>
    %cst_1 = arith.constant 0.000000e+00 : f32
    %4 = vector.broadcast %cst_1 : f32 to vector<32x1xf32>
    %c0 = arith.constant 0 : index
    %c0_2 = arith.constant 0 : index
    %c0_3 = arith.constant 0 : index
    %c0_4 = arith.constant 0 : index
    %5 = vector.load %arg3[%c0, %c0_2, %c0_3, %c0_4] : memref<1x4x32x128xf32, #tpu.memory_space<vmem>>, vector<1x1x32x128xf32>
    %6 = vector.shape_cast %5 : vector<1x1x32x128xf32> to vector<1x32x128xf32>
    %7 = vector.shape_cast %6 : vector<1x32x128xf32> to vector<32x128xf32>
    %cst_5 = arith.constant dense<0.000000e+00> : vector<32xf32>
    %8 = vector.multi_reduction <add>, %7, %cst_5 [1] : vector<32x128xf32> to vector<32xf32>
    %9 = vector.shape_cast %8 : vector<32xf32> to vector<32x1xf32>
    %10 = arith.addf %3, %9 : vector<32x1xf32>
    %11 = arith.mulf %7, %7 : vector<32x128xf32>
    %cst_6 = arith.constant dense<0.000000e+00> : vector<32xf32>
    %12 = vector.multi_reduction <add>, %11, %cst_6 [1] : vector<32x128xf32> to vector<32xf32>
    %13 = vector.shape_cast %12 : vector<32xf32> to vector<32x1xf32>
    %14 = arith.addf %4, %13 : vector<32x1xf32>
    %c0_7 = arith.constant 0 : index
    %c1 = arith.constant 1 : index
    %c0_8 = arith.constant 0 : index
    %c0_9 = arith.constant 0 : index
    %15 = vector.load %arg3[%c0_7, %c1, %c0_8, %c0_9] : memref<1x4x32x128xf32, #tpu.memory_space<vmem>>, vector<1x1x32x128xf32>
    %16 = vector.shape_cast %15 : vector<1x1x32x128xf32> to vector<1x32x128xf32>
    %17 = vector.shape_cast %16 : vector<1x32x128xf32> to vector<32x128xf32>
    %cst_10 = arith.constant dense<0.000000e+00> : vector<32xf32>
    %18 = vector.multi_reduction <add>, %17, %cst_10 [1] : vector<32x128xf32> to vector<32xf32>
    %19 = vector.shape_cast %18 : vector<32xf32> to vector<32x1xf32>
    %20 = arith.addf %10, %19 : vector<32x1xf32>
    %21 = arith.mulf %17, %17 : vector<32x128xf32>
    %cst_11 = arith.constant dense<0.000000e+00> : vector<32xf32>
    %22 = vector.multi_reduction <add>, %21, %cst_11 [1] : vector<32x128xf32> to vector<32xf32>
    %23 = vector.shape_cast %22 : vector<32xf32> to vector<32x1xf32>
    %24 = arith.addf %14, %23 : vector<32x1xf32>
    %c0_12 = arith.constant 0 : index
    %c2 = arith.constant 2 : index
    %c0_13 = arith.constant 0 : index
    %c0_14 = arith.constant 0 : index
    %25 = vector.load %arg3[%c0_12, %c2, %c0_13, %c0_14] : memref<1x4x32x128xf32, #tpu.memory_space<vmem>>, vector<1x1x32x128xf32>
    %26 = vector.shape_cast %25 : vector<1x1x32x128xf32> to vector<1x32x128xf32>
    %27 = vector.shape_cast %26 : vector<1x32x128xf32> to vector<32x128xf32>
    %cst_15 = arith.constant dense<0.000000e+00> : vector<32xf32>
    %28 = vector.multi_reduction <add>, %27, %cst_15 [1] : vector<32x128xf32> to vector<32xf32>
    %29 = vector.shape_cast %28 : vector<32xf32> to vector<32x1xf32>
    %30 = arith.addf %20, %29 : vector<32x1xf32>
    %31 = arith.mulf %27, %27 : vector<32x128xf32>
    %cst_16 = arith.constant dense<0.000000e+00> : vector<32xf32>
    %32 = vector.multi_reduction <add>, %31, %cst_16 [1] : vector<32x128xf32> to vector<32xf32>
    %33 = vector.shape_cast %32 : vector<32xf32> to vector<32x1xf32>
    %34 = arith.addf %24, %33 : vector<32x1xf32>
    %c0_17 = arith.constant 0 : index
    %c3 = arith.constant 3 : index
    %c0_18 = arith.constant 0 : index
    %c0_19 = arith.constant 0 : index
    %35 = vector.load %arg3[%c0_17, %c3, %c0_18, %c0_19] : memref<1x4x32x128xf32, #tpu.memory_space<vmem>>, vector<1x1x32x128xf32>
    %36 = vector.shape_cast %35 : vector<1x1x32x128xf32> to vector<1x32x128xf32>
    %37 = vector.shape_cast %36 : vector<1x32x128xf32> to vector<32x128xf32>
    %cst_20 = arith.constant dense<0.000000e+00> : vector<32xf32>
    %38 = vector.multi_reduction <add>, %37, %cst_20 [1] : vector<32x128xf32> to vector<32xf32>
    %39 = vector.shape_cast %38 : vector<32xf32> to vector<32x1xf32>
    %40 = arith.addf %30, %39 : vector<32x1xf32>
    %41 = arith.mulf %37, %37 : vector<32x128xf32>
    %cst_21 = arith.constant dense<0.000000e+00> : vector<32xf32>
    %42 = vector.multi_reduction <add>, %41, %cst_21 [1] : vector<32x128xf32> to vector<32xf32>
    %43 = vector.shape_cast %42 : vector<32xf32> to vector<32x1xf32>
    %44 = arith.addf %34, %43 : vector<32x1xf32>
    %c0_22 = arith.constant 0 : index
    %c0_23 = arith.constant 0 : index
    %c0_24 = arith.constant 0 : index
    %c0_25 = arith.constant 0 : index
    %45 = vector.load %arg4[%c0_22, %c0_23, %c0_24, %c0_25] : memref<1x1x32x1xf32, #tpu.memory_space<vmem>>, vector<1x1x32x1xf32>
    %46 = vector.shape_cast %45 : vector<1x1x32x1xf32> to vector<32x1xf32>
    %47 = arith.addf %46, %40 : vector<32x1xf32>
    %c0_26 = arith.constant 0 : index
    %c0_27 = arith.constant 0 : index
    %c0_28 = arith.constant 0 : index
    %c0_29 = arith.constant 0 : index
    %48 = vector.load %arg4[%c0_26, %c0_27, %c0_28, %c0_29] : memref<1x1x32x1xf32, #tpu.memory_space<vmem>>, vector<1x1x32x1xf32>
    %49 = vector.shape_cast %48 : vector<1x1x32x1xf32> to vector<32x1xf32>
    %50 = vector.shape_cast %47 : vector<32x1xf32> to vector<1x1x32x1xf32>
    tpu.vector_store %arg4[%c0_26, %c0_27, %c0_28, %c0_29], %50 {strides = array<i32>} : memref<1x1x32x1xf32, #tpu.memory_space<vmem>>, vector<1x1x32x1xf32>,
    %c0_30 = arith.constant 0 : index
    %c0_31 = arith.constant 0 : index
    %c0_32 = arith.constant 0 : index
    %c0_33 = arith.constant 0 : index
    %51 = vector.load %arg5[%c0_30, %c0_31, %c0_32, %c0_33] : memref<1x1x32x1xf32, #tpu.memory_space<vmem>>, vector<1x1x32x1xf32>
    %52 = vector.shape_cast %51 : vector<1x1x32x1xf32> to vector<32x1xf32>
    %53 = arith.addf %52, %44 : vector<32x1xf32>
    %c0_34 = arith.constant 0 : index
    %c0_35 = arith.constant 0 : index
    %c0_36 = arith.constant 0 : index
    %c0_37 = arith.constant 0 : index
    %54 = vector.load %arg5[%c0_34, %c0_35, %c0_36, %c0_37] : memref<1x1x32x1xf32, #tpu.memory_space<vmem>>, vector<1x1x32x1xf32>
    %55 = vector.shape_cast %54 : vector<1x1x32x1xf32> to vector<32x1xf32>
    %56 = vector.shape_cast %53 : vector<32x1xf32> to vector<1x1x32x1xf32>
    tpu.vector_store %arg5[%c0_34, %c0_35, %c0_36, %c0_37], %56 {strides = array<i32>} : memref<1x1x32x1xf32, #tpu.memory_space<vmem>>, vector<1x1x32x1xf32>,
    return
  }
  func.func @transform_0(%arg0: i32, %arg1: i32, %arg2: i32) -> (i32, i32, i32, i32) {
    %c1_i32 = arith.constant 1 : i32
    %0 = arith.muli %arg1, %c1_i32 : i32
    %1 = arith.addi %0, %arg2 : i32
    %c0_i32 = arith.constant 0 : i32
    %c0_i32_0 = arith.constant 0 : i32
    %c0_i32_1 = arith.constant 0 : i32
    return %arg0, %c0_i32, %c0_i32_0, %1 : i32, i32, i32, i32
  }
  func.func @transform_1(%arg0: i32, %arg1: i32, %arg2: i32) -> (i32, i32, i32, i32) {
    %c0_i32 = arith.constant 0 : i32
    %c0_i32_0 = arith.constant 0 : i32
    %c0_i32_1 = arith.constant 0 : i32
    return %arg0, %arg1, %c0_i32, %c0_i32_0 : i32, i32, i32, i32
  }
  func.func @transform_2(%arg0: i32, %arg1: i32, %arg2: i32) -> (i32, i32, i32, i32) {
    %c0_i32 = arith.constant 0 : i32
    %c0_i32_0 = arith.constant 0 : i32
    %c0_i32_1 = arith.constant 0 : i32
    return %arg0, %arg1, %c0_i32, %c0_i32_0 : i32, i32, i32, i32
  }
}

module attributes {stable_mosaic.version = 11 : i64} {
  func.func @_block2_kernel(%arg0: i32, %arg1: i32, %arg2: i32, %arg3: memref<1xf32, #tpu.memory_space<smem>>, %arg4: memref<1x32x1xf32, #tpu.memory_space<vmem>>, %arg5: memref<1x32x1xf32, #tpu.memory_space<vmem>>, %arg6: memref<1x4x32x128xf32, #tpu.memory_space<vmem>>, %arg7: memref<1x4x32x128xf32, #tpu.memory_space<vmem>>, %arg8: memref<32x96xf32, #tpu.memory_space<vmem>>, %arg9: memref<32x1xf32, #tpu.memory_space<vmem>>, %arg10: memref<1x4x32x128xf32, #tpu.memory_space<vmem>>, %arg11: memref<192x128xf32, #tpu.memory_space<vmem>>) attributes {dimension_semantics = [#tpu.dimension_semantics<parallel>, #tpu.dimension_semantics<parallel>, #tpu.dimension_semantics<parallel>], iteration_bounds = array<i64: 2, 2, 1>, scalar_prefetch = 0 : i64, scratch_operands = 1 : i64, tpu.core_type = #tpu.core_type<tc>, window_params = [{transform_indices = @transform_0, window_bounds = array<i64: 1>}, {transform_indices = @transform_1, window_bounds = array<i64: 1, 32, 1>}, {transform_indices = @transform_2, window_bounds = array<i64: 1, 32, 1>}, {transform_indices = @transform_3, window_bounds = array<i64: 1, 4, 32, 128>}, {transform_indices = @transform_4, window_bounds = array<i64: 1, 4, 32, 128>}, {pipeline_mode = #tpu.pipeline_mode<synchronous>, transform_indices = @transform_5, window_bounds = array<i64: 32, 96>}, {pipeline_mode = #tpu.pipeline_mode<synchronous>, transform_indices = @transform_6, window_bounds = array<i64: 32, 1>}, {transform_indices = @transform_7, window_bounds = array<i64: 1, 4, 32, 128>}]} {
    %c0 = arith.constant 0 : index
    %c0_0 = arith.constant 0 : index
    %c0_1 = arith.constant 0 : index
    %0 = vector.load %arg4[%c0, %c0_0, %c0_1] : memref<1x32x1xf32, #tpu.memory_space<vmem>>, vector<1x32x1xf32>
    %1 = vector.shape_cast %0 : vector<1x32x1xf32> to vector<32x1xf32>
    %c0_2 = arith.constant 0 : index
    %c0_3 = arith.constant 0 : index
    %c0_4 = arith.constant 0 : index
    %2 = vector.load %arg5[%c0_2, %c0_3, %c0_4] : memref<1x32x1xf32, #tpu.memory_space<vmem>>, vector<1x32x1xf32>
    %3 = vector.shape_cast %2 : vector<1x32x1xf32> to vector<32x1xf32>
    %cst = arith.constant 0.000000e+00 : f32
    %4 = vector.broadcast %cst : f32 to vector<32x128xf32>
    %c0_5 = arith.constant 0 : index
    %c0_6 = arith.constant 0 : index
    %5 = vector.load %arg11[%c0_5, %c0_6] : memref<192x128xf32, #tpu.memory_space<vmem>>, vector<32x128xf32>
    tpu.vector_store %arg11[%c0_5, %c0_6], %4 {strides = array<i32>} : memref<192x128xf32, #tpu.memory_space<vmem>>, vector<32x128xf32>,
    %c160 = arith.constant 160 : index
    %c0_7 = arith.constant 0 : index
    %6 = vector.load %arg11[%c160, %c0_7] : memref<192x128xf32, #tpu.memory_space<vmem>>, vector<32x128xf32>
    tpu.vector_store %arg11[%c160, %c0_7], %4 {strides = array<i32>} : memref<192x128xf32, #tpu.memory_space<vmem>>, vector<32x128xf32>,
    %c0_8 = arith.constant 0 : index
    %c0_9 = arith.constant 0 : index
    %c0_10 = arith.constant 0 : index
    %c0_11 = arith.constant 0 : index
    %7 = vector.load %arg6[%c0_8, %c0_9, %c0_10, %c0_11] : memref<1x4x32x128xf32, #tpu.memory_space<vmem>>, vector<1x1x32x128xf32>
    %8 = vector.shape_cast %7 : vector<1x1x32x128xf32> to vector<1x32x128xf32>
    %9 = vector.shape_cast %8 : vector<1x32x128xf32> to vector<32x128xf32>
    %10 = vector.broadcast %1 : vector<32x1xf32> to vector<32x128xf32>
    %11 = arith.mulf %9, %10 : vector<32x128xf32>
    %12 = vector.broadcast %3 : vector<32x1xf32> to vector<32x128xf32>
    %13 = arith.addf %11, %12 : vector<32x128xf32>
    %14 = arith.negf %13 : vector<32x128xf32>
    %15 = math.exp %14 : vector<32x128xf32>
    %cst_12 = arith.constant 1.000000e+00 : f32
    %16 = vector.broadcast %cst_12 : f32 to vector<32x128xf32>
    %17 = arith.addf %16, %15 : vector<32x128xf32>
    %18 = arith.divf %16, %17 : vector<32x128xf32>
    %19 = arith.mulf %13, %18 : vector<32x128xf32>
    %c32 = arith.constant 32 : index
    %c0_13 = arith.constant 0 : index
    %20 = vector.load %arg11[%c32, %c0_13] : memref<192x128xf32, #tpu.memory_space<vmem>>, vector<32x128xf32>
    tpu.vector_store %arg11[%c32, %c0_13], %19 {strides = array<i32>} : memref<192x128xf32, #tpu.memory_space<vmem>>, vector<32x128xf32>,
    %c0_14 = arith.constant 0 : index
    %c1 = arith.constant 1 : index
    %c0_15 = arith.constant 0 : index
    %c0_16 = arith.constant 0 : index
    %21 = vector.load %arg6[%c0_14, %c1, %c0_15, %c0_16] : memref<1x4x32x128xf32, #tpu.memory_space<vmem>>, vector<1x1x32x128xf32>
    %22 = vector.shape_cast %21 : vector<1x1x32x128xf32> to vector<1x32x128xf32>
    %23 = vector.shape_cast %22 : vector<1x32x128xf32> to vector<32x128xf32>
    %24 = vector.broadcast %1 : vector<32x1xf32> to vector<32x128xf32>
    %25 = arith.mulf %23, %24 : vector<32x128xf32>
    %26 = vector.broadcast %3 : vector<32x1xf32> to vector<32x128xf32>
    %27 = arith.addf %25, %26 : vector<32x128xf32>
    %28 = arith.negf %27 : vector<32x128xf32>
    %29 = math.exp %28 : vector<32x128xf32>
    %cst_17 = arith.constant 1.000000e+00 : f32
    %30 = vector.broadcast %cst_17 : f32 to vector<32x128xf32>
    %31 = arith.addf %30, %29 : vector<32x128xf32>
    %32 = arith.divf %30, %31 : vector<32x128xf32>
    %33 = arith.mulf %27, %32 : vector<32x128xf32>
    %c64 = arith.constant 64 : index
    %c0_18 = arith.constant 0 : index
    %34 = vector.load %arg11[%c64, %c0_18] : memref<192x128xf32, #tpu.memory_space<vmem>>, vector<32x128xf32>
    tpu.vector_store %arg11[%c64, %c0_18], %33 {strides = array<i32>} : memref<192x128xf32, #tpu.memory_space<vmem>>, vector<32x128xf32>,
    %c0_19 = arith.constant 0 : index
    %c2 = arith.constant 2 : index
    %c0_20 = arith.constant 0 : index
    %c0_21 = arith.constant 0 : index
    %35 = vector.load %arg6[%c0_19, %c2, %c0_20, %c0_21] : memref<1x4x32x128xf32, #tpu.memory_space<vmem>>, vector<1x1x32x128xf32>
    %36 = vector.shape_cast %35 : vector<1x1x32x128xf32> to vector<1x32x128xf32>
    %37 = vector.shape_cast %36 : vector<1x32x128xf32> to vector<32x128xf32>
    %38 = vector.broadcast %1 : vector<32x1xf32> to vector<32x128xf32>
    %39 = arith.mulf %37, %38 : vector<32x128xf32>
    %40 = vector.broadcast %3 : vector<32x1xf32> to vector<32x128xf32>
    %41 = arith.addf %39, %40 : vector<32x128xf32>
    %42 = arith.negf %41 : vector<32x128xf32>
    %43 = math.exp %42 : vector<32x128xf32>
    %cst_22 = arith.constant 1.000000e+00 : f32
    %44 = vector.broadcast %cst_22 : f32 to vector<32x128xf32>
    %45 = arith.addf %44, %43 : vector<32x128xf32>
    %46 = arith.divf %44, %45 : vector<32x128xf32>
    %47 = arith.mulf %41, %46 : vector<32x128xf32>
    %c96 = arith.constant 96 : index
    %c0_23 = arith.constant 0 : index
    %48 = vector.load %arg11[%c96, %c0_23] : memref<192x128xf32, #tpu.memory_space<vmem>>, vector<32x128xf32>
    tpu.vector_store %arg11[%c96, %c0_23], %47 {strides = array<i32>} : memref<192x128xf32, #tpu.memory_space<vmem>>, vector<32x128xf32>,
    %c0_24 = arith.constant 0 : index
    %c3 = arith.constant 3 : index
    %c0_25 = arith.constant 0 : index
    %c0_26 = arith.constant 0 : index
    %49 = vector.load %arg6[%c0_24, %c3, %c0_25, %c0_26] : memref<1x4x32x128xf32, #tpu.memory_space<vmem>>, vector<1x1x32x128xf32>
    %50 = vector.shape_cast %49 : vector<1x1x32x128xf32> to vector<1x32x128xf32>
    %51 = vector.shape_cast %50 : vector<1x32x128xf32> to vector<32x128xf32>
    %52 = vector.broadcast %1 : vector<32x1xf32> to vector<32x128xf32>
    %53 = arith.mulf %51, %52 : vector<32x128xf32>
    %54 = vector.broadcast %3 : vector<32x1xf32> to vector<32x128xf32>
    %55 = arith.addf %53, %54 : vector<32x128xf32>
    %56 = arith.negf %55 : vector<32x128xf32>
    %57 = math.exp %56 : vector<32x128xf32>
    %cst_27 = arith.constant 1.000000e+00 : f32
    %58 = vector.broadcast %cst_27 : f32 to vector<32x128xf32>
    %59 = arith.addf %58, %57 : vector<32x128xf32>
    %60 = arith.divf %58, %59 : vector<32x128xf32>
    %61 = arith.mulf %55, %60 : vector<32x128xf32>
    %c128 = arith.constant 128 : index
    %c0_28 = arith.constant 0 : index
    %62 = vector.load %arg11[%c128, %c0_28] : memref<192x128xf32, #tpu.memory_space<vmem>>, vector<32x128xf32>
    tpu.vector_store %arg11[%c128, %c0_28], %61 {strides = array<i32>} : memref<192x128xf32, #tpu.memory_space<vmem>>, vector<32x128xf32>,
    %c0_29 = arith.constant 0 : index
    %c0_30 = arith.constant 0 : index
    %63 = vector.load %arg9[%c0_29, %c0_30] : memref<32x1xf32, #tpu.memory_space<vmem>>, vector<32x1xf32>
    %c0_31 = arith.constant 0 : index
    %64 = memref.load %arg3[%c0_31] : memref<1xf32, #tpu.memory_space<smem>>
    %cst_32 = arith.constant 0.000000e+00 : f32
    %cst_33 = arith.constant 1.000000e+00 : f32
    %65 = arith.maximumf %cst_32, %64 : f32
    %66 = arith.minimumf %cst_33, %65 : f32
    %c0_34 = arith.constant 0 : index
    %c0_35 = arith.constant 0 : index
    %67 = vector.load %arg11[%c0_34, %c0_35] : memref<192x128xf32, #tpu.memory_space<vmem>>, vector<96x128xf32>
    %c0_36 = arith.constant 0 : index
    %c0_37 = arith.constant 0 : index
    %68 = vector.load %arg8[%c0_36, %c0_37] : memref<32x96xf32, #tpu.memory_space<vmem>>, vector<32x96xf32>
    %cst_38 = arith.constant dense<0.000000e+00> : vector<32x128xf32>
    %69 = tpu.matmul %68, %67, %cst_38 {dimension_numbers = #tpu.dot_dimension_numbers<[1], [0], [0], [1], [0, 0, 1, 1], [], []>} : vector<32x96xf32>, vector<96x128xf32>, vector<32x128xf32> -> vector<32x128xf32>
    %70 = vector.broadcast %63 : vector<32x1xf32> to vector<32x128xf32>
    %71 = arith.addf %69, %70 : vector<32x128xf32>
    %c0_39 = arith.constant 0 : index
    %c0_40 = arith.constant 0 : index
    %c0_41 = arith.constant 0 : index
    %c0_42 = arith.constant 0 : index
    %72 = vector.load %arg7[%c0_39, %c0_40, %c0_41, %c0_42] : memref<1x4x32x128xf32, #tpu.memory_space<vmem>>, vector<1x1x32x128xf32>
    %73 = vector.shape_cast %72 : vector<1x1x32x128xf32> to vector<1x32x128xf32>
    %74 = vector.shape_cast %73 : vector<1x32x128xf32> to vector<32x128xf32>
    %75 = vector.broadcast %66 : f32 to vector<32x128xf32>
    %76 = arith.mulf %75, %74 : vector<32x128xf32>
    %cst_43 = arith.constant 1.000000e+00 : f32
    %77 = arith.subf %cst_43, %66 : f32
    %78 = vector.broadcast %77 : f32 to vector<32x128xf32>
    %79 = arith.mulf %78, %71 : vector<32x128xf32>
    %80 = arith.addf %76, %79 : vector<32x128xf32>
    %81 = vector.shape_cast %80 : vector<32x128xf32> to vector<1x32x128xf32>
    %c0_44 = arith.constant 0 : index
    %c0_45 = arith.constant 0 : index
    %c0_46 = arith.constant 0 : index
    %c0_47 = arith.constant 0 : index
    %82 = vector.load %arg10[%c0_44, %c0_45, %c0_46, %c0_47] : memref<1x4x32x128xf32, #tpu.memory_space<vmem>>, vector<1x1x32x128xf32>
    %83 = vector.shape_cast %82 : vector<1x1x32x128xf32> to vector<1x32x128xf32>
    %84 = vector.shape_cast %81 : vector<1x32x128xf32> to vector<1x1x32x128xf32>
    tpu.vector_store %arg10[%c0_44, %c0_45, %c0_46, %c0_47], %84 {strides = array<i32>} : memref<1x4x32x128xf32, #tpu.memory_space<vmem>>, vector<1x1x32x128xf32>,
    %c32_48 = arith.constant 32 : index
    %c0_49 = arith.constant 0 : index
    %85 = vector.load %arg11[%c32_48, %c0_49] : memref<192x128xf32, #tpu.memory_space<vmem>>, vector<96x128xf32>
    %c0_50 = arith.constant 0 : index
    %c0_51 = arith.constant 0 : index
    %86 = vector.load %arg8[%c0_50, %c0_51] : memref<32x96xf32, #tpu.memory_space<vmem>>, vector<32x96xf32>
    %cst_52 = arith.constant dense<0.000000e+00> : vector<32x128xf32>
    %87 = tpu.matmul %86, %85, %cst_52 {dimension_numbers = #tpu.dot_dimension_numbers<[1], [0], [0], [1], [0, 0, 1, 1], [], []>} : vector<32x96xf32>, vector<96x128xf32>, vector<32x128xf32> -> vector<32x128xf32>
    %88 = vector.broadcast %63 : vector<32x1xf32> to vector<32x128xf32>
    %89 = arith.addf %87, %88 : vector<32x128xf32>
    %c0_53 = arith.constant 0 : index
    %c1_54 = arith.constant 1 : index
    %c0_55 = arith.constant 0 : index
    %c0_56 = arith.constant 0 : index
    %90 = vector.load %arg7[%c0_53, %c1_54, %c0_55, %c0_56] : memref<1x4x32x128xf32, #tpu.memory_space<vmem>>, vector<1x1x32x128xf32>
    %91 = vector.shape_cast %90 : vector<1x1x32x128xf32> to vector<1x32x128xf32>
    %92 = vector.shape_cast %91 : vector<1x32x128xf32> to vector<32x128xf32>
    %93 = vector.broadcast %66 : f32 to vector<32x128xf32>
    %94 = arith.mulf %93, %92 : vector<32x128xf32>
    %cst_57 = arith.constant 1.000000e+00 : f32
    %95 = arith.subf %cst_57, %66 : f32
    %96 = vector.broadcast %95 : f32 to vector<32x128xf32>
    %97 = arith.mulf %96, %89 : vector<32x128xf32>
    %98 = arith.addf %94, %97 : vector<32x128xf32>
    %99 = vector.shape_cast %98 : vector<32x128xf32> to vector<1x32x128xf32>
    %c0_58 = arith.constant 0 : index
    %c1_59 = arith.constant 1 : index
    %c0_60 = arith.constant 0 : index
    %c0_61 = arith.constant 0 : index
    %100 = vector.load %arg10[%c0_58, %c1_59, %c0_60, %c0_61] : memref<1x4x32x128xf32, #tpu.memory_space<vmem>>, vector<1x1x32x128xf32>
    %101 = vector.shape_cast %100 : vector<1x1x32x128xf32> to vector<1x32x128xf32>
    %102 = vector.shape_cast %99 : vector<1x32x128xf32> to vector<1x1x32x128xf32>
    tpu.vector_store %arg10[%c0_58, %c1_59, %c0_60, %c0_61], %102 {strides = array<i32>} : memref<1x4x32x128xf32, #tpu.memory_space<vmem>>, vector<1x1x32x128xf32>,
    %c64_62 = arith.constant 64 : index
    %c0_63 = arith.constant 0 : index
    %103 = vector.load %arg11[%c64_62, %c0_63] : memref<192x128xf32, #tpu.memory_space<vmem>>, vector<96x128xf32>
    %c0_64 = arith.constant 0 : index
    %c0_65 = arith.constant 0 : index
    %104 = vector.load %arg8[%c0_64, %c0_65] : memref<32x96xf32, #tpu.memory_space<vmem>>, vector<32x96xf32>
    %cst_66 = arith.constant dense<0.000000e+00> : vector<32x128xf32>
    %105 = tpu.matmul %104, %103, %cst_66 {dimension_numbers = #tpu.dot_dimension_numbers<[1], [0], [0], [1], [0, 0, 1, 1], [], []>} : vector<32x96xf32>, vector<96x128xf32>, vector<32x128xf32> -> vector<32x128xf32>
    %106 = vector.broadcast %63 : vector<32x1xf32> to vector<32x128xf32>
    %107 = arith.addf %105, %106 : vector<32x128xf32>
    %c0_67 = arith.constant 0 : index
    %c2_68 = arith.constant 2 : index
    %c0_69 = arith.constant 0 : index
    %c0_70 = arith.constant 0 : index
    %108 = vector.load %arg7[%c0_67, %c2_68, %c0_69, %c0_70] : memref<1x4x32x128xf32, #tpu.memory_space<vmem>>, vector<1x1x32x128xf32>
    %109 = vector.shape_cast %108 : vector<1x1x32x128xf32> to vector<1x32x128xf32>
    %110 = vector.shape_cast %109 : vector<1x32x128xf32> to vector<32x128xf32>
    %111 = vector.broadcast %66 : f32 to vector<32x128xf32>
    %112 = arith.mulf %111, %110 : vector<32x128xf32>
    %cst_71 = arith.constant 1.000000e+00 : f32
    %113 = arith.subf %cst_71, %66 : f32
    %114 = vector.broadcast %113 : f32 to vector<32x128xf32>
    %115 = arith.mulf %114, %107 : vector<32x128xf32>
    %116 = arith.addf %112, %115 : vector<32x128xf32>
    %117 = vector.shape_cast %116 : vector<32x128xf32> to vector<1x32x128xf32>
    %c0_72 = arith.constant 0 : index
    %c2_73 = arith.constant 2 : index
    %c0_74 = arith.constant 0 : index
    %c0_75 = arith.constant 0 : index
    %118 = vector.load %arg10[%c0_72, %c2_73, %c0_74, %c0_75] : memref<1x4x32x128xf32, #tpu.memory_space<vmem>>, vector<1x1x32x128xf32>
    %119 = vector.shape_cast %118 : vector<1x1x32x128xf32> to vector<1x32x128xf32>
    %120 = vector.shape_cast %117 : vector<1x32x128xf32> to vector<1x1x32x128xf32>
    tpu.vector_store %arg10[%c0_72, %c2_73, %c0_74, %c0_75], %120 {strides = array<i32>} : memref<1x4x32x128xf32, #tpu.memory_space<vmem>>, vector<1x1x32x128xf32>,
    %c96_76 = arith.constant 96 : index
    %c0_77 = arith.constant 0 : index
    %121 = vector.load %arg11[%c96_76, %c0_77] : memref<192x128xf32, #tpu.memory_space<vmem>>, vector<96x128xf32>
    %c0_78 = arith.constant 0 : index
    %c0_79 = arith.constant 0 : index
    %122 = vector.load %arg8[%c0_78, %c0_79] : memref<32x96xf32, #tpu.memory_space<vmem>>, vector<32x96xf32>
    %cst_80 = arith.constant dense<0.000000e+00> : vector<32x128xf32>
    %123 = tpu.matmul %122, %121, %cst_80 {dimension_numbers = #tpu.dot_dimension_numbers<[1], [0], [0], [1], [0, 0, 1, 1], [], []>} : vector<32x96xf32>, vector<96x128xf32>, vector<32x128xf32> -> vector<32x128xf32>
    %124 = vector.broadcast %63 : vector<32x1xf32> to vector<32x128xf32>
    %125 = arith.addf %123, %124 : vector<32x128xf32>
    %c0_81 = arith.constant 0 : index
    %c3_82 = arith.constant 3 : index
    %c0_83 = arith.constant 0 : index
    %c0_84 = arith.constant 0 : index
    %126 = vector.load %arg7[%c0_81, %c3_82, %c0_83, %c0_84] : memref<1x4x32x128xf32, #tpu.memory_space<vmem>>, vector<1x1x32x128xf32>
    %127 = vector.shape_cast %126 : vector<1x1x32x128xf32> to vector<1x32x128xf32>
    %128 = vector.shape_cast %127 : vector<1x32x128xf32> to vector<32x128xf32>
    %129 = vector.broadcast %66 : f32 to vector<32x128xf32>
    %130 = arith.mulf %129, %128 : vector<32x128xf32>
    %cst_85 = arith.constant 1.000000e+00 : f32
    %131 = arith.subf %cst_85, %66 : f32
    %132 = vector.broadcast %131 : f32 to vector<32x128xf32>
    %133 = arith.mulf %132, %125 : vector<32x128xf32>
    %134 = arith.addf %130, %133 : vector<32x128xf32>
    %135 = vector.shape_cast %134 : vector<32x128xf32> to vector<1x32x128xf32>
    %c0_86 = arith.constant 0 : index
    %c3_87 = arith.constant 3 : index
    %c0_88 = arith.constant 0 : index
    %c0_89 = arith.constant 0 : index
    %136 = vector.load %arg10[%c0_86, %c3_87, %c0_88, %c0_89] : memref<1x4x32x128xf32, #tpu.memory_space<vmem>>, vector<1x1x32x128xf32>
    %137 = vector.shape_cast %136 : vector<1x1x32x128xf32> to vector<1x32x128xf32>
    %138 = vector.shape_cast %135 : vector<1x32x128xf32> to vector<1x1x32x128xf32>
    tpu.vector_store %arg10[%c0_86, %c3_87, %c0_88, %c0_89], %138 {strides = array<i32>} : memref<1x4x32x128xf32, #tpu.memory_space<vmem>>, vector<1x1x32x128xf32>,
    return
  }
  func.func @transform_0(%arg0: i32, %arg1: i32, %arg2: i32) -> i32 {
    %c0_i32 = arith.constant 0 : i32
    %c0_i32_0 = arith.constant 0 : i32
    return %c0_i32 : i32
  }
  func.func @transform_1(%arg0: i32, %arg1: i32, %arg2: i32) -> (i32, i32, i32) {
    %c0_i32 = arith.constant 0 : i32
    %c0_i32_0 = arith.constant 0 : i32
    %c0_i32_1 = arith.constant 0 : i32
    return %arg0, %c0_i32, %c0_i32_0 : i32, i32, i32
  }
  func.func @transform_2(%arg0: i32, %arg1: i32, %arg2: i32) -> (i32, i32, i32) {
    %c0_i32 = arith.constant 0 : i32
    %c0_i32_0 = arith.constant 0 : i32
    %c0_i32_1 = arith.constant 0 : i32
    return %arg0, %c0_i32, %c0_i32_0 : i32, i32, i32
  }
  func.func @transform_3(%arg0: i32, %arg1: i32, %arg2: i32) -> (i32, i32, i32, i32) {
    %c1_i32 = arith.constant 1 : i32
    %0 = arith.muli %arg1, %c1_i32 : i32
    %1 = arith.addi %0, %arg2 : i32
    %c0_i32 = arith.constant 0 : i32
    %c0_i32_0 = arith.constant 0 : i32
    %c0_i32_1 = arith.constant 0 : i32
    return %arg0, %c0_i32, %c0_i32_0, %1 : i32, i32, i32, i32
  }
  func.func @transform_4(%arg0: i32, %arg1: i32, %arg2: i32) -> (i32, i32, i32, i32) {
    %c1_i32 = arith.constant 1 : i32
    %0 = arith.muli %arg1, %c1_i32 : i32
    %1 = arith.addi %0, %arg2 : i32
    %c0_i32 = arith.constant 0 : i32
    %c0_i32_0 = arith.constant 0 : i32
    %c0_i32_1 = arith.constant 0 : i32
    return %arg0, %c0_i32, %c0_i32_0, %1 : i32, i32, i32, i32
  }
  func.func @transform_5(%arg0: i32, %arg1: i32, %arg2: i32) -> (i32, i32) {
    %c0_i32 = arith.constant 0 : i32
    %c0_i32_0 = arith.constant 0 : i32
    %c0_i32_1 = arith.constant 0 : i32
    return %c0_i32, %c0_i32_0 : i32, i32
  }
  func.func @transform_6(%arg0: i32, %arg1: i32, %arg2: i32) -> (i32, i32) {
    %c0_i32 = arith.constant 0 : i32
    %c0_i32_0 = arith.constant 0 : i32
    %c0_i32_1 = arith.constant 0 : i32
    return %c0_i32, %c0_i32_0 : i32, i32
  }
  func.func @transform_7(%arg0: i32, %arg1: i32, %arg2: i32) -> (i32, i32, i32, i32) {
    %c1_i32 = arith.constant 1 : i32
    %0 = arith.muli %arg1, %c1_i32 : i32
    %1 = arith.addi %0, %arg2 : i32
    %c0_i32 = arith.constant 0 : i32
    %c0_i32_0 = arith.constant 0 : i32
    %c0_i32_1 = arith.constant 0 : i32
    return %arg0, %c0_i32, %c0_i32_0, %1 : i32, i32, i32, i32
  }
}

module attributes {stable_mosaic.version = 11 : i64} {
  func.func @_block1_kernel(%arg0: i32, %arg1: i32, %arg2: i32, %arg3: memref<1x32x1xf32, #tpu.memory_space<vmem>>, %arg4: memref<1x32x1xf32, #tpu.memory_space<vmem>>, %arg5: memref<1x4x32x128xf32, #tpu.memory_space<vmem>>, %arg6: memref<32x96xf32, #tpu.memory_space<vmem>>, %arg7: memref<32x1xf32, #tpu.memory_space<vmem>>, %arg8: memref<1x4x32x128xf32, #tpu.memory_space<vmem>>, %arg9: memref<1x1x32x1xf32, #tpu.memory_space<vmem>>, %arg10: memref<1x1x32x1xf32, #tpu.memory_space<vmem>>, %arg11: memref<192x128xf32, #tpu.memory_space<vmem>>) attributes {dimension_semantics = [#tpu.dimension_semantics<parallel>, #tpu.dimension_semantics<parallel>, #tpu.dimension_semantics<arbitrary>], iteration_bounds = array<i64: 2, 2, 1>, scalar_prefetch = 0 : i64, scratch_operands = 1 : i64, tpu.core_type = #tpu.core_type<tc>, window_params = [{transform_indices = @transform_0, window_bounds = array<i64: 1, 32, 1>}, {transform_indices = @transform_1, window_bounds = array<i64: 1, 32, 1>}, {transform_indices = @transform_2, window_bounds = array<i64: 1, 4, 32, 128>}, {pipeline_mode = #tpu.pipeline_mode<synchronous>, transform_indices = @transform_3, window_bounds = array<i64: 32, 96>}, {pipeline_mode = #tpu.pipeline_mode<synchronous>, transform_indices = @transform_4, window_bounds = array<i64: 32, 1>}, {transform_indices = @transform_5, window_bounds = array<i64: 1, 4, 32, 128>}, {transform_indices = @transform_6, window_bounds = array<i64: 1, 1, 32, 1>}, {transform_indices = @transform_7, window_bounds = array<i64: 1, 1, 32, 1>}]} {
    %c0_i32 = arith.constant 0 : i32
    %0 = arith.cmpi eq, %arg2, %c0_i32 : i32
    %1 = arith.extui %0 : i1 to i32
    %c0_i32_0 = arith.constant 0 : i32
    %2 = arith.cmpi ne, %1, %c0_i32_0 : i32
    scf.if %2 {
      %cst_94 = arith.constant 0.000000e+00 : f32
      %145 = vector.broadcast %cst_94 : f32 to vector<1x1x32x1xf32>
      %c0_95 = arith.constant 0 : index
      %c0_96 = arith.constant 0 : index
      %c0_97 = arith.constant 0 : index
      %c0_98 = arith.constant 0 : index
      %146 = vector.load %arg9[%c0_95, %c0_96, %c0_97, %c0_98] : memref<1x1x32x1xf32, #tpu.memory_space<vmem>>, vector<1x1x32x1xf32>
      tpu.vector_store %arg9[%c0_95, %c0_96, %c0_97, %c0_98], %145 {strides = array<i32>} : memref<1x1x32x1xf32, #tpu.memory_space<vmem>>, vector<1x1x32x1xf32>,
      %cst_99 = arith.constant 0.000000e+00 : f32
      %147 = vector.broadcast %cst_99 : f32 to vector<1x1x32x1xf32>
      %c0_100 = arith.constant 0 : index
      %c0_101 = arith.constant 0 : index
      %c0_102 = arith.constant 0 : index
      %c0_103 = arith.constant 0 : index
      %148 = vector.load %arg10[%c0_100, %c0_101, %c0_102, %c0_103] : memref<1x1x32x1xf32, #tpu.memory_space<vmem>>, vector<1x1x32x1xf32>
      tpu.vector_store %arg10[%c0_100, %c0_101, %c0_102, %c0_103], %147 {strides = array<i32>} : memref<1x1x32x1xf32, #tpu.memory_space<vmem>>, vector<1x1x32x1xf32>,
    } else {
    }
    %c0 = arith.constant 0 : index
    %c0_1 = arith.constant 0 : index
    %c0_2 = arith.constant 0 : index
    %3 = vector.load %arg3[%c0, %c0_1, %c0_2] : memref<1x32x1xf32, #tpu.memory_space<vmem>>, vector<1x32x1xf32>
    %4 = vector.shape_cast %3 : vector<1x32x1xf32> to vector<32x1xf32>
    %c0_3 = arith.constant 0 : index
    %c0_4 = arith.constant 0 : index
    %c0_5 = arith.constant 0 : index
    %5 = vector.load %arg4[%c0_3, %c0_4, %c0_5] : memref<1x32x1xf32, #tpu.memory_space<vmem>>, vector<1x32x1xf32>
    %6 = vector.shape_cast %5 : vector<1x32x1xf32> to vector<32x1xf32>
    %cst = arith.constant 0.000000e+00 : f32
    %7 = vector.broadcast %cst : f32 to vector<32x128xf32>
    %c0_6 = arith.constant 0 : index
    %c0_7 = arith.constant 0 : index
    %8 = vector.load %arg11[%c0_6, %c0_7] : memref<192x128xf32, #tpu.memory_space<vmem>>, vector<32x128xf32>
    tpu.vector_store %arg11[%c0_6, %c0_7], %7 {strides = array<i32>} : memref<192x128xf32, #tpu.memory_space<vmem>>, vector<32x128xf32>,
    %c160 = arith.constant 160 : index
    %c0_8 = arith.constant 0 : index
    %9 = vector.load %arg11[%c160, %c0_8] : memref<192x128xf32, #tpu.memory_space<vmem>>, vector<32x128xf32>
    tpu.vector_store %arg11[%c160, %c0_8], %7 {strides = array<i32>} : memref<192x128xf32, #tpu.memory_space<vmem>>, vector<32x128xf32>,
    %c0_9 = arith.constant 0 : index
    %c0_10 = arith.constant 0 : index
    %c0_11 = arith.constant 0 : index
    %c0_12 = arith.constant 0 : index
    %10 = vector.load %arg5[%c0_9, %c0_10, %c0_11, %c0_12] : memref<1x4x32x128xf32, #tpu.memory_space<vmem>>, vector<1x1x32x128xf32>
    %11 = vector.shape_cast %10 : vector<1x1x32x128xf32> to vector<1x32x128xf32>
    %12 = vector.shape_cast %11 : vector<1x32x128xf32> to vector<32x128xf32>
    %13 = vector.broadcast %4 : vector<32x1xf32> to vector<32x128xf32>
    %14 = arith.mulf %12, %13 : vector<32x128xf32>
    %15 = vector.broadcast %6 : vector<32x1xf32> to vector<32x128xf32>
    %16 = arith.addf %14, %15 : vector<32x128xf32>
    %17 = arith.negf %16 : vector<32x128xf32>
    %18 = math.exp %17 : vector<32x128xf32>
    %cst_13 = arith.constant 1.000000e+00 : f32
    %19 = vector.broadcast %cst_13 : f32 to vector<32x128xf32>
    %20 = arith.addf %19, %18 : vector<32x128xf32>
    %21 = arith.divf %19, %20 : vector<32x128xf32>
    %22 = arith.mulf %16, %21 : vector<32x128xf32>
    %c32 = arith.constant 32 : index
    %c0_14 = arith.constant 0 : index
    %23 = vector.load %arg11[%c32, %c0_14] : memref<192x128xf32, #tpu.memory_space<vmem>>, vector<32x128xf32>
    tpu.vector_store %arg11[%c32, %c0_14], %22 {strides = array<i32>} : memref<192x128xf32, #tpu.memory_space<vmem>>, vector<32x128xf32>,
    %c0_15 = arith.constant 0 : index
    %c1 = arith.constant 1 : index
    %c0_16 = arith.constant 0 : index
    %c0_17 = arith.constant 0 : index
    %24 = vector.load %arg5[%c0_15, %c1, %c0_16, %c0_17] : memref<1x4x32x128xf32, #tpu.memory_space<vmem>>, vector<1x1x32x128xf32>
    %25 = vector.shape_cast %24 : vector<1x1x32x128xf32> to vector<1x32x128xf32>
    %26 = vector.shape_cast %25 : vector<1x32x128xf32> to vector<32x128xf32>
    %27 = vector.broadcast %4 : vector<32x1xf32> to vector<32x128xf32>
    %28 = arith.mulf %26, %27 : vector<32x128xf32>
    %29 = vector.broadcast %6 : vector<32x1xf32> to vector<32x128xf32>
    %30 = arith.addf %28, %29 : vector<32x128xf32>
    %31 = arith.negf %30 : vector<32x128xf32>
    %32 = math.exp %31 : vector<32x128xf32>
    %cst_18 = arith.constant 1.000000e+00 : f32
    %33 = vector.broadcast %cst_18 : f32 to vector<32x128xf32>
    %34 = arith.addf %33, %32 : vector<32x128xf32>
    %35 = arith.divf %33, %34 : vector<32x128xf32>
    %36 = arith.mulf %30, %35 : vector<32x128xf32>
    %c64 = arith.constant 64 : index
    %c0_19 = arith.constant 0 : index
    %37 = vector.load %arg11[%c64, %c0_19] : memref<192x128xf32, #tpu.memory_space<vmem>>, vector<32x128xf32>
    tpu.vector_store %arg11[%c64, %c0_19], %36 {strides = array<i32>} : memref<192x128xf32, #tpu.memory_space<vmem>>, vector<32x128xf32>,
    %c0_20 = arith.constant 0 : index
    %c2 = arith.constant 2 : index
    %c0_21 = arith.constant 0 : index
    %c0_22 = arith.constant 0 : index
    %38 = vector.load %arg5[%c0_20, %c2, %c0_21, %c0_22] : memref<1x4x32x128xf32, #tpu.memory_space<vmem>>, vector<1x1x32x128xf32>
    %39 = vector.shape_cast %38 : vector<1x1x32x128xf32> to vector<1x32x128xf32>
    %40 = vector.shape_cast %39 : vector<1x32x128xf32> to vector<32x128xf32>
    %41 = vector.broadcast %4 : vector<32x1xf32> to vector<32x128xf32>
    %42 = arith.mulf %40, %41 : vector<32x128xf32>
    %43 = vector.broadcast %6 : vector<32x1xf32> to vector<32x128xf32>
    %44 = arith.addf %42, %43 : vector<32x128xf32>
    %45 = arith.negf %44 : vector<32x128xf32>
    %46 = math.exp %45 : vector<32x128xf32>
    %cst_23 = arith.constant 1.000000e+00 : f32
    %47 = vector.broadcast %cst_23 : f32 to vector<32x128xf32>
    %48 = arith.addf %47, %46 : vector<32x128xf32>
    %49 = arith.divf %47, %48 : vector<32x128xf32>
    %50 = arith.mulf %44, %49 : vector<32x128xf32>
    %c96 = arith.constant 96 : index
    %c0_24 = arith.constant 0 : index
    %51 = vector.load %arg11[%c96, %c0_24] : memref<192x128xf32, #tpu.memory_space<vmem>>, vector<32x128xf32>
    tpu.vector_store %arg11[%c96, %c0_24], %50 {strides = array<i32>} : memref<192x128xf32, #tpu.memory_space<vmem>>, vector<32x128xf32>,
    %c0_25 = arith.constant 0 : index
    %c3 = arith.constant 3 : index
    %c0_26 = arith.constant 0 : index
    %c0_27 = arith.constant 0 : index
    %52 = vector.load %arg5[%c0_25, %c3, %c0_26, %c0_27] : memref<1x4x32x128xf32, #tpu.memory_space<vmem>>, vector<1x1x32x128xf32>
    %53 = vector.shape_cast %52 : vector<1x1x32x128xf32> to vector<1x32x128xf32>
    %54 = vector.shape_cast %53 : vector<1x32x128xf32> to vector<32x128xf32>
    %55 = vector.broadcast %4 : vector<32x1xf32> to vector<32x128xf32>
    %56 = arith.mulf %54, %55 : vector<32x128xf32>
    %57 = vector.broadcast %6 : vector<32x1xf32> to vector<32x128xf32>
    %58 = arith.addf %56, %57 : vector<32x128xf32>
    %59 = arith.negf %58 : vector<32x128xf32>
    %60 = math.exp %59 : vector<32x128xf32>
    %cst_28 = arith.constant 1.000000e+00 : f32
    %61 = vector.broadcast %cst_28 : f32 to vector<32x128xf32>
    %62 = arith.addf %61, %60 : vector<32x128xf32>
    %63 = arith.divf %61, %62 : vector<32x128xf32>
    %64 = arith.mulf %58, %63 : vector<32x128xf32>
    %c128 = arith.constant 128 : index
    %c0_29 = arith.constant 0 : index
    %65 = vector.load %arg11[%c128, %c0_29] : memref<192x128xf32, #tpu.memory_space<vmem>>, vector<32x128xf32>
    tpu.vector_store %arg11[%c128, %c0_29], %64 {strides = array<i32>} : memref<192x128xf32, #tpu.memory_space<vmem>>, vector<32x128xf32>,
    %c0_30 = arith.constant 0 : index
    %c0_31 = arith.constant 0 : index
    %66 = vector.load %arg7[%c0_30, %c0_31] : memref<32x1xf32, #tpu.memory_space<vmem>>, vector<32x1xf32>
    %cst_32 = arith.constant 0.000000e+00 : f32
    %67 = vector.broadcast %cst_32 : f32 to vector<32x1xf32>
    %cst_33 = arith.constant 0.000000e+00 : f32
    %68 = vector.broadcast %cst_33 : f32 to vector<32x1xf32>
    %c0_34 = arith.constant 0 : index
    %c0_35 = arith.constant 0 : index
    %69 = vector.load %arg11[%c0_34, %c0_35] : memref<192x128xf32, #tpu.memory_space<vmem>>, vector<96x128xf32>
    %c0_36 = arith.constant 0 : index
    %c0_37 = arith.constant 0 : index
    %70 = vector.load %arg6[%c0_36, %c0_37] : memref<32x96xf32, #tpu.memory_space<vmem>>, vector<32x96xf32>
    %cst_38 = arith.constant dense<0.000000e+00> : vector<32x128xf32>
    %71 = tpu.matmul %70, %69, %cst_38 {dimension_numbers = #tpu.dot_dimension_numbers<[1], [0], [0], [1], [0, 0, 1, 1], [], []>} : vector<32x96xf32>, vector<96x128xf32>, vector<32x128xf32> -> vector<32x128xf32>
    %72 = vector.broadcast %66 : vector<32x1xf32> to vector<32x128xf32>
    %73 = arith.addf %71, %72 : vector<32x128xf32>
    %74 = vector.shape_cast %73 : vector<32x128xf32> to vector<1x32x128xf32>
    %c0_39 = arith.constant 0 : index
    %c0_40 = arith.constant 0 : index
    %c0_41 = arith.constant 0 : index
    %c0_42 = arith.constant 0 : index
    %75 = vector.load %arg8[%c0_39, %c0_40, %c0_41, %c0_42] : memref<1x4x32x128xf32, #tpu.memory_space<vmem>>, vector<1x1x32x128xf32>
    %76 = vector.shape_cast %75 : vector<1x1x32x128xf32> to vector<1x32x128xf32>
    %77 = vector.shape_cast %74 : vector<1x32x128xf32> to vector<1x1x32x128xf32>
    tpu.vector_store %arg8[%c0_39, %c0_40, %c0_41, %c0_42], %77 {strides = array<i32>} : memref<1x4x32x128xf32, #tpu.memory_space<vmem>>, vector<1x1x32x128xf32>,
    %cst_43 = arith.constant dense<0.000000e+00> : vector<32xf32>
    %78 = vector.multi_reduction <add>, %73, %cst_43 [1] : vector<32x128xf32> to vector<32xf32>
    %79 = vector.shape_cast %78 : vector<32xf32> to vector<32x1xf32>
    %80 = arith.addf %67, %79 : vector<32x1xf32>
    %81 = arith.mulf %73, %73 : vector<32x128xf32>
    %cst_44 = arith.constant dense<0.000000e+00> : vector<32xf32>
    %82 = vector.multi_reduction <add>, %81, %cst_44 [1] : vector<32x128xf32> to vector<32xf32>
    %83 = vector.shape_cast %82 : vector<32xf32> to vector<32x1xf32>
    %84 = arith.addf %68, %83 : vector<32x1xf32>
    %c32_45 = arith.constant 32 : index
    %c0_46 = arith.constant 0 : index
    %85 = vector.load %arg11[%c32_45, %c0_46] : memref<192x128xf32, #tpu.memory_space<vmem>>, vector<96x128xf32>
    %c0_47 = arith.constant 0 : index
    %c0_48 = arith.constant 0 : index
    %86 = vector.load %arg6[%c0_47, %c0_48] : memref<32x96xf32, #tpu.memory_space<vmem>>, vector<32x96xf32>
    %cst_49 = arith.constant dense<0.000000e+00> : vector<32x128xf32>
    %87 = tpu.matmul %86, %85, %cst_49 {dimension_numbers = #tpu.dot_dimension_numbers<[1], [0], [0], [1], [0, 0, 1, 1], [], []>} : vector<32x96xf32>, vector<96x128xf32>, vector<32x128xf32> -> vector<32x128xf32>
    %88 = vector.broadcast %66 : vector<32x1xf32> to vector<32x128xf32>
    %89 = arith.addf %87, %88 : vector<32x128xf32>
    %90 = vector.shape_cast %89 : vector<32x128xf32> to vector<1x32x128xf32>
    %c0_50 = arith.constant 0 : index
    %c1_51 = arith.constant 1 : index
    %c0_52 = arith.constant 0 : index
    %c0_53 = arith.constant 0 : index
    %91 = vector.load %arg8[%c0_50, %c1_51, %c0_52, %c0_53] : memref<1x4x32x128xf32, #tpu.memory_space<vmem>>, vector<1x1x32x128xf32>
    %92 = vector.shape_cast %91 : vector<1x1x32x128xf32> to vector<1x32x128xf32>
    %93 = vector.shape_cast %90 : vector<1x32x128xf32> to vector<1x1x32x128xf32>
    tpu.vector_store %arg8[%c0_50, %c1_51, %c0_52, %c0_53], %93 {strides = array<i32>} : memref<1x4x32x128xf32, #tpu.memory_space<vmem>>, vector<1x1x32x128xf32>,
    %cst_54 = arith.constant dense<0.000000e+00> : vector<32xf32>
    %94 = vector.multi_reduction <add>, %89, %cst_54 [1] : vector<32x128xf32> to vector<32xf32>
    %95 = vector.shape_cast %94 : vector<32xf32> to vector<32x1xf32>
    %96 = arith.addf %80, %95 : vector<32x1xf32>
    %97 = arith.mulf %89, %89 : vector<32x128xf32>
    %cst_55 = arith.constant dense<0.000000e+00> : vector<32xf32>
    %98 = vector.multi_reduction <add>, %97, %cst_55 [1] : vector<32x128xf32> to vector<32xf32>
    %99 = vector.shape_cast %98 : vector<32xf32> to vector<32x1xf32>
    %100 = arith.addf %84, %99 : vector<32x1xf32>
    %c64_56 = arith.constant 64 : index
    %c0_57 = arith.constant 0 : index
    %101 = vector.load %arg11[%c64_56, %c0_57] : memref<192x128xf32, #tpu.memory_space<vmem>>, vector<96x128xf32>
    %c0_58 = arith.constant 0 : index
    %c0_59 = arith.constant 0 : index
    %102 = vector.load %arg6[%c0_58, %c0_59] : memref<32x96xf32, #tpu.memory_space<vmem>>, vector<32x96xf32>
    %cst_60 = arith.constant dense<0.000000e+00> : vector<32x128xf32>
    %103 = tpu.matmul %102, %101, %cst_60 {dimension_numbers = #tpu.dot_dimension_numbers<[1], [0], [0], [1], [0, 0, 1, 1], [], []>} : vector<32x96xf32>, vector<96x128xf32>, vector<32x128xf32> -> vector<32x128xf32>
    %104 = vector.broadcast %66 : vector<32x1xf32> to vector<32x128xf32>
    %105 = arith.addf %103, %104 : vector<32x128xf32>
    %106 = vector.shape_cast %105 : vector<32x128xf32> to vector<1x32x128xf32>
    %c0_61 = arith.constant 0 : index
    %c2_62 = arith.constant 2 : index
    %c0_63 = arith.constant 0 : index
    %c0_64 = arith.constant 0 : index
    %107 = vector.load %arg8[%c0_61, %c2_62, %c0_63, %c0_64] : memref<1x4x32x128xf32, #tpu.memory_space<vmem>>, vector<1x1x32x128xf32>
    %108 = vector.shape_cast %107 : vector<1x1x32x128xf32> to vector<1x32x128xf32>
    %109 = vector.shape_cast %106 : vector<1x32x128xf32> to vector<1x1x32x128xf32>
    tpu.vector_store %arg8[%c0_61, %c2_62, %c0_63, %c0_64], %109 {strides = array<i32>} : memref<1x4x32x128xf32, #tpu.memory_space<vmem>>, vector<1x1x32x128xf32>,
    %cst_65 = arith.constant dense<0.000000e+00> : vector<32xf32>
    %110 = vector.multi_reduction <add>, %105, %cst_65 [1] : vector<32x128xf32> to vector<32xf32>
    %111 = vector.shape_cast %110 : vector<32xf32> to vector<32x1xf32>
    %112 = arith.addf %96, %111 : vector<32x1xf32>
    %113 = arith.mulf %105, %105 : vector<32x128xf32>
    %cst_66 = arith.constant dense<0.000000e+00> : vector<32xf32>
    %114 = vector.multi_reduction <add>, %113, %cst_66 [1] : vector<32x128xf32> to vector<32xf32>
    %115 = vector.shape_cast %114 : vector<32xf32> to vector<32x1xf32>
    %116 = arith.addf %100, %115 : vector<32x1xf32>
    %c96_67 = arith.constant 96 : index
    %c0_68 = arith.constant 0 : index
    %117 = vector.load %arg11[%c96_67, %c0_68] : memref<192x128xf32, #tpu.memory_space<vmem>>, vector<96x128xf32>
    %c0_69 = arith.constant 0 : index
    %c0_70 = arith.constant 0 : index
    %118 = vector.load %arg6[%c0_69, %c0_70] : memref<32x96xf32, #tpu.memory_space<vmem>>, vector<32x96xf32>
    %cst_71 = arith.constant dense<0.000000e+00> : vector<32x128xf32>
    %119 = tpu.matmul %118, %117, %cst_71 {dimension_numbers = #tpu.dot_dimension_numbers<[1], [0], [0], [1], [0, 0, 1, 1], [], []>} : vector<32x96xf32>, vector<96x128xf32>, vector<32x128xf32> -> vector<32x128xf32>
    %120 = vector.broadcast %66 : vector<32x1xf32> to vector<32x128xf32>
    %121 = arith.addf %119, %120 : vector<32x128xf32>
    %122 = vector.shape_cast %121 : vector<32x128xf32> to vector<1x32x128xf32>
    %c0_72 = arith.constant 0 : index
    %c3_73 = arith.constant 3 : index
    %c0_74 = arith.constant 0 : index
    %c0_75 = arith.constant 0 : index
    %123 = vector.load %arg8[%c0_72, %c3_73, %c0_74, %c0_75] : memref<1x4x32x128xf32, #tpu.memory_space<vmem>>, vector<1x1x32x128xf32>
    %124 = vector.shape_cast %123 : vector<1x1x32x128xf32> to vector<1x32x128xf32>
    %125 = vector.shape_cast %122 : vector<1x32x128xf32> to vector<1x1x32x128xf32>
    tpu.vector_store %arg8[%c0_72, %c3_73, %c0_74, %c0_75], %125 {strides = array<i32>} : memref<1x4x32x128xf32, #tpu.memory_space<vmem>>, vector<1x1x32x128xf32>,
    %cst_76 = arith.constant dense<0.000000e+00> : vector<32xf32>
    %126 = vector.multi_reduction <add>, %121, %cst_76 [1] : vector<32x128xf32> to vector<32xf32>
    %127 = vector.shape_cast %126 : vector<32xf32> to vector<32x1xf32>
    %128 = arith.addf %112, %127 : vector<32x1xf32>
    %129 = arith.mulf %121, %121 : vector<32x128xf32>
    %cst_77 = arith.constant dense<0.000000e+00> : vector<32xf32>
    %130 = vector.multi_reduction <add>, %129, %cst_77 [1] : vector<32x128xf32> to vector<32xf32>
    %131 = vector.shape_cast %130 : vector<32xf32> to vector<32x1xf32>
    %132 = arith.addf %116, %131 : vector<32x1xf32>
    %c0_78 = arith.constant 0 : index
    %c0_79 = arith.constant 0 : index
    %c0_80 = arith.constant 0 : index
    %c0_81 = arith.constant 0 : index
    %133 = vector.load %arg9[%c0_78, %c0_79, %c0_80, %c0_81] : memref<1x1x32x1xf32, #tpu.memory_space<vmem>>, vector<1x1x32x1xf32>
    %134 = vector.shape_cast %133 : vector<1x1x32x1xf32> to vector<32x1xf32>
    %135 = arith.addf %134, %128 : vector<32x1xf32>
    %c0_82 = arith.constant 0 : index
    %c0_83 = arith.constant 0 : index
    %c0_84 = arith.constant 0 : index
    %c0_85 = arith.constant 0 : index
    %136 = vector.load %arg9[%c0_82, %c0_83, %c0_84, %c0_85] : memref<1x1x32x1xf32, #tpu.memory_space<vmem>>, vector<1x1x32x1xf32>
    %137 = vector.shape_cast %136 : vector<1x1x32x1xf32> to vector<32x1xf32>
    %138 = vector.shape_cast %135 : vector<32x1xf32> to vector<1x1x32x1xf32>
    tpu.vector_store %arg9[%c0_82, %c0_83, %c0_84, %c0_85], %138 {strides = array<i32>} : memref<1x1x32x1xf32, #tpu.memory_space<vmem>>, vector<1x1x32x1xf32>,
    %c0_86 = arith.constant 0 : index
    %c0_87 = arith.constant 0 : index
    %c0_88 = arith.constant 0 : index
    %c0_89 = arith.constant 0 : index
    %139 = vector.load %arg10[%c0_86, %c0_87, %c0_88, %c0_89] : memref<1x1x32x1xf32, #tpu.memory_space<vmem>>, vector<1x1x32x1xf32>
    %140 = vector.shape_cast %139 : vector<1x1x32x1xf32> to vector<32x1xf32>
    %141 = arith.addf %140, %132 : vector<32x1xf32>
    %c0_90 = arith.constant 0 : index
    %c0_91 = arith.constant 0 : index
    %c0_92 = arith.constant 0 : index
    %c0_93 = arith.constant 0 : index
    %142 = vector.load %arg10[%c0_90, %c0_91, %c0_92, %c0_93] : memref<1x1x32x1xf32, #tpu.memory_space<vmem>>, vector<1x1x32x1xf32>
    %143 = vector.shape_cast %142 : vector<1x1x32x1xf32> to vector<32x1xf32>
    %144 = vector.shape_cast %141 : vector<32x1xf32> to vector<1x1x32x1xf32>
    tpu.vector_store %arg10[%c0_90, %c0_91, %c0_92, %c0_93], %144 {strides = array<i32>} : memref<1x1x32x1xf32, #tpu.memory_space<vmem>>, vector<1x1x32x1xf32>,
    return
  }
  func.func @transform_0(%arg0: i32, %arg1: i32, %arg2: i32) -> (i32, i32, i32) {
    %c0_i32 = arith.constant 0 : i32
    %c0_i32_0 = arith.constant 0 : i32
    %c0_i32_1 = arith.constant 0 : i32
    return %arg0, %c0_i32, %c0_i32_0 : i32, i32, i32
  }
  func.func @transform_1(%arg0: i32, %arg1: i32, %arg2: i32) -> (i32, i32, i32) {
    %c0_i32 = arith.constant 0 : i32
    %c0_i32_0 = arith.constant 0 : i32
    %c0_i32_1 = arith.constant 0 : i32
    return %arg0, %c0_i32, %c0_i32_0 : i32, i32, i32
  }
  func.func @transform_2(%arg0: i32, %arg1: i32, %arg2: i32) -> (i32, i32, i32, i32) {
    %c1_i32 = arith.constant 1 : i32
    %0 = arith.muli %arg1, %c1_i32 : i32
    %1 = arith.addi %0, %arg2 : i32
    %c0_i32 = arith.constant 0 : i32
    %c0_i32_0 = arith.constant 0 : i32
    %c0_i32_1 = arith.constant 0 : i32
    return %arg0, %c0_i32, %c0_i32_0, %1 : i32, i32, i32, i32
  }
  func.func @transform_3(%arg0: i32, %arg1: i32, %arg2: i32) -> (i32, i32) {
    %c0_i32 = arith.constant 0 : i32
    %c0_i32_0 = arith.constant 0 : i32
    %c0_i32_1 = arith.constant 0 : i32
    return %c0_i32, %c0_i32_0 : i32, i32
  }
  func.func @transform_4(%arg0: i32, %arg1: i32, %arg2: i32) -> (i32, i32) {
    %c0_i32 = arith.constant 0 : i32
    %c0_i32_0 = arith.constant 0 : i32
    %c0_i32_1 = arith.constant 0 : i32
    return %c0_i32, %c0_i32_0 : i32, i32
  }
  func.func @transform_5(%arg0: i32, %arg1: i32, %arg2: i32) -> (i32, i32, i32, i32) {
    %c1_i32 = arith.constant 1 : i32
    %0 = arith.muli %arg1, %c1_i32 : i32
    %1 = arith.addi %0, %arg2 : i32
    %c0_i32 = arith.constant 0 : i32
    %c0_i32_0 = arith.constant 0 : i32
    %c0_i32_1 = arith.constant 0 : i32
    return %arg0, %c0_i32, %c0_i32_0, %1 : i32, i32, i32, i32
  }
  func.func @transform_6(%arg0: i32, %arg1: i32, %arg2: i32) -> (i32, i32, i32, i32) {
    %c0_i32 = arith.constant 0 : i32
    %c0_i32_0 = arith.constant 0 : i32
    %c0_i32_1 = arith.constant 0 : i32
    return %arg0, %arg1, %c0_i32, %c0_i32_0 : i32, i32, i32, i32
  }
  func.func @transform_7(%arg0: i32, %arg1: i32, %arg2: i32) -> (i32, i32, i32, i32) {
    %c0_i32 = arith.constant 0 : i32
    %c0_i32_0 = arith.constant 0 : i32
    %c0_i32_1 = arith.constant 0 : i32
    return %arg0, %arg1, %c0_i32, %c0_i32_0 : i32, i32, i32, i32
  }
}

</mosaic_0001>

<llo_original>
// kernel: conv3d_layer_pallas.3
$region0: #{conv3d_layer_pallas.3}
  #allocation0 [shape = 'u32[]', space=smem, size = 0x4, offset = 0x4, fixed_abs, tag = 'smem constant byte address 0x4 - core index']
  #allocation1 [shape = 'u32[72,128]{1,0:T(1,128)}', space=vmem, size = 0x9000, scoped, tag = 'internal scratch']
  %s0 = inlined_call_operand.vmem [shape: f32[2,4,32,256], index: 0, kind: input, shape index: {}]
  %s1 = inlined_call_operand.vmem [shape: f32[2,2,32,1], index: 1, kind: output, shape index: {0}]
  %s2 = inlined_call_operand.vmem [shape: f32[2,2,32,1], index: 2, kind: output, shape index: {1}]
  %3 = xla_tuple %s1, %s2
  %s4 = sld [smem:[#allocation0]]
  $region87: #{conv3d_layer_pallas.3} parent=0
    _
  %s6 = ssub.s32 1, %s4
  %s7 = scalar_select 0, %s6, %s4
  $region1: #{conv3d_layer_pallas.3} parent=0
    #allocation2 [shape = 'u8[131072]{0}', space=vmem, size = 0x20000, scoped, tag = 'input window, operand 0']
    loop: start=0, step=1, limit=6
    $region2: #{conv3d_layer_pallas.3} parent=1 // loop_pre_header
      _
    $region3: #{conv3d_layer_pallas.3} parent=1 // loop_header
      %s9 = sphi 0, %s13
      %p10 = scmp.ge.s32.totalorder %s9, 6
      %s16 = sphi 0, %s35
      %s17 = sphi 0, %s31
      %s18 = sphi 0, %s27
      %s19 = sphi 0, %s16
      %s20 = sphi 0, %s17
      %s21 = sphi 0, %s18
      %s22 = sphi 0, %s19
      %s23 = sphi 0, %s20
      %s24 = sphi 0, %s21
      %s42 = sphi 0, %s44
      %s45 = sphi 0, %s42
      %s46 = sphi 0, %s45
      %s62 = sphi 0, %s46
      %s70 = sphi 0, %s72
      %s73 = sphi 0, %s70
      %s74 = sphi 0, %s73
      %s90 = sphi 0, %s74
      %s98 = sphi 0, %s100
      %s101 = sphi 0, %s98
      %s102 = sphi 0, %s101
      %s118 = sphi 0, %s102
    $region4: #{conv3d_layer_pallas.3} parent=1 // loop_header_branch
      %12 = sbr.rel (%p10) target = $region8
    $region5: #{conv3d_layer_pallas.3} parent=1 // loop_body
      %s14 = ssub.s32 %s9, 1
      %s15 = ssub.s32 %s9, 2
      %s25 = sadd.s32 1, %s18
      %p26 = scmp.ge.s32.totalorder %s25, 1
      %s27 = scalar_select %p26, 0, %s25
      %s28 = sadd.s32 1, %s17
      %s29 = scalar_select %p26, %s28, %s17
      %p30 = scmp.ge.s32.totalorder %s29, 2
      %s31 = scalar_select %p30, 0, %s29
      %s32 = sadd.s32 1, %s16
      %s33 = scalar_select %p30, %s32, %s16
      %p34 = scmp.ge.s32.totalorder %s33, 2
      %s35 = scalar_select %p34, 0, %s33
      %s36 = sadd.s32 %s17, %s18
      %s37 = sadd.s32 %s31, %s27
      %s38 = ssub.s32 %s16, %s35
      %s39 = ssub.s32 %s36, %s37
      %s40 = sor.u32 %s38, %s39
      %p41 = scmp.eq.s32.totalorder %s40, 0
      %s43 = sadd.s32 %s42, 1
      %s44 = scalar_select %p41, %s42, %s43
      %p47 = pneg %p41
      %p48 = scmp.eq.s32.totalorder %s9, 3
      %p49 = por %p47, %p48
      %p50 = scmp.ne.s32.totalorder %s42, %s45
      %p51 = scmp.eq.s32.totalorder %s9, 0
      %p52 = por %p50, %p51
      %p53 = scmp.ne.s32.totalorder %s42, %s45
      %p54 = scmp.eq.s32.totalorder %s14, 3
      %p55 = por %p53, %p54
      %p56 = scmp.ne.s32.totalorder %s45, %s46
      %p57 = scmp.eq.s32.totalorder %s14, 0
      %p58 = por %p56, %p57
      %p59 = scmp.ne.s32.totalorder %s45, %s46
      %p60 = scmp.eq.s32.totalorder %s15, 3
      %p61 = por %p59, %p60
      %p63 = scmp.ne.s32.totalorder %s46, %s62
      %p64 = scmp.eq.s32.totalorder %s15, 0
      %p65 = por %p63, %p64
      %s66 = ssub.s32 %s16, %s35
      %s67 = ssub.s32 %s17, %s31
      %s68 = sor.u32 %s66, %s67
      %p69 = scmp.eq.s32.totalorder %s68, 0
      %s71 = sadd.s32 %s70, 1
      %s72 = scalar_select %p69, %s70, %s71
      %p75 = pneg %p69
      %p76 = scmp.eq.s32.totalorder %s9, 3
      %p77 = por %p75, %p76
      %p78 = scmp.ne.s32.totalorder %s70, %s73
      %p79 = scmp.eq.s32.totalorder %s9, 0
      %p80 = por %p78, %p79
      %p81 = scmp.ne.s32.totalorder %s70, %s73
      %p82 = scmp.eq.s32.totalorder %s14, 3
      %p83 = por %p81, %p82
      %p84 = scmp.ne.s32.totalorder %s73, %s74
      %p85 = scmp.eq.s32.totalorder %s14, 0
      %p86 = por %p84, %p85
      %p87 = scmp.ne.s32.totalorder %s73, %s74
      %p88 = scmp.eq.s32.totalorder %s15, 3
      %p89 = por %p87, %p88
      %p91 = scmp.ne.s32.totalorder %s74, %s90
      %p92 = scmp.eq.s32.totalorder %s15, 0
      %p93 = por %p91, %p92
      %s94 = ssub.s32 %s16, %s35
      %s95 = ssub.s32 %s17, %s31
      %s96 = sor.u32 %s94, %s95
      %p97 = scmp.eq.s32.totalorder %s96, 0
      %s99 = sadd.s32 %s98, 1
      %s100 = scalar_select %p97, %s98, %s99
      %p103 = pneg %p97
      %p104 = scmp.eq.s32.totalorder %s9, 3
      %p105 = por %p103, %p104
      %p106 = scmp.ne.s32.totalorder %s98, %s101
      %p107 = scmp.eq.s32.totalorder %s9, 0
      %p108 = por %p106, %p107
      %p109 = scmp.ne.s32.totalorder %s98, %s101
      %p110 = scmp.eq.s32.totalorder %s14, 3
      %p111 = por %p109, %p110
      %p112 = scmp.ne.s32.totalorder %s101, %s102
      %p113 = scmp.eq.s32.totalorder %s14, 0
      %p114 = por %p112, %p113
      %p115 = scmp.ne.s32.totalorder %s101, %s102
      %p116 = scmp.eq.s32.totalorder %s15, 3
      %p117 = por %p115, %p116
      %p119 = scmp.ne.s32.totalorder %s102, %s118
      %p120 = scmp.eq.s32.totalorder %s15, 0
      %p121 = por %p119, %p120
      %p122 = scmp.le.s32.totalorder 1, %s9
      %p123 = scmp.lt.s32.totalorder %s9, 5
      %p124 = pnand %p122, %p123
      %p125 = pneg %p124
      // Predicated region
      $region9: #{conv3d_layer_pallas.3} parent=5 // pred_check
        _
      $region10: #{conv3d_layer_pallas.3} parent=5 // pred_check_branch
        %127 = sbr.rel (%p124) target = $region12
      $region11: #{conv3d_layer_pallas.3} parent=5 // pred_region
        %s128 = ssub.s32 %s9, 1
      $region12: #{conv3d_layer_pallas.3} parent=5 // pred_fallthru
        _
      %p129 = scmp.lt.s32.totalorder %s9, 4
      // Predicated region
      $region13: #{conv3d_layer_pallas.3} parent=5 // pred_check
        %p130 = pneg %p129
      $region14: #{conv3d_layer_pallas.3} parent=5 // pred_check_branch
        %132 = sbr.rel (%p130) target = $region16
      $region15: #{conv3d_layer_pallas.3} parent=5 // pred_region
        // Predicated region
        $region17: #{conv3d_layer_pallas.3} parent=15 // pred_check
          %p133 = pneg %p52
        $region18: #{conv3d_layer_pallas.3} parent=15 // pred_check_branch
          %135 = sbr.rel (%p133) target = $region20
        $region19: #{conv3d_layer_pallas.3} parent=15 // pred_region
          %s136 = sand.u32 %s42, 1
          %s137 = sand.u32 %s42, 1
          %s138 = smul.addr %s137, 128
          %s139 = scalar_lea.vmem [#allocation2], %s138
          %s140 = sadd.s32 %s17, %s18
          %s141 = smul.addr %s16, 32
          %s142 = sadd.s32 %s140, %s141
          %s143 = smul.addr %s142, 8
          %s144 = scalar_lea.vmem %s0, %s143
          // Predicated region
          $region21: #{conv3d_layer_pallas.3} parent=19 // pred_check
            _
          $region22: #{conv3d_layer_pallas.3} parent=19 // pred_check_branch
            %146 = sbr.rel (0) target = $region24
          $region23: #{conv3d_layer_pallas.3} parent=19 // pred_region
            // Predicated region
            $region25: #{conv3d_layer_pallas.3} parent=23 // pred_check
              _
            $region26: #{conv3d_layer_pallas.3} parent=23 // pred_check_branch
              %148 = sbr.rel (0) target = $region28
            $region27: #{conv3d_layer_pallas.3} parent=23 // pred_region
              // Predicated region
              $region40: #{conv3d_layer_pallas.3} parent=27 // pred_check
                _
              $region41: #{conv3d_layer_pallas.3} parent=27 // pred_check_branch
                %194 = sbr.rel (0) target = $region43
              $region42: #{conv3d_layer_pallas.3} parent=27 // pred_region
                loop: start=0, step=1, limit=1
                $region44: #{conv3d_layer_pallas.3} parent=42 // loop_pre_header
                  _
                $region45: #{conv3d_layer_pallas.3} parent=42 // loop_header
                  %s196 = sphi 0, %s200
                  %p197 = scmp.ge.s32.totalorder %s196, 1
                  %s201 = sphi %s144, %s144
                  %s202 = sphi %s139, %s139
                $region46: #{conv3d_layer_pallas.3} parent=42 // loop_header_branch
                  %199 = sbr.rel (%p197) target = $region50
                $region47: #{conv3d_layer_pallas.3} parent=42 // loop_body
                  %v203 = vld [vmem:[%s201] sm:$0xff]
                  %204 = vst [vmem:[%s202] sm:$0xff] %v203
                  %v205 = vld [vmem:[%s201 + $0x10] sm:$0xff]
                  %206 = vst [vmem:[%s202 + $0x8] sm:$0xff] %v205
                  %v207 = vld [vmem:[%s201 + $0x20] sm:$0xff]
                  %208 = vst [vmem:[%s202 + $0x10] sm:$0xff] %v207
                  %v209 = vld [vmem:[%s201 + $0x30] sm:$0xff]
                  %210 = vst [vmem:[%s202 + $0x18] sm:$0xff] %v209
                  %v211 = vld [vmem:[%s201 + $0x40] sm:$0xff]
                  %212 = vst [vmem:[%s202 + $0x20] sm:$0xff] %v211
                  %v213 = vld [vmem:[%s201 + $0x50] sm:$0xff]
                  %214 = vst [vmem:[%s202 + $0x28] sm:$0xff] %v213
                  %v215 = vld [vmem:[%s201 + $0x60] sm:$0xff]
                  %216 = vst [vmem:[%s202 + $0x30] sm:$0xff] %v215
                  %v217 = vld [vmem:[%s201 + $0x70] sm:$0xff]
                  %218 = vst [vmem:[%s202 + $0x38] sm:$0xff] %v217
                  %v219 = vld [vmem:[%s201 + $0x80] sm:$0xff]
                  %220 = vst [vmem:[%s202 + $0x40] sm:$0xff] %v219
                  %v221 = vld [vmem:[%s201 + $0x90] sm:$0xff]
                  %222 = vst [vmem:[%s202 + $0x48] sm:$0xff] %v221
                  %v223 = vld [vmem:[%s201 + $0xa0] sm:$0xff]
                  %224 = vst [vmem:[%s202 + $0x50] sm:$0xff] %v223
                  %v225 = vld [vmem:[%s201 + $0xb0] sm:$0xff]
                  %226 = vst [vmem:[%s202 + $0x58] sm:$0xff] %v225
                  %v227 = vld [vmem:[%s201 + $0xc0] sm:$0xff]
                  %228 = vst [vmem:[%s202 + $0x60] sm:$0xff] %v227
                  %v229 = vld [vmem:[%s201 + $0xd0] sm:$0xff]
                  %230 = vst [vmem:[%s202 + $0x68] sm:$0xff] %v229
                  %v231 = vld [vmem:[%s201 + $0xe0] sm:$0xff]
                  %232 = vst [vmem:[%s202 + $0x70] sm:$0xff] %v231
                  %v233 = vld [vmem:[%s201 + $0xf0] sm:$0xff]
                  %234 = vst [vmem:[%s202 + $0x78] sm:$0xff] %v233
                $region48: #{conv3d_layer_pallas.3} parent=42 // loop_footer
                  %s200 = sadd.s32 1, %s196
                $region49: #{conv3d_layer_pallas.3} parent=42 // loop_footer_branch
                  %195 = sbr.rel target = $region45
                $region50: #{conv3d_layer_pallas.3} parent=42 // loop_exit
                  _
              $region43: #{conv3d_layer_pallas.3} parent=27 // pred_fallthru
                _
              // Predicated region
              $region51: #{conv3d_layer_pallas.3} parent=27 // pred_check
                _
              $region52: #{conv3d_layer_pallas.3} parent=27 // pred_check_branch
                %236 = sbr.rel target = $region54
              $region53: #{conv3d_layer_pallas.3} parent=27 // pred_region
                _
              $region54: #{conv3d_layer_pallas.3} parent=27 // pred_fallthru
                _
            $region28: #{conv3d_layer_pallas.3} parent=23 // pred_fallthru
              _
            // Predicated region
            $region29: #{conv3d_layer_pallas.3} parent=23 // pred_check
              _
            $region30: #{conv3d_layer_pallas.3} parent=23 // pred_check_branch
              %150 = sbr.rel target = $region32
            $region31: #{conv3d_layer_pallas.3} parent=23 // pred_region
              %s152 = ssub.s32 256, 1
              loop: start=0, step=1, limit=1
              $region33: #{conv3d_layer_pallas.3} parent=31 // loop_pre_header
                _
              $region34: #{conv3d_layer_pallas.3} parent=31 // loop_header
                %s154 = sphi 0, %s158
                %p155 = scmp.ge.s32.totalorder %s154, 1
                %s159 = sphi %s144, %s144
                %s160 = sphi %s139, %s139
              $region35: #{conv3d_layer_pallas.3} parent=31 // loop_header_branch
                %157 = sbr.rel (%p155) target = $region39
              $region36: #{conv3d_layer_pallas.3} parent=31 // loop_body
                %v161 = vld [vmem:[%s159] sm:%s152]
                %162 = vst [vmem:[%s160] sm:%s152] %v161
                %v163 = vld [vmem:[%s159 + $0x10] sm:%s152]
                %164 = vst [vmem:[%s160 + $0x8] sm:%s152] %v163
                %v165 = vld [vmem:[%s159 + $0x20] sm:%s152]
                %166 = vst [vmem:[%s160 + $0x10] sm:%s152] %v165
                %v167 = vld [vmem:[%s159 + $0x30] sm:%s152]
                %168 = vst [vmem:[%s160 + $0x18] sm:%s152] %v167
                %v169 = vld [vmem:[%s159 + $0x40] sm:%s152]
                %170 = vst [vmem:[%s160 + $0x20] sm:%s152] %v169
                %v171 = vld [vmem:[%s159 + $0x50] sm:%s152]
                %172 = vst [vmem:[%s160 + $0x28] sm:%s152] %v171
                %v173 = vld [vmem:[%s159 + $0x60] sm:%s152]
                %174 = vst [vmem:[%s160 + $0x30] sm:%s152] %v173
                %v175 = vld [vmem:[%s159 + $0x70] sm:%s152]
                %176 = vst [vmem:[%s160 + $0x38] sm:%s152] %v175
                %v177 = vld [vmem:[%s159 + $0x80] sm:%s152]
                %178 = vst [vmem:[%s160 + $0x40] sm:%s152] %v177
                %v179 = vld [vmem:[%s159 + $0x90] sm:%s152]
                %180 = vst [vmem:[%s160 + $0x48] sm:%s152] %v179
                %v181 = vld [vmem:[%s159 + $0xa0] sm:%s152]
                %182 = vst [vmem:[%s160 + $0x50] sm:%s152] %v181
                %v183 = vld [vmem:[%s159 + $0xb0] sm:%s152]
                %184 = vst [vmem:[%s160 + $0x58] sm:%s152] %v183
                %v185 = vld [vmem:[%s159 + $0xc0] sm:%s152]
                %186 = vst [vmem:[%s160 + $0x60] sm:%s152] %v185
                %v187 = vld [vmem:[%s159 + $0xd0] sm:%s152]
                %188 = vst [vmem:[%s160 + $0x68] sm:%s152] %v187
                %v189 = vld [vmem:[%s159 + $0xe0] sm:%s152]
                %190 = vst [vmem:[%s160 + $0x70] sm:%s152] %v189
                %v191 = vld [vmem:[%s159 + $0xf0] sm:%s152]
                %192 = vst [vmem:[%s160 + $0x78] sm:%s152] %v191
              $region37: #{conv3d_layer_pallas.3} parent=31 // loop_footer
                %s158 = sadd.s32 1, %s154
              $region38: #{conv3d_layer_pallas.3} parent=31 // loop_footer_branch
                %153 = sbr.rel target = $region34
              $region39: #{conv3d_layer_pallas.3} parent=31 // loop_exit
                _
            $region32: #{conv3d_layer_pallas.3} parent=23 // pred_fallthru
              _
          $region24: #{conv3d_layer_pallas.3} parent=19 // pred_fallthru
            _
          %237 = vnop
        $region20: #{conv3d_layer_pallas.3} parent=15 // pred_fallthru
          _
      $region16: #{conv3d_layer_pallas.3} parent=5 // pred_fallthru
        _
      %p238 = scmp.le.s32.totalorder 1, %s9
      %p239 = scmp.lt.s32.totalorder %s9, 5
      %p240 = pnand %p238, %p239
      %p241 = pneg %p240
      // Predicated region
      $region55: #{conv3d_layer_pallas.3} parent=5 // pred_check
        _
      $region56: #{conv3d_layer_pallas.3} parent=5 // pred_check_branch
        %243 = sbr.rel (%p240) target = $region58
      $region57: #{conv3d_layer_pallas.3} parent=5 // pred_region
        %s244 = ssub.s32 %s9, 1
        %s245 = sand.u32 %s45, 1
        %s246 = sand.u32 %s45, 1
        %s247 = smul.addr %s246, 128
        %s248 = scalar_lea.vmem [#allocation2], %s247
        // Predicated region
        $region59: #{conv3d_layer_pallas.3} parent=57 // pred_check
          %p249 = pneg %p58
        $region60: #{conv3d_layer_pallas.3} parent=57 // pred_check_branch
          %251 = sbr.rel (%p249) target = $region62
        $region61: #{conv3d_layer_pallas.3} parent=57 // pred_region
          _
        $region62: #{conv3d_layer_pallas.3} parent=57 // pred_fallthru
          _
        %s252 = sand.u32 %s45, 1
        %s253 = sand.u32 %s45, 1
        %s254 = smul.addr %s253, 128
        %s255 = scalar_lea.vmem [#allocation2], %s254
        %p256 = pneg %p58
        %p257 = pneg %p55
        %p258 = pneg %p86
        %p259 = pneg %p83
        %p260 = scmp.lt.s32.totalorder %s19, 1
        %s261 = scalar_select %p260, %s19, 1
        %p262 = scmp.lt.s32.totalorder %s20, 1
        %s263 = scalar_select %p262, %s20, 1
        %s264 = smul.addr %s263, 4
        %s265 = smul.addr %s261, 8
        %s266 = sadd.s32 %s264, %s265
        %s267 = smul.addr %s266, 8
        %s268 = scalar_lea.vmem %s1, %s267
        %p269 = pneg %p114
        %p270 = pneg %p111
        %p271 = scmp.lt.s32.totalorder %s19, 1
        %s272 = scalar_select %p271, %s19, 1
        %p273 = scmp.lt.s32.totalorder %s20, 1
        %s274 = scalar_select %p273, %s20, 1
        %s275 = smul.addr %s274, 4
        %s276 = smul.addr %s272, 8
        %s277 = sadd.s32 %s275, %s276
        %s278 = smul.addr %s277, 8
        %s279 = scalar_lea.vmem %s2, %s278
        %s280 = sadd.s32 %s20, %s21
        %p281 = scmp.lt.s32.totalorder %s19, 1
        %s282 = scalar_select %p281, %s19, 1
        %p283 = scmp.lt.s32.totalorder %s20, 1
        %s284 = scalar_select %p283, %s20, 1
        %s285 = smul.addr %s284, 4
        %s286 = smul.addr %s282, 8
        %s287 = sadd.s32 %s285, %s286
        %s288 = smul.addr %s287, 8
        %s289 = scalar_lea.vmem %s1, %s288
        %p290 = scmp.lt.s32.totalorder %s19, 1
        %s291 = scalar_select %p290, %s19, 1
        %p292 = scmp.lt.s32.totalorder %s20, 1
        %s293 = scalar_select %p292, %s20, 1
        %s294 = smul.addr %s293, 4
        %s295 = smul.addr %s291, 8
        %s296 = sadd.s32 %s294, %s295
        %s297 = smul.addr %s296, 8
        %s298 = scalar_lea.vmem %s2, %s297
        %p299 = scmp.eq.s32.totalorder %s21, 0
        // Predicated region
        $region63: #{conv3d_layer_pallas.3} parent=57 // pred_check
          %p300 = pneg %p299
        $region64: #{conv3d_layer_pallas.3} parent=57 // pred_check_branch
          %302 = sbr.rel (%p300) target = $region66
        $region65: #{conv3d_layer_pallas.3} parent=57 // pred_region
          %vm303 = vcmask 7168
          %304 = vst.msk [vmem:[%s289] sm:$0xff] %vm303, 0.0
          %305 = vst.msk [vmem:[%s289 + $0x8] sm:$0xff] %vm303, 0.0
          %306 = vst.msk [vmem:[%s289 + $0x10] sm:$0xff] %vm303, 0.0
          %307 = vst.msk [vmem:[%s289 + $0x18] sm:$0xff] %vm303, 0.0
          %308 = vst.msk [vmem:[%s298] sm:$0xff] %vm303, 0.0
          %309 = vst.msk [vmem:[%s298 + $0x8] sm:$0xff] %vm303, 0.0
          %310 = vst.msk [vmem:[%s298 + $0x10] sm:$0xff] %vm303, 0.0
          %311 = vst.msk [vmem:[%s298 + $0x18] sm:$0xff] %vm303, 0.0
        $region66: #{conv3d_layer_pallas.3} parent=57 // pred_fallthru
          _
        %v312 = vld [vmem:[%s248] sm:$0xff]
        %v313 = vld [vmem:[%s248 + $0x8] sm:$0xff]
        %v314 = vld [vmem:[%s248 + $0x10] sm:$0xff]
        %v315 = vld [vmem:[%s248 + $0x18] sm:$0xff]
        %316 = vadd.xlane.f32.xlu0 %v312
        %v317 = vpop.xlane.xlu0 %316
        %318 = vadd.xlane.f32.xlu0 %v313
        %v319 = vpop.xlane.xlu0 %318
        %320 = vadd.xlane.f32.xlu0 %v314
        %v321 = vpop.xlane.xlu0 %320
        %322 = vadd.xlane.f32.xlu0 %v315
        %v323 = vpop.xlane.xlu0 %322
        %v324 = vadd.f32 %v317, 0.0
        %v325 = vadd.f32 %v319, 0.0
        %v326 = vadd.f32 %v321, 0.0
        %v327 = vadd.f32 %v323, 0.0
        %v328 = vmul.f32 %v312, %v312
        %v329 = vmul.f32 %v313, %v313
        %v330 = vmul.f32 %v314, %v314
        %v331 = vmul.f32 %v315, %v315
        %332 = vadd.xlane.f32.xlu0 %v328
        %v333 = vpop.xlane.xlu0 %332
        %334 = vadd.xlane.f32.xlu0 %v329
        %v335 = vpop.xlane.xlu0 %334
        %336 = vadd.xlane.f32.xlu0 %v330
        %v337 = vpop.xlane.xlu0 %336
        %338 = vadd.xlane.f32.xlu0 %v331
        %v339 = vpop.xlane.xlu0 %338
        %v340 = vadd.f32 %v333, 0.0
        %v341 = vadd.f32 %v335, 0.0
        %v342 = vadd.f32 %v337, 0.0
        %v343 = vadd.f32 %v339, 0.0
        %s344 = scalar_lea.vmem %s248, 32 [#allocation2]
        %v345 = vld [vmem:[%s344] sm:$0xff]
        %v346 = vld [vmem:[%s344 + $0x8] sm:$0xff]
        %v347 = vld [vmem:[%s344 + $0x10] sm:$0xff]
        %v348 = vld [vmem:[%s344 + $0x18] sm:$0xff]
        %349 = vadd.xlane.f32.xlu0 %v345
        %v350 = vpop.xlane.xlu0 %349
        %351 = vadd.xlane.f32.xlu0 %v346
        %v352 = vpop.xlane.xlu0 %351
        %353 = vadd.xlane.f32.xlu0 %v347
        %v354 = vpop.xlane.xlu0 %353
        %355 = vadd.xlane.f32.xlu0 %v348
        %v356 = vpop.xlane.xlu0 %355
        %v357 = vadd.f32 %v324, %v350
        %v358 = vadd.f32 %v325, %v352
        %v359 = vadd.f32 %v326, %v354
        %v360 = vadd.f32 %v327, %v356
        %v361 = vmul.f32 %v345, %v345
        %v362 = vmul.f32 %v346, %v346
        %v363 = vmul.f32 %v347, %v347
        %v364 = vmul.f32 %v348, %v348
        %365 = vadd.xlane.f32.xlu0 %v361
        %v366 = vpop.xlane.xlu0 %365
        %367 = vadd.xlane.f32.xlu0 %v362
        %v368 = vpop.xlane.xlu0 %367
        %369 = vadd.xlane.f32.xlu0 %v363
        %v370 = vpop.xlane.xlu0 %369
        %371 = vadd.xlane.f32.xlu0 %v364
        %v372 = vpop.xlane.xlu0 %371
        %v373 = vadd.f32 %v340, %v366
        %v374 = vadd.f32 %v341, %v368
        %v375 = vadd.f32 %v342, %v370
        %v376 = vadd.f32 %v343, %v372
        %s377 = scalar_lea.vmem %s248, 64 [#allocation2]
        %v378 = vld [vmem:[%s377] sm:$0xff]
        %v379 = vld [vmem:[%s377 + $0x8] sm:$0xff]
        %v380 = vld [vmem:[%s377 + $0x10] sm:$0xff]
        %v381 = vld [vmem:[%s377 + $0x18] sm:$0xff]
        %382 = vadd.xlane.f32.xlu0 %v378
        %v383 = vpop.xlane.xlu0 %382
        %384 = vadd.xlane.f32.xlu0 %v379
        %v385 = vpop.xlane.xlu0 %384
        %386 = vadd.xlane.f32.xlu0 %v380
        %v387 = vpop.xlane.xlu0 %386
        %388 = vadd.xlane.f32.xlu0 %v381
        %v389 = vpop.xlane.xlu0 %388
        %v390 = vadd.f32 %v357, %v383
        %v391 = vadd.f32 %v358, %v385
        %v392 = vadd.f32 %v359, %v387
        %v393 = vadd.f32 %v360, %v389
        %v394 = vmul.f32 %v378, %v378
        %v395 = vmul.f32 %v379, %v379
        %v396 = vmul.f32 %v380, %v380
        %v397 = vmul.f32 %v381, %v381
        %398 = vadd.xlane.f32.xlu0 %v394
        %v399 = vpop.xlane.xlu0 %398
        %400 = vadd.xlane.f32.xlu0 %v395
        %v401 = vpop.xlane.xlu0 %400
        %402 = vadd.xlane.f32.xlu0 %v396
        %v403 = vpop.xlane.xlu0 %402
        %404 = vadd.xlane.f32.xlu0 %v397
        %v405 = vpop.xlane.xlu0 %404
        %v406 = vadd.f32 %v373, %v399
        %v407 = vadd.f32 %v374, %v401
        %v408 = vadd.f32 %v375, %v403
        %v409 = vadd.f32 %v376, %v405
        %s410 = scalar_lea.vmem %s248, 96 [#allocation2]
        %v411 = vld [vmem:[%s410] sm:$0xff]
        %v412 = vld [vmem:[%s410 + $0x8] sm:$0xff]
        %v413 = vld [vmem:[%s410 + $0x10] sm:$0xff]
        %v414 = vld [vmem:[%s410 + $0x18] sm:$0xff]
        %415 = vadd.xlane.f32.xlu0 %v411
        %v416 = vpop.xlane.xlu0 %415
        %417 = vadd.xlane.f32.xlu0 %v412
        %v418 = vpop.xlane.xlu0 %417
        %419 = vadd.xlane.f32.xlu0 %v413
        %v420 = vpop.xlane.xlu0 %419
        %421 = vadd.xlane.f32.xlu0 %v414
        %v422 = vpop.xlane.xlu0 %421
        %v423 = vadd.f32 %v390, %v416
        %v424 = vadd.f32 %v391, %v418
        %v425 = vadd.f32 %v392, %v420
        %v426 = vadd.f32 %v393, %v422
        %v427 = vmul.f32 %v411, %v411
        %v428 = vmul.f32 %v412, %v412
        %v429 = vmul.f32 %v413, %v413
        %v430 = vmul.f32 %v414, %v414
        %431 = vadd.xlane.f32.xlu0 %v427
        %v432 = vpop.xlane.xlu0 %431
        %433 = vadd.xlane.f32.xlu0 %v428
        %v434 = vpop.xlane.xlu0 %433
        %435 = vadd.xlane.f32.xlu0 %v429
        %v436 = vpop.xlane.xlu0 %435
        %437 = vadd.xlane.f32.xlu0 %v430
        %v438 = vpop.xlane.xlu0 %437
        %v439 = vadd.f32 %v406, %v432
        %v440 = vadd.f32 %v407, %v434
        %v441 = vadd.f32 %v408, %v436
        %v442 = vadd.f32 %v409, %v438
        %v443 = vld [vmem:[%s289] sm:$0xff]
        %v444 = vld [vmem:[%s289 + $0x8] sm:$0xff]
        %v445 = vld [vmem:[%s289 + $0x10] sm:$0xff]
        %v446 = vld [vmem:[%s289 + $0x18] sm:$0xff]
        %v447 = vadd.f32 %v443, %v423
        %v448 = vadd.f32 %v444, %v424
        %v449 = vadd.f32 %v445, %v425
        %v450 = vadd.f32 %v446, %v426
        %vm451 = vcmask 7168
        %452 = vst.msk [vmem:[%s289] sm:$0xff] %vm451, %v447
        %453 = vst.msk [vmem:[%s289 + $0x8] sm:$0xff] %vm451, %v448
        %454 = vst.msk [vmem:[%s289 + $0x10] sm:$0xff] %vm451, %v449
        %455 = vst.msk [vmem:[%s289 + $0x18] sm:$0xff] %vm451, %v450
        %v456 = vld [vmem:[%s298] sm:$0xff]
        %v457 = vld [vmem:[%s298 + $0x8] sm:$0xff]
        %v458 = vld [vmem:[%s298 + $0x10] sm:$0xff]
        %v459 = vld [vmem:[%s298 + $0x18] sm:$0xff]
        %v460 = vadd.f32 %v456, %v439
        %v461 = vadd.f32 %v457, %v440
        %v462 = vadd.f32 %v458, %v441
        %v463 = vadd.f32 %v459, %v442
        %464 = vst.msk [vmem:[%s298] sm:$0xff] %vm451, %v460
        %465 = vst.msk [vmem:[%s298 + $0x8] sm:$0xff] %vm451, %v461
        %466 = vst.msk [vmem:[%s298 + $0x10] sm:$0xff] %vm451, %v462
        %467 = vst.msk [vmem:[%s298 + $0x18] sm:$0xff] %vm451, %v463
        %p468 = scmp.lt.s32.totalorder %s19, 1
        %s469 = scalar_select %p468, %s19, 1
        %p470 = scmp.lt.s32.totalorder %s20, 1
        %s471 = scalar_select %p470, %s20, 1
        %s472 = smul.addr %s471, 4
        %s473 = smul.addr %s469, 8
        %s474 = sadd.s32 %s472, %s473
        %s475 = smul.addr %s474, 8
        %s476 = scalar_lea.vmem %s1, %s475
        %p477 = scmp.lt.s32.totalorder %s19, 1
        %s478 = scalar_select %p477, %s19, 1
        %p479 = scmp.lt.s32.totalorder %s20, 1
        %s480 = scalar_select %p479, %s20, 1
        %s481 = smul.addr %s480, 4
        %s482 = smul.addr %s478, 8
        %s483 = sadd.s32 %s481, %s482
        %s484 = smul.addr %s483, 8
        %s485 = scalar_lea.vmem %s2, %s484
        // Predicated region
        $region67: #{conv3d_layer_pallas.3} parent=57 // pred_check
          %p486 = pneg %p83
        $region68: #{conv3d_layer_pallas.3} parent=57 // pred_check_branch
          %488 = sbr.rel (%p486) target = $region70
        $region69: #{conv3d_layer_pallas.3} parent=57 // pred_region
          _
        $region70: #{conv3d_layer_pallas.3} parent=57 // pred_fallthru
          _
        // Predicated region
        $region71: #{conv3d_layer_pallas.3} parent=57 // pred_check
          %p489 = pneg %p111
        $region72: #{conv3d_layer_pallas.3} parent=57 // pred_check_branch
          %491 = sbr.rel (%p489) target = $region74
        $region73: #{conv3d_layer_pallas.3} parent=57 // pred_region
          _
        $region74: #{conv3d_layer_pallas.3} parent=57 // pred_fallthru
          _
      $region58: #{conv3d_layer_pallas.3} parent=5 // pred_fallthru
        _
      %p492 = scmp.le.s32.totalorder 2, %s9
      // Predicated region
      $region75: #{conv3d_layer_pallas.3} parent=5 // pred_check
        %p493 = pneg %p492
      $region76: #{conv3d_layer_pallas.3} parent=5 // pred_check_branch
        %495 = sbr.rel (%p493) target = $region78
      $region77: #{conv3d_layer_pallas.3} parent=5 // pred_region
        %s496 = ssub.s32 %s9, 2
        // Predicated region
        $region79: #{conv3d_layer_pallas.3} parent=77 // pred_check
          %p497 = pneg %p89
        $region80: #{conv3d_layer_pallas.3} parent=77 // pred_check_branch
          %499 = sbr.rel (%p497) target = $region82
        $region81: #{conv3d_layer_pallas.3} parent=77 // pred_region
          %p500 = scmp.lt.s32.totalorder %s22, 1
          %s501 = scalar_select %p500, %s22, 1
          %p502 = scmp.lt.s32.totalorder %s23, 1
          %s503 = scalar_select %p502, %s23, 1
          %s504 = smul.addr %s503, 4
          %s505 = smul.addr %s501, 8
          %s506 = sadd.s32 %s504, %s505
          %s507 = smul.addr %s506, 8
          %s508 = scalar_lea.vmem %s1, %s507
        $region82: #{conv3d_layer_pallas.3} parent=77 // pred_fallthru
          _
        // Predicated region
        $region83: #{conv3d_layer_pallas.3} parent=77 // pred_check
          %p509 = pneg %p117
        $region84: #{conv3d_layer_pallas.3} parent=77 // pred_check_branch
          %511 = sbr.rel (%p509) target = $region86
        $region85: #{conv3d_layer_pallas.3} parent=77 // pred_region
          %p512 = scmp.lt.s32.totalorder %s22, 1
          %s513 = scalar_select %p512, %s22, 1
          %p514 = scmp.lt.s32.totalorder %s23, 1
          %s515 = scalar_select %p514, %s23, 1
          %s516 = smul.addr %s515, 4
          %s517 = smul.addr %s513, 8
          %s518 = sadd.s32 %s516, %s517
          %s519 = smul.addr %s518, 8
          %s520 = scalar_lea.vmem %s2, %s519
        $region86: #{conv3d_layer_pallas.3} parent=77 // pred_fallthru
          _
      $region78: #{conv3d_layer_pallas.3} parent=5 // pred_fallthru
        _
    $region6: #{conv3d_layer_pallas.3} parent=1 // loop_footer
      %s13 = sadd.s32 1, %s9
    $region7: #{conv3d_layer_pallas.3} parent=1 // loop_footer_branch
      %8 = sbr.rel target = $region3
    $region8: #{conv3d_layer_pallas.3} parent=1 // loop_exit
      _

// kernel: conv3d_layer_pallas.5
$region0: #{conv3d_layer_pallas.5}
  #allocation0 [shape = 'u32[]', space=smem, size = 0x4, offset = 0x4, fixed_abs, tag = 'smem constant byte address 0x4 - core index']
  #allocation1 [shape = 'u32[72,128]{1,0:T(1,128)}', space=vmem, size = 0x9000, scoped, tag = 'internal scratch']
  #allocation2 [shape = 'f32[192,128]{1,0:T(8,128)}', space=vmem, size = 0x18000, scoped, tag = 'scratch operand']
  #allocation3 [shape = 'f32[1]{0:T(128)S(6)}', space=smem, size = 0x200, scoped, tag = 'scoped memory for conv3d_layer_pallas.5']
  %s0 = inlined_call_operand.<no memory space> [shape: f32[1], index: 0, kind: input, shape index: {}]
  %s1 = inlined_call_operand.vmem [shape: f32[2,32,1], index: 1, kind: input, shape index: {}]
  %s2 = inlined_call_operand.vmem [shape: f32[2,32,1], index: 2, kind: input, shape index: {}]
  %s3 = inlined_call_operand.vmem [shape: f32[2,4,32,256], index: 3, kind: input, shape index: {}]
  %s4 = inlined_call_operand.vmem [shape: f32[2,4,32,256], index: 4, kind: input, shape index: {}]
  %s5 = inlined_call_operand.vmem [shape: f32[32,96], index: 5, kind: input, shape index: {}]
  %s6 = inlined_call_operand.vmem [shape: f32[32,1], index: 6, kind: input, shape index: {}]
  %s7 = inlined_call_operand.vmem [shape: f32[2,4,32,256], index: 7, kind: output, shape index: {}]
  %s8 = sld [smem:[#allocation0]]
  $region171: #{conv3d_layer_pallas.5} parent=0
    _
  %s10 = ssub.s32 1, %s8
  %s11 = scalar_select 0, %s10, %s8
  %12 = sst [smem:[#allocation3]] %s0
  $region1: #{conv3d_layer_pallas.5} parent=0
    #allocation4 [shape = 'u8[131072]{0}', space=vmem, size = 0x20000, scoped, tag = 'input window, operand 3']
    #allocation5 [shape = 'u8[131072]{0}', space=vmem, size = 0x20000, scoped, tag = 'input window, operand 4']
    #allocation6 [shape = 'u8[131072]{0}', space=vmem, size = 0x20000, scoped, tag = 'output window, operand 0']
    loop: start=0, step=1, limit=6
    $region2: #{conv3d_layer_pallas.5} parent=1 // loop_pre_header
      _
    $region3: #{conv3d_layer_pallas.5} parent=1 // loop_header
      %s14 = sphi 0, %s18
      %p15 = scmp.ge.s32.totalorder %s14, 6
      %s21 = sphi 0, %s40
      %s22 = sphi 0, %s36
      %s23 = sphi 0, %s32
      %s24 = sphi 0, %s21
      %s25 = sphi 0, %s22
      %s26 = sphi 0, %s23
      %s27 = sphi 0, %s24
      %s28 = sphi 0, %s25
      %s29 = sphi 0, %s26
      %s41 = sphi 0, %s41
      %s43 = sphi 0, %s41
      %s44 = sphi 0, %s43
      %s58 = sphi 0, %s44
      %s64 = sphi 0, %s66
      %s67 = sphi 0, %s64
      %s68 = sphi 0, %s67
      %s84 = sphi 0, %s68
      %s90 = sphi 0, %s92
      %s93 = sphi 0, %s90
      %s94 = sphi 0, %s93
      %s110 = sphi 0, %s94
      %s120 = sphi 0, %s122
      %s123 = sphi 0, %s120
      %s124 = sphi 0, %s123
      %s140 = sphi 0, %s124
      %s150 = sphi 0, %s152
      %s153 = sphi 0, %s150
      %s154 = sphi 0, %s153
      %s170 = sphi 0, %s154
      %s174 = sphi 0, %s174
      %s176 = sphi 0, %s174
      %s177 = sphi 0, %s176
      %s191 = sphi 0, %s177
      %s195 = sphi 0, %s195
      %s197 = sphi 0, %s195
      %s198 = sphi 0, %s197
      %s212 = sphi 0, %s198
      %s222 = sphi 0, %s224
      %s225 = sphi 0, %s222
      %s226 = sphi 0, %s225
      %s242 = sphi 0, %s226
    $region4: #{conv3d_layer_pallas.5} parent=1 // loop_header_branch
      %17 = sbr.rel (%p15) target = $region8
    $region5: #{conv3d_layer_pallas.5} parent=1 // loop_body
      %s19 = ssub.s32 %s14, 1
      %s20 = ssub.s32 %s14, 2
      %s30 = sadd.s32 1, %s23
      %p31 = scmp.ge.s32.totalorder %s30, 1
      %s32 = scalar_select %p31, 0, %s30
      %s33 = sadd.s32 1, %s22
      %s34 = scalar_select %p31, %s33, %s22
      %p35 = scmp.ge.s32.totalorder %s34, 2
      %s36 = scalar_select %p35, 0, %s34
      %s37 = sadd.s32 1, %s21
      %s38 = scalar_select %p35, %s37, %s21
      %p39 = scmp.ge.s32.totalorder %s38, 2
      %s40 = scalar_select %p39, 0, %s38
      %s42 = sadd.s32 %s41, 1
      %p45 = scmp.eq.s32.totalorder %s14, 3
      %p46 = scmp.ne.s32.totalorder %s41, %s43
      %p47 = scmp.eq.s32.totalorder %s14, 0
      %p48 = por %p46, %p47
      %p49 = scmp.ne.s32.totalorder %s41, %s43
      %p50 = scmp.eq.s32.totalorder %s19, 3
      %p51 = por %p49, %p50
      %p52 = scmp.ne.s32.totalorder %s43, %s44
      %p53 = scmp.eq.s32.totalorder %s19, 0
      %p54 = por %p52, %p53
      %p55 = scmp.ne.s32.totalorder %s43, %s44
      %p56 = scmp.eq.s32.totalorder %s20, 3
      %p57 = por %p55, %p56
      %p59 = scmp.ne.s32.totalorder %s44, %s58
      %p60 = scmp.eq.s32.totalorder %s20, 0
      %p61 = por %p59, %p60
      %s62 = ssub.s32 %s21, %s40
      %p63 = scmp.eq.s32.totalorder %s62, 0
      %s65 = sadd.s32 %s64, 1
      %s66 = scalar_select %p63, %s64, %s65
      %p69 = pneg %p63
      %p70 = scmp.eq.s32.totalorder %s14, 3
      %p71 = por %p69, %p70
      %p72 = scmp.ne.s32.totalorder %s64, %s67
      %p73 = scmp.eq.s32.totalorder %s14, 0
      %p74 = por %p72, %p73
      %p75 = scmp.ne.s32.totalorder %s64, %s67
      %p76 = scmp.eq.s32.totalorder %s19, 3
      %p77 = por %p75, %p76
      %p78 = scmp.ne.s32.totalorder %s67, %s68
      %p79 = scmp.eq.s32.totalorder %s19, 0
      %p80 = por %p78, %p79
      %p81 = scmp.ne.s32.totalorder %s67, %s68
      %p82 = scmp.eq.s32.totalorder %s20, 3
      %p83 = por %p81, %p82
      %p85 = scmp.ne.s32.totalorder %s68, %s84
      %p86 = scmp.eq.s32.totalorder %s20, 0
      %p87 = por %p85, %p86
      %s88 = ssub.s32 %s21, %s40
      %p89 = scmp.eq.s32.totalorder %s88, 0
      %s91 = sadd.s32 %s90, 1
      %s92 = scalar_select %p89, %s90, %s91
      %p95 = pneg %p89
      %p96 = scmp.eq.s32.totalorder %s14, 3
      %p97 = por %p95, %p96
      %p98 = scmp.ne.s32.totalorder %s90, %s93
      %p99 = scmp.eq.s32.totalorder %s14, 0
      %p100 = por %p98, %p99
      %p101 = scmp.ne.s32.totalorder %s90, %s93
      %p102 = scmp.eq.s32.totalorder %s19, 3
      %p103 = por %p101, %p102
      %p104 = scmp.ne.s32.totalorder %s93, %s94
      %p105 = scmp.eq.s32.totalorder %s19, 0
      %p106 = por %p104, %p105
      %p107 = scmp.ne.s32.totalorder %s93, %s94
      %p108 = scmp.eq.s32.totalorder %s20, 3
      %p109 = por %p107, %p108
      %p111 = scmp.ne.s32.totalorder %s94, %s110
      %p112 = scmp.eq.s32.totalorder %s20, 0
      %p113 = por %p111, %p112
      %s114 = sadd.s32 %s22, %s23
      %s115 = sadd.s32 %s36, %s32
      %s116 = ssub.s32 %s21, %s40
      %s117 = ssub.s32 %s114, %s115
      %s118 = sor.u32 %s116, %s117
      %p119 = scmp.eq.s32.totalorder %s118, 0
      %s121 = sadd.s32 %s120, 1
      %s122 = scalar_select %p119, %s120, %s121
      %p125 = pneg %p119
      %p126 = scmp.eq.s32.totalorder %s14, 3
      %p127 = por %p125, %p126
      %p128 = scmp.ne.s32.totalorder %s120, %s123
      %p129 = scmp.eq.s32.totalorder %s14, 0
      %p130 = por %p128, %p129
      %p131 = scmp.ne.s32.totalorder %s120, %s123
      %p132 = scmp.eq.s32.totalorder %s19, 3
      %p133 = por %p131, %p132
      %p134 = scmp.ne.s32.totalorder %s123, %s124
      %p135 = scmp.eq.s32.totalorder %s19, 0
      %p136 = por %p134, %p135
      %p137 = scmp.ne.s32.totalorder %s123, %s124
      %p138 = scmp.eq.s32.totalorder %s20, 3
      %p139 = por %p137, %p138
      %p141 = scmp.ne.s32.totalorder %s124, %s140
      %p142 = scmp.eq.s32.totalorder %s20, 0
      %p143 = por %p141, %p142
      %s144 = sadd.s32 %s22, %s23
      %s145 = sadd.s32 %s36, %s32
      %s146 = ssub.s32 %s21, %s40
      %s147 = ssub.s32 %s144, %s145
      %s148 = sor.u32 %s146, %s147
      %p149 = scmp.eq.s32.totalorder %s148, 0
      %s151 = sadd.s32 %s150, 1
      %s152 = scalar_select %p149, %s150, %s151
      %p155 = pneg %p149
      %p156 = scmp.eq.s32.totalorder %s14, 3
      %p157 = por %p155, %p156
      %p158 = scmp.ne.s32.totalorder %s150, %s153
      %p159 = scmp.eq.s32.totalorder %s14, 0
      %p160 = por %p158, %p159
      %p161 = scmp.ne.s32.totalorder %s150, %s153
      %p162 = scmp.eq.s32.totalorder %s19, 3
      %p163 = por %p161, %p162
      %p164 = scmp.ne.s32.totalorder %s153, %s154
      %p165 = scmp.eq.s32.totalorder %s19, 0
      %p166 = por %p164, %p165
      %p167 = scmp.ne.s32.totalorder %s153, %s154
      %p168 = scmp.eq.s32.totalorder %s20, 3
      %p169 = por %p167, %p168
      %p171 = scmp.ne.s32.totalorder %s154, %s170
      %p172 = scmp.eq.s32.totalorder %s20, 0
      %p173 = por %p171, %p172
      %s175 = sadd.s32 %s174, 1
      %p178 = scmp.eq.s32.totalorder %s14, 3
      %p179 = scmp.ne.s32.totalorder %s174, %s176
      %p180 = scmp.eq.s32.totalorder %s14, 0
      %p181 = por %p179, %p180
      %p182 = scmp.ne.s32.totalorder %s174, %s176
      %p183 = scmp.eq.s32.totalorder %s19, 3
      %p184 = por %p182, %p183
      %p185 = scmp.ne.s32.totalorder %s176, %s177
      %p186 = scmp.eq.s32.totalorder %s19, 0
      %p187 = por %p185, %p186
      %p188 = scmp.ne.s32.totalorder %s176, %s177
      %p189 = scmp.eq.s32.totalorder %s20, 3
      %p190 = por %p188, %p189
      %p192 = scmp.ne.s32.totalorder %s177, %s191
      %p193 = scmp.eq.s32.totalorder %s20, 0
      %p194 = por %p192, %p193
      %s196 = sadd.s32 %s195, 1
      %p199 = scmp.eq.s32.totalorder %s14, 3
      %p200 = scmp.ne.s32.totalorder %s195, %s197
      %p201 = scmp.eq.s32.totalorder %s14, 0
      %p202 = por %p200, %p201
      %p203 = scmp.ne.s32.totalorder %s195, %s197
      %p204 = scmp.eq.s32.totalorder %s19, 3
      %p205 = por %p203, %p204
      %p206 = scmp.ne.s32.totalorder %s197, %s198
      %p207 = scmp.eq.s32.totalorder %s19, 0
      %p208 = por %p206, %p207
      %p209 = scmp.ne.s32.totalorder %s197, %s198
      %p210 = scmp.eq.s32.totalorder %s20, 3
      %p211 = por %p209, %p210
      %p213 = scmp.ne.s32.totalorder %s198, %s212
      %p214 = scmp.eq.s32.totalorder %s20, 0
      %p215 = por %p213, %p214
      %s216 = sadd.s32 %s22, %s23
      %s217 = sadd.s32 %s36, %s32
      %s218 = ssub.s32 %s21, %s40
      %s219 = ssub.s32 %s216, %s217
      %s220 = sor.u32 %s218, %s219
      %p221 = scmp.eq.s32.totalorder %s220, 0
      %s223 = sadd.s32 %s222, 1
      %s224 = scalar_select %p221, %s222, %s223
      %p227 = pneg %p221
      %p228 = scmp.eq.s32.totalorder %s14, 3
      %p229 = por %p227, %p228
      %p230 = scmp.ne.s32.totalorder %s222, %s225
      %p231 = scmp.eq.s32.totalorder %s14, 0
      %p232 = por %p230, %p231
      %p233 = scmp.ne.s32.totalorder %s222, %s225
      %p234 = scmp.eq.s32.totalorder %s19, 3
      %p235 = por %p233, %p234
      %p236 = scmp.ne.s32.totalorder %s225, %s226
      %p237 = scmp.eq.s32.totalorder %s19, 0
      %p238 = por %p236, %p237
      %p239 = scmp.ne.s32.totalorder %s225, %s226
      %p240 = scmp.eq.s32.totalorder %s20, 3
      %p241 = por %p239, %p240
      %p243 = scmp.ne.s32.totalorder %s226, %s242
      %p244 = scmp.eq.s32.totalorder %s20, 0
      %p245 = por %p243, %p244
      %p246 = scmp.le.s32.totalorder 1, %s14
      %p247 = scmp.lt.s32.totalorder %s14, 5
      %p248 = pnand %p246, %p247
      %p249 = pneg %p248
      // Predicated region
      $region9: #{conv3d_layer_pallas.5} parent=5 // pred_check
        _
      $region10: #{conv3d_layer_pallas.5} parent=5 // pred_check_branch
        %251 = sbr.rel (%p248) target = $region12
      $region11: #{conv3d_layer_pallas.5} parent=5 // pred_region
        %s252 = ssub.s32 %s14, 1
        // Predicated region
        $region13: #{conv3d_layer_pallas.5} parent=11 // pred_check
          %p253 = pneg %p54
        $region14: #{conv3d_layer_pallas.5} parent=11 // pred_check_branch
          %255 = sbr.rel (%p253) target = $region16
        $region15: #{conv3d_layer_pallas.5} parent=11 // pred_region
          _
        $region16: #{conv3d_layer_pallas.5} parent=11 // pred_fallthru
          _
        // Predicated region
        $region17: #{conv3d_layer_pallas.5} parent=11 // pred_check
          %p256 = pneg %p187
        $region18: #{conv3d_layer_pallas.5} parent=11 // pred_check_branch
          %258 = sbr.rel (%p256) target = $region20
        $region19: #{conv3d_layer_pallas.5} parent=11 // pred_region
          _
        $region20: #{conv3d_layer_pallas.5} parent=11 // pred_fallthru
          _
        // Predicated region
        $region21: #{conv3d_layer_pallas.5} parent=11 // pred_check
          %p259 = pneg %p208
        $region22: #{conv3d_layer_pallas.5} parent=11 // pred_check_branch
          %261 = sbr.rel (%p259) target = $region24
        $region23: #{conv3d_layer_pallas.5} parent=11 // pred_region
          _
        $region24: #{conv3d_layer_pallas.5} parent=11 // pred_fallthru
          _
      $region12: #{conv3d_layer_pallas.5} parent=5 // pred_fallthru
        _
      %p262 = scmp.lt.s32.totalorder %s14, 4
      // Predicated region
      $region25: #{conv3d_layer_pallas.5} parent=5 // pred_check
        %p263 = pneg %p262
      $region26: #{conv3d_layer_pallas.5} parent=5 // pred_check_branch
        %265 = sbr.rel (%p263) target = $region28
      $region27: #{conv3d_layer_pallas.5} parent=5 // pred_region
        // Predicated region
        $region29: #{conv3d_layer_pallas.5} parent=27 // pred_check
          %p266 = pneg %p74
        $region30: #{conv3d_layer_pallas.5} parent=27 // pred_check_branch
          %268 = sbr.rel (%p266) target = $region32
        $region31: #{conv3d_layer_pallas.5} parent=27 // pred_region
          %p269 = scmp.lt.s32.totalorder %s21, 1
          %s270 = scalar_select %p269, %s21, 1
          %s271 = smul.addr %s270, 4
          %s272 = smul.addr %s271, 8
          %s273 = scalar_lea.vmem %s1, %s272
        $region32: #{conv3d_layer_pallas.5} parent=27 // pred_fallthru
          _
        // Predicated region
        $region33: #{conv3d_layer_pallas.5} parent=27 // pred_check
          %p274 = pneg %p100
        $region34: #{conv3d_layer_pallas.5} parent=27 // pred_check_branch
          %276 = sbr.rel (%p274) target = $region36
        $region35: #{conv3d_layer_pallas.5} parent=27 // pred_region
          %p277 = scmp.lt.s32.totalorder %s21, 1
          %s278 = scalar_select %p277, %s21, 1
          %s279 = smul.addr %s278, 4
          %s280 = smul.addr %s279, 8
          %s281 = scalar_lea.vmem %s2, %s280
        $region36: #{conv3d_layer_pallas.5} parent=27 // pred_fallthru
          _
        // Predicated region
        $region37: #{conv3d_layer_pallas.5} parent=27 // pred_check
          %p282 = pneg %p130
        $region38: #{conv3d_layer_pallas.5} parent=27 // pred_check_branch
          %284 = sbr.rel (%p282) target = $region40
        $region39: #{conv3d_layer_pallas.5} parent=27 // pred_region
          %s285 = sand.u32 %s120, 1
          %s286 = sand.u32 %s120, 1
          %s287 = smul.addr %s286, 128
          %s288 = scalar_lea.vmem [#allocation4], %s287
          %s289 = sadd.s32 %s22, %s23
          %s290 = smul.addr %s21, 32
          %s291 = sadd.s32 %s289, %s290
          %s292 = smul.addr %s291, 8
          %s293 = scalar_lea.vmem %s3, %s292
          // Predicated region
          $region41: #{conv3d_layer_pallas.5} parent=39 // pred_check
            _
          $region42: #{conv3d_layer_pallas.5} parent=39 // pred_check_branch
            %295 = sbr.rel (0) target = $region44
          $region43: #{conv3d_layer_pallas.5} parent=39 // pred_region
            // Predicated region
            $region45: #{conv3d_layer_pallas.5} parent=43 // pred_check
              _
            $region46: #{conv3d_layer_pallas.5} parent=43 // pred_check_branch
              %297 = sbr.rel (0) target = $region48
            $region47: #{conv3d_layer_pallas.5} parent=43 // pred_region
              // Predicated region
              $region60: #{conv3d_layer_pallas.5} parent=47 // pred_check
                _
              $region61: #{conv3d_layer_pallas.5} parent=47 // pred_check_branch
                %343 = sbr.rel (0) target = $region63
              $region62: #{conv3d_layer_pallas.5} parent=47 // pred_region
                loop: start=0, step=1, limit=1
                $region64: #{conv3d_layer_pallas.5} parent=62 // loop_pre_header
                  _
                $region65: #{conv3d_layer_pallas.5} parent=62 // loop_header
                  %s345 = sphi 0, %s349
                  %p346 = scmp.ge.s32.totalorder %s345, 1
                  %s350 = sphi %s293, %s293
                  %s351 = sphi %s288, %s288
                $region66: #{conv3d_layer_pallas.5} parent=62 // loop_header_branch
                  %348 = sbr.rel (%p346) target = $region70
                $region67: #{conv3d_layer_pallas.5} parent=62 // loop_body
                  %v352 = vld [vmem:[%s350] sm:$0xff]
                  %353 = vst [vmem:[%s351] sm:$0xff] %v352
                  %v354 = vld [vmem:[%s350 + $0x10] sm:$0xff]
                  %355 = vst [vmem:[%s351 + $0x8] sm:$0xff] %v354
                  %v356 = vld [vmem:[%s350 + $0x20] sm:$0xff]
                  %357 = vst [vmem:[%s351 + $0x10] sm:$0xff] %v356
                  %v358 = vld [vmem:[%s350 + $0x30] sm:$0xff]
                  %359 = vst [vmem:[%s351 + $0x18] sm:$0xff] %v358
                  %v360 = vld [vmem:[%s350 + $0x40] sm:$0xff]
                  %361 = vst [vmem:[%s351 + $0x20] sm:$0xff] %v360
                  %v362 = vld [vmem:[%s350 + $0x50] sm:$0xff]
                  %363 = vst [vmem:[%s351 + $0x28] sm:$0xff] %v362
                  %v364 = vld [vmem:[%s350 + $0x60] sm:$0xff]
                  %365 = vst [vmem:[%s351 + $0x30] sm:$0xff] %v364
                  %v366 = vld [vmem:[%s350 + $0x70] sm:$0xff]
                  %367 = vst [vmem:[%s351 + $0x38] sm:$0xff] %v366
                  %v368 = vld [vmem:[%s350 + $0x80] sm:$0xff]
                  %369 = vst [vmem:[%s351 + $0x40] sm:$0xff] %v368
                  %v370 = vld [vmem:[%s350 + $0x90] sm:$0xff]
                  %371 = vst [vmem:[%s351 + $0x48] sm:$0xff] %v370
                  %v372 = vld [vmem:[%s350 + $0xa0] sm:$0xff]
                  %373 = vst [vmem:[%s351 + $0x50] sm:$0xff] %v372
                  %v374 = vld [vmem:[%s350 + $0xb0] sm:$0xff]
                  %375 = vst [vmem:[%s351 + $0x58] sm:$0xff] %v374
                  %v376 = vld [vmem:[%s350 + $0xc0] sm:$0xff]
                  %377 = vst [vmem:[%s351 + $0x60] sm:$0xff] %v376
                  %v378 = vld [vmem:[%s350 + $0xd0] sm:$0xff]
                  %379 = vst [vmem:[%s351 + $0x68] sm:$0xff] %v378
                  %v380 = vld [vmem:[%s350 + $0xe0] sm:$0xff]
                  %381 = vst [vmem:[%s351 + $0x70] sm:$0xff] %v380
                  %v382 = vld [vmem:[%s350 + $0xf0] sm:$0xff]
                  %383 = vst [vmem:[%s351 + $0x78] sm:$0xff] %v382
                $region68: #{conv3d_layer_pallas.5} parent=62 // loop_footer
                  %s349 = sadd.s32 1, %s345
                $region69: #{conv3d_layer_pallas.5} parent=62 // loop_footer_branch
                  %344 = sbr.rel target = $region65
                $region70: #{conv3d_layer_pallas.5} parent=62 // loop_exit
                  _
              $region63: #{conv3d_layer_pallas.5} parent=47 // pred_fallthru
                _
              // Predicated region
              $region71: #{conv3d_layer_pallas.5} parent=47 // pred_check
                _
              $region72: #{conv3d_layer_pallas.5} parent=47 // pred_check_branch
                %385 = sbr.rel target = $region74
              $region73: #{conv3d_layer_pallas.5} parent=47 // pred_region
                _
              $region74: #{conv3d_layer_pallas.5} parent=47 // pred_fallthru
                _
            $region48: #{conv3d_layer_pallas.5} parent=43 // pred_fallthru
              _
            // Predicated region
            $region49: #{conv3d_layer_pallas.5} parent=43 // pred_check
              _
            $region50: #{conv3d_layer_pallas.5} parent=43 // pred_check_branch
              %299 = sbr.rel target = $region52
            $region51: #{conv3d_layer_pallas.5} parent=43 // pred_region
              %s301 = ssub.s32 256, 1
              loop: start=0, step=1, limit=1
              $region53: #{conv3d_layer_pallas.5} parent=51 // loop_pre_header
                _
              $region54: #{conv3d_layer_pallas.5} parent=51 // loop_header
                %s303 = sphi 0, %s307
                %p304 = scmp.ge.s32.totalorder %s303, 1
                %s308 = sphi %s293, %s293
                %s309 = sphi %s288, %s288
              $region55: #{conv3d_layer_pallas.5} parent=51 // loop_header_branch
                %306 = sbr.rel (%p304) target = $region59
              $region56: #{conv3d_layer_pallas.5} parent=51 // loop_body
                %v310 = vld [vmem:[%s308] sm:%s301]
                %311 = vst [vmem:[%s309] sm:%s301] %v310
                %v312 = vld [vmem:[%s308 + $0x10] sm:%s301]
                %313 = vst [vmem:[%s309 + $0x8] sm:%s301] %v312
                %v314 = vld [vmem:[%s308 + $0x20] sm:%s301]
                %315 = vst [vmem:[%s309 + $0x10] sm:%s301] %v314
                %v316 = vld [vmem:[%s308 + $0x30] sm:%s301]
                %317 = vst [vmem:[%s309 + $0x18] sm:%s301] %v316
                %v318 = vld [vmem:[%s308 + $0x40] sm:%s301]
                %319 = vst [vmem:[%s309 + $0x20] sm:%s301] %v318
                %v320 = vld [vmem:[%s308 + $0x50] sm:%s301]
                %321 = vst [vmem:[%s309 + $0x28] sm:%s301] %v320
                %v322 = vld [vmem:[%s308 + $0x60] sm:%s301]
                %323 = vst [vmem:[%s309 + $0x30] sm:%s301] %v322
                %v324 = vld [vmem:[%s308 + $0x70] sm:%s301]
                %325 = vst [vmem:[%s309 + $0x38] sm:%s301] %v324
                %v326 = vld [vmem:[%s308 + $0x80] sm:%s301]
                %327 = vst [vmem:[%s309 + $0x40] sm:%s301] %v326
                %v328 = vld [vmem:[%s308 + $0x90] sm:%s301]
                %329 = vst [vmem:[%s309 + $0x48] sm:%s301] %v328
                %v330 = vld [vmem:[%s308 + $0xa0] sm:%s301]
                %331 = vst [vmem:[%s309 + $0x50] sm:%s301] %v330
                %v332 = vld [vmem:[%s308 + $0xb0] sm:%s301]
                %333 = vst [vmem:[%s309 + $0x58] sm:%s301] %v332
                %v334 = vld [vmem:[%s308 + $0xc0] sm:%s301]
                %335 = vst [vmem:[%s309 + $0x60] sm:%s301] %v334
                %v336 = vld [vmem:[%s308 + $0xd0] sm:%s301]
                %337 = vst [vmem:[%s309 + $0x68] sm:%s301] %v336
                %v338 = vld [vmem:[%s308 + $0xe0] sm:%s301]
                %339 = vst [vmem:[%s309 + $0x70] sm:%s301] %v338
                %v340 = vld [vmem:[%s308 + $0xf0] sm:%s301]
                %341 = vst [vmem:[%s309 + $0x78] sm:%s301] %v340
              $region57: #{conv3d_layer_pallas.5} parent=51 // loop_footer
                %s307 = sadd.s32 1, %s303
              $region58: #{conv3d_layer_pallas.5} parent=51 // loop_footer_branch
                %302 = sbr.rel target = $region54
              $region59: #{conv3d_layer_pallas.5} parent=51 // loop_exit
                _
            $region52: #{conv3d_layer_pallas.5} parent=43 // pred_fallthru
              _
          $region44: #{conv3d_layer_pallas.5} parent=39 // pred_fallthru
            _
          %386 = vnop
        $region40: #{conv3d_layer_pallas.5} parent=27 // pred_fallthru
          _
        // Predicated region
        $region75: #{conv3d_layer_pallas.5} parent=27 // pred_check
          %p387 = pneg %p160
        $region76: #{conv3d_layer_pallas.5} parent=27 // pred_check_branch
          %389 = sbr.rel (%p387) target = $region78
        $region77: #{conv3d_layer_pallas.5} parent=27 // pred_region
          %s390 = sand.u32 %s150, 1
          %s391 = sand.u32 %s150, 1
          %s392 = smul.addr %s391, 128
          %s393 = scalar_lea.vmem [#allocation5], %s392
          %s394 = sadd.s32 %s22, %s23
          %s395 = smul.addr %s21, 32
          %s396 = sadd.s32 %s394, %s395
          %s397 = smul.addr %s396, 8
          %s398 = scalar_lea.vmem %s4, %s397
          // Predicated region
          $region79: #{conv3d_layer_pallas.5} parent=77 // pred_check
            _
          $region80: #{conv3d_layer_pallas.5} parent=77 // pred_check_branch
            %400 = sbr.rel (0) target = $region82
          $region81: #{conv3d_layer_pallas.5} parent=77 // pred_region
            // Predicated region
            $region83: #{conv3d_layer_pallas.5} parent=81 // pred_check
              _
            $region84: #{conv3d_layer_pallas.5} parent=81 // pred_check_branch
              %402 = sbr.rel (0) target = $region86
            $region85: #{conv3d_layer_pallas.5} parent=81 // pred_region
              // Predicated region
              $region98: #{conv3d_layer_pallas.5} parent=85 // pred_check
                _
              $region99: #{conv3d_layer_pallas.5} parent=85 // pred_check_branch
                %448 = sbr.rel (0) target = $region101
              $region100: #{conv3d_layer_pallas.5} parent=85 // pred_region
                loop: start=0, step=1, limit=1
                $region102: #{conv3d_layer_pallas.5} parent=100 // loop_pre_header
                  _
                $region103: #{conv3d_layer_pallas.5} parent=100 // loop_header
                  %s450 = sphi 0, %s454
                  %p451 = scmp.ge.s32.totalorder %s450, 1
                  %s455 = sphi %s398, %s398
                  %s456 = sphi %s393, %s393
                $region104: #{conv3d_layer_pallas.5} parent=100 // loop_header_branch
                  %453 = sbr.rel (%p451) target = $region108
                $region105: #{conv3d_layer_pallas.5} parent=100 // loop_body
                  %v457 = vld [vmem:[%s455] sm:$0xff]
                  %458 = vst [vmem:[%s456] sm:$0xff] %v457
                  %v459 = vld [vmem:[%s455 + $0x10] sm:$0xff]
                  %460 = vst [vmem:[%s456 + $0x8] sm:$0xff] %v459
                  %v461 = vld [vmem:[%s455 + $0x20] sm:$0xff]
                  %462 = vst [vmem:[%s456 + $0x10] sm:$0xff] %v461
                  %v463 = vld [vmem:[%s455 + $0x30] sm:$0xff]
                  %464 = vst [vmem:[%s456 + $0x18] sm:$0xff] %v463
                  %v465 = vld [vmem:[%s455 + $0x40] sm:$0xff]
                  %466 = vst [vmem:[%s456 + $0x20] sm:$0xff] %v465
                  %v467 = vld [vmem:[%s455 + $0x50] sm:$0xff]
                  %468 = vst [vmem:[%s456 + $0x28] sm:$0xff] %v467
                  %v469 = vld [vmem:[%s455 + $0x60] sm:$0xff]
                  %470 = vst [vmem:[%s456 + $0x30] sm:$0xff] %v469
                  %v471 = vld [vmem:[%s455 + $0x70] sm:$0xff]
                  %472 = vst [vmem:[%s456 + $0x38] sm:$0xff] %v471
                  %v473 = vld [vmem:[%s455 + $0x80] sm:$0xff]
                  %474 = vst [vmem:[%s456 + $0x40] sm:$0xff] %v473
                  %v475 = vld [vmem:[%s455 + $0x90] sm:$0xff]
                  %476 = vst [vmem:[%s456 + $0x48] sm:$0xff] %v475
                  %v477 = vld [vmem:[%s455 + $0xa0] sm:$0xff]
                  %478 = vst [vmem:[%s456 + $0x50] sm:$0xff] %v477
                  %v479 = vld [vmem:[%s455 + $0xb0] sm:$0xff]
                  %480 = vst [vmem:[%s456 + $0x58] sm:$0xff] %v479
                  %v481 = vld [vmem:[%s455 + $0xc0] sm:$0xff]
                  %482 = vst [vmem:[%s456 + $0x60] sm:$0xff] %v481
                  %v483 = vld [vmem:[%s455 + $0xd0] sm:$0xff]
                  %484 = vst [vmem:[%s456 + $0x68] sm:$0xff] %v483
                  %v485 = vld [vmem:[%s455 + $0xe0] sm:$0xff]
                  %486 = vst [vmem:[%s456 + $0x70] sm:$0xff] %v485
                  %v487 = vld [vmem:[%s455 + $0xf0] sm:$0xff]
                  %488 = vst [vmem:[%s456 + $0x78] sm:$0xff] %v487
                $region106: #{conv3d_layer_pallas.5} parent=100 // loop_footer
                  %s454 = sadd.s32 1, %s450
                $region107: #{conv3d_layer_pallas.5} parent=100 // loop_footer_branch
                  %449 = sbr.rel target = $region103
                $region108: #{conv3d_layer_pallas.5} parent=100 // loop_exit
                  _
              $region101: #{conv3d_layer_pallas.5} parent=85 // pred_fallthru
                _
              // Predicated region
              $region109: #{conv3d_layer_pallas.5} parent=85 // pred_check
                _
              $region110: #{conv3d_layer_pallas.5} parent=85 // pred_check_branch
                %490 = sbr.rel target = $region112
              $region111: #{conv3d_layer_pallas.5} parent=85 // pred_region
                _
              $region112: #{conv3d_layer_pallas.5} parent=85 // pred_fallthru
                _
            $region86: #{conv3d_layer_pallas.5} parent=81 // pred_fallthru
              _
            // Predicated region
            $region87: #{conv3d_layer_pallas.5} parent=81 // pred_check
              _
            $region88: #{conv3d_layer_pallas.5} parent=81 // pred_check_branch
              %404 = sbr.rel target = $region90
            $region89: #{conv3d_layer_pallas.5} parent=81 // pred_region
              %s406 = ssub.s32 256, 1
              loop: start=0, step=1, limit=1
              $region91: #{conv3d_layer_pallas.5} parent=89 // loop_pre_header
                _
              $region92: #{conv3d_layer_pallas.5} parent=89 // loop_header
                %s408 = sphi 0, %s412
                %p409 = scmp.ge.s32.totalorder %s408, 1
                %s413 = sphi %s398, %s398
                %s414 = sphi %s393, %s393
              $region93: #{conv3d_layer_pallas.5} parent=89 // loop_header_branch
                %411 = sbr.rel (%p409) target = $region97
              $region94: #{conv3d_layer_pallas.5} parent=89 // loop_body
                %v415 = vld [vmem:[%s413] sm:%s406]
                %416 = vst [vmem:[%s414] sm:%s406] %v415
                %v417 = vld [vmem:[%s413 + $0x10] sm:%s406]
                %418 = vst [vmem:[%s414 + $0x8] sm:%s406] %v417
                %v419 = vld [vmem:[%s413 + $0x20] sm:%s406]
                %420 = vst [vmem:[%s414 + $0x10] sm:%s406] %v419
                %v421 = vld [vmem:[%s413 + $0x30] sm:%s406]
                %422 = vst [vmem:[%s414 + $0x18] sm:%s406] %v421
                %v423 = vld [vmem:[%s413 + $0x40] sm:%s406]
                %424 = vst [vmem:[%s414 + $0x20] sm:%s406] %v423
                %v425 = vld [vmem:[%s413 + $0x50] sm:%s406]
                %426 = vst [vmem:[%s414 + $0x28] sm:%s406] %v425
                %v427 = vld [vmem:[%s413 + $0x60] sm:%s406]
                %428 = vst [vmem:[%s414 + $0x30] sm:%s406] %v427
                %v429 = vld [vmem:[%s413 + $0x70] sm:%s406]
                %430 = vst [vmem:[%s414 + $0x38] sm:%s406] %v429
                %v431 = vld [vmem:[%s413 + $0x80] sm:%s406]
                %432 = vst [vmem:[%s414 + $0x40] sm:%s406] %v431
                %v433 = vld [vmem:[%s413 + $0x90] sm:%s406]
                %434 = vst [vmem:[%s414 + $0x48] sm:%s406] %v433
                %v435 = vld [vmem:[%s413 + $0xa0] sm:%s406]
                %436 = vst [vmem:[%s414 + $0x50] sm:%s406] %v435
                %v437 = vld [vmem:[%s413 + $0xb0] sm:%s406]
                %438 = vst [vmem:[%s414 + $0x58] sm:%s406] %v437
                %v439 = vld [vmem:[%s413 + $0xc0] sm:%s406]
                %440 = vst [vmem:[%s414 + $0x60] sm:%s406] %v439
                %v441 = vld [vmem:[%s413 + $0xd0] sm:%s406]
                %442 = vst [vmem:[%s414 + $0x68] sm:%s406] %v441
                %v443 = vld [vmem:[%s413 + $0xe0] sm:%s406]
                %444 = vst [vmem:[%s414 + $0x70] sm:%s406] %v443
                %v445 = vld [vmem:[%s413 + $0xf0] sm:%s406]
                %446 = vst [vmem:[%s414 + $0x78] sm:%s406] %v445
              $region95: #{conv3d_layer_pallas.5} parent=89 // loop_footer
                %s412 = sadd.s32 1, %s408
              $region96: #{conv3d_layer_pallas.5} parent=89 // loop_footer_branch
                %407 = sbr.rel target = $region92
              $region97: #{conv3d_layer_pallas.5} parent=89 // loop_exit
                _
            $region90: #{conv3d_layer_pallas.5} parent=81 // pred_fallthru
              _
          $region82: #{conv3d_layer_pallas.5} parent=77 // pred_fallthru
            _
          %491 = vnop
        $region78: #{conv3d_layer_pallas.5} parent=27 // pred_fallthru
          _
      $region28: #{conv3d_layer_pallas.5} parent=5 // pred_fallthru
        _
      %p492 = scmp.le.s32.totalorder 1, %s14
      %p493 = scmp.lt.s32.totalorder %s14, 5
      %p494 = pnand %p492, %p493
      %p495 = pneg %p494
      // Predicated region
      $region113: #{conv3d_layer_pallas.5} parent=5 // pred_check
        _
      $region114: #{conv3d_layer_pallas.5} parent=5 // pred_check_branch
        %497 = sbr.rel (%p494) target = $region116
      $region115: #{conv3d_layer_pallas.5} parent=5 // pred_region
        %s498 = ssub.s32 %s14, 1
        %s499 = sand.u32 %s123, 1
        %s500 = sand.u32 %s123, 1
        %s501 = smul.addr %s500, 128
        %s502 = scalar_lea.vmem [#allocation4], %s501
        // Predicated region
        $region117: #{conv3d_layer_pallas.5} parent=115 // pred_check
          %p503 = pneg %p136
        $region118: #{conv3d_layer_pallas.5} parent=115 // pred_check_branch
          %505 = sbr.rel (%p503) target = $region120
        $region119: #{conv3d_layer_pallas.5} parent=115 // pred_region
          _
        $region120: #{conv3d_layer_pallas.5} parent=115 // pred_fallthru
          _
        %s506 = sand.u32 %s153, 1
        %s507 = sand.u32 %s153, 1
        %s508 = smul.addr %s507, 128
        %s509 = scalar_lea.vmem [#allocation5], %s508
        // Predicated region
        $region121: #{conv3d_layer_pallas.5} parent=115 // pred_check
          %p510 = pneg %p166
        $region122: #{conv3d_layer_pallas.5} parent=115 // pred_check_branch
          %512 = sbr.rel (%p510) target = $region124
        $region123: #{conv3d_layer_pallas.5} parent=115 // pred_region
          _
        $region124: #{conv3d_layer_pallas.5} parent=115 // pred_fallthru
          _
        %p513 = pneg %p54
        %p514 = pneg %p51
        %p515 = scmp.lt.s32.totalorder %s24, 1
        %s516 = scalar_select %p515, %s24, 1
        %s517 = smul.addr %s516, 4
        %s518 = smul.addr %s517, 8
        %s519 = scalar_lea.vmem %s1, %s518
        %p520 = pneg %p80
        %p521 = pneg %p77
        %p522 = scmp.lt.s32.totalorder %s24, 1
        %s523 = scalar_select %p522, %s24, 1
        %s524 = smul.addr %s523, 4
        %s525 = smul.addr %s524, 8
        %s526 = scalar_lea.vmem %s2, %s525
        %p527 = pneg %p106
        %p528 = pneg %p103
        %s529 = sand.u32 %s123, 1
        %s530 = sand.u32 %s123, 1
        %s531 = smul.addr %s530, 128
        %s532 = scalar_lea.vmem [#allocation4], %s531
        %p533 = pneg %p136
        %p534 = pneg %p133
        %s535 = sand.u32 %s153, 1
        %s536 = sand.u32 %s153, 1
        %s537 = smul.addr %s536, 128
        %s538 = scalar_lea.vmem [#allocation5], %s537
        %p539 = pneg %p166
        %p540 = pneg %p163
        %p541 = pneg %p187
        %p542 = pneg %p184
        %p543 = pneg %p208
        %p544 = pneg %p205
        %p545 = pneg %p238
        %p546 = pneg %p235
        %s547 = sand.u32 %s225, 1
        %s548 = sand.u32 %s225, 1
        %s549 = smul.addr %s548, 128
        %s550 = scalar_lea.vmem [#allocation6], %s549
        %p551 = scmp.lt.s32.totalorder %s24, 1
        %s552 = scalar_select %p551, %s24, 1
        %s553 = smul.addr %s552, 4
        %s554 = smul.addr %s553, 8
        %s555 = scalar_lea.vmem %s1, %s554
        %p556 = scmp.lt.s32.totalorder %s24, 1
        %s557 = scalar_select %p556, %s24, 1
        %s558 = smul.addr %s557, 4
        %s559 = smul.addr %s558, 8
        %s560 = scalar_lea.vmem %s2, %s559
        %s561 = sadd.s32 %s25, %s26
        %s562 = sadd.s32 %s25, %s26
        %s563 = sadd.s32 %s25, %s26
        %v564 = vld [vmem:[%s555] sm:$0xff]
        %v565 = vld [vmem:[%s555 + $0x8] sm:$0xff]
        %v566 = vld [vmem:[%s555 + $0x10] sm:$0xff]
        %v567 = vld [vmem:[%s555 + $0x18] sm:$0xff]
        %v568 = vld [vmem:[%s560] sm:$0xff]
        %v569 = vld [vmem:[%s560 + $0x8] sm:$0xff]
        %v570 = vld [vmem:[%s560 + $0x10] sm:$0xff]
        %v571 = vld [vmem:[%s560 + $0x18] sm:$0xff]
        %572 = vst [vmem:[#allocation2] sm:$0xff] 0.0
        %573 = vst [vmem:[#allocation2 + $0x8] sm:$0xff] 0.0
        %574 = vst [vmem:[#allocation2 + $0x10] sm:$0xff] 0.0
        %575 = vst [vmem:[#allocation2 + $0x18] sm:$0xff] 0.0
        %576 = vst [vmem:[#allocation2 + $0xa0] sm:$0xff] 0.0
        %577 = vst [vmem:[#allocation2 + $0xa8] sm:$0xff] 0.0
        %578 = vst [vmem:[#allocation2 + $0xb0] sm:$0xff] 0.0
        %579 = vst [vmem:[#allocation2 + $0xb8] sm:$0xff] 0.0
        %v580 = vld [vmem:[%s502] sm:$0xff]
        %v581 = vld [vmem:[%s502 + $0x8] sm:$0xff]
        %v582 = vld [vmem:[%s502 + $0x10] sm:$0xff]
        %v583 = vld [vmem:[%s502 + $0x18] sm:$0xff]
        %585 = vset.pattern.permute.xlu0 0
        %586 = vperm.xlu0 %585, %v564
        %v587 = vpop.permute.xlu0 %586
        %590 = vset.pattern.permute.xlu0 0
        %591 = vperm.xlu0 %590, %v565
        %v592 = vpop.permute.xlu0 %591
        %595 = vset.pattern.permute.xlu0 0
        %596 = vperm.xlu0 %595, %v566
        %v597 = vpop.permute.xlu0 %596
        %600 = vset.pattern.permute.xlu0 0
        %601 = vperm.xlu0 %600, %v567
        %v602 = vpop.permute.xlu0 %601
        %v604 = vmul.f32 %v580, %v587
        %v605 = vmul.f32 %v581, %v592
        %v606 = vmul.f32 %v582, %v597
        %v607 = vmul.f32 %v583, %v602
        %609 = vset.pattern.permute.xlu0 0
        %610 = vperm.xlu0 %609, %v568
        %v611 = vpop.permute.xlu0 %610
        %614 = vset.pattern.permute.xlu0 0
        %615 = vperm.xlu0 %614, %v569
        %v616 = vpop.permute.xlu0 %615
        %619 = vset.pattern.permute.xlu0 0
        %620 = vperm.xlu0 %619, %v570
        %v621 = vpop.permute.xlu0 %620
        %624 = vset.pattern.permute.xlu0 0
        %625 = vperm.xlu0 %624, %v571
        %v626 = vpop.permute.xlu0 %625
        %v628 = vadd.f32 %v604, %v611
        %v629 = vadd.f32 %v605, %v616
        %v630 = vadd.f32 %v606, %v621
        %v631 = vadd.f32 %v607, %v626
        %v632 = vxor.u32 %v628, 2147483648
        %v633 = vxor.u32 %v629, 2147483648
        %v634 = vxor.u32 %v630, 2147483648
        %v635 = vxor.u32 %v631, 2147483648
        %v636 = vmul.f32 %v632, 1.442695
        %v637 = vpow.pop %v636
        %v638 = vmul.f32 %v633, 1.442695
        %v639 = vpow.pop %v638
        %v640 = vmul.f32 %v634, 1.442695
        %v641 = vpow.pop %v640
        %v642 = vmul.f32 %v635, 1.442695
        %v643 = vpow.pop %v642
        %v644 = vadd.f32 %v637, 1.0
        %v645 = vadd.f32 %v639, 1.0
        %v646 = vadd.f32 %v641, 1.0
        %v647 = vadd.f32 %v643, 1.0
        %v648 = vrcp.pop %v644
        %v649 = vmul.f32 %v644, %v648
        %v650 = vsub.f32 1.0, %v649
        %v651 = vmul.f32 %v648, %v650
        %v652 = vadd.f32 %v648, %v651
        %vm653 = vweird.f32 %v644
        %vm654 = vweird.f32 %v648
        %vm655 = vmor %vm653, %vm654
        %v656 = vsel %vm655, %v648, %v652
        %v657 = vand.u32 2147483647, %v644
        %vm658 = vcmp.eq.f32.partialorder %v657, 8.507059e+37
        %v659 = vand.u32 %v644, 2147483648
        %v660 = vor.u32 1.1754944e-38, %v659
        %v661 = vsel %vm658, %v660, %v656
        %v662 = vmul.f32 1.0, %v661
        %v663 = vrcp.pop %v645
        %v664 = vmul.f32 %v645, %v663
        %v665 = vsub.f32 1.0, %v664
        %v666 = vmul.f32 %v663, %v665
        %v667 = vadd.f32 %v663, %v666
        %vm668 = vweird.f32 %v645
        %vm669 = vweird.f32 %v663
        %vm670 = vmor %vm668, %vm669
        %v671 = vsel %vm670, %v663, %v667
        %v672 = vand.u32 2147483647, %v645
        %vm673 = vcmp.eq.f32.partialorder %v672, 8.507059e+37
        %v674 = vand.u32 %v645, 2147483648
        %v675 = vor.u32 1.1754944e-38, %v674
        %v676 = vsel %vm673, %v675, %v671
        %v677 = vmul.f32 1.0, %v676
        %v678 = vrcp.pop %v646
        %v679 = vmul.f32 %v646, %v678
        %v680 = vsub.f32 1.0, %v679
        %v681 = vmul.f32 %v678, %v680
        %v682 = vadd.f32 %v678, %v681
        %vm683 = vweird.f32 %v646
        %vm684 = vweird.f32 %v678
        %vm685 = vmor %vm683, %vm684
        %v686 = vsel %vm685, %v678, %v682
        %v687 = vand.u32 2147483647, %v646
        %vm688 = vcmp.eq.f32.partialorder %v687, 8.507059e+37
        %v689 = vand.u32 %v646, 2147483648
        %v690 = vor.u32 1.1754944e-38, %v689
        %v691 = vsel %vm688, %v690, %v686
        %v692 = vmul.f32 1.0, %v691
        %v693 = vrcp.pop %v647
        %v694 = vmul.f32 %v647, %v693
        %v695 = vsub.f32 1.0, %v694
        %v696 = vmul.f32 %v693, %v695
        %v697 = vadd.f32 %v693, %v696
        %vm698 = vweird.f32 %v647
        %vm699 = vweird.f32 %v693
        %vm700 = vmor %vm698, %vm699
        %v701 = vsel %vm700, %v693, %v697
        %v702 = vand.u32 2147483647, %v647
        %vm703 = vcmp.eq.f32.partialorder %v702, 8.507059e+37
        %v704 = vand.u32 %v647, 2147483648
        %v705 = vor.u32 1.1754944e-38, %v704
        %v706 = vsel %vm703, %v705, %v701
        %v707 = vmul.f32 1.0, %v706
        %v708 = vmul.f32 %v628, %v662
        %v709 = vmul.f32 %v629, %v677
        %v710 = vmul.f32 %v630, %v692
        %v711 = vmul.f32 %v631, %v707
        %712 = vst [vmem:[#allocation2 + $0x20] sm:$0xff] %v708
        %713 = vst [vmem:[#allocation2 + $0x28] sm:$0xff] %v709
        %714 = vst [vmem:[#allocation2 + $0x30] sm:$0xff] %v710
        %715 = vst [vmem:[#allocation2 + $0x38] sm:$0xff] %v711
        %s716 = scalar_lea.vmem %s502, 32 [#allocation4]
        %v717 = vld [vmem:[%s716] sm:$0xff]
        %v718 = vld [vmem:[%s716 + $0x8] sm:$0xff]
        %v719 = vld [vmem:[%s716 + $0x10] sm:$0xff]
        %v720 = vld [vmem:[%s716 + $0x18] sm:$0xff]
        %v721 = vmul.f32 %v717, %v587
        %v722 = vmul.f32 %v718, %v592
        %v723 = vmul.f32 %v719, %v597
        %v724 = vmul.f32 %v720, %v602
        %v725 = vadd.f32 %v721, %v611
        %v726 = vadd.f32 %v722, %v616
        %v727 = vadd.f32 %v723, %v621
        %v728 = vadd.f32 %v724, %v626
        %v729 = vxor.u32 %v725, 2147483648
        %v730 = vxor.u32 %v726, 2147483648
        %v731 = vxor.u32 %v727, 2147483648
        %v732 = vxor.u32 %v728, 2147483648
        %v733 = vmul.f32 %v729, 1.442695
        %v734 = vpow.pop %v733
        %v735 = vmul.f32 %v730, 1.442695
        %v736 = vpow.pop %v735
        %v737 = vmul.f32 %v731, 1.442695
        %v738 = vpow.pop %v737
        %v739 = vmul.f32 %v732, 1.442695
        %v740 = vpow.pop %v739
        %v741 = vadd.f32 %v734, 1.0
        %v742 = vadd.f32 %v736, 1.0
        %v743 = vadd.f32 %v738, 1.0
        %v744 = vadd.f32 %v740, 1.0
        %v745 = vrcp.pop %v741
        %v746 = vmul.f32 %v741, %v745
        %v747 = vsub.f32 1.0, %v746
        %v748 = vmul.f32 %v745, %v747
        %v749 = vadd.f32 %v745, %v748
        %vm750 = vweird.f32 %v741
        %vm751 = vweird.f32 %v745
        %vm752 = vmor %vm750, %vm751
        %v753 = vsel %vm752, %v745, %v749
        %v754 = vand.u32 2147483647, %v741
        %vm755 = vcmp.eq.f32.partialorder %v754, 8.507059e+37
        %v756 = vand.u32 %v741, 2147483648
        %v757 = vor.u32 1.1754944e-38, %v756
        %v758 = vsel %vm755, %v757, %v753
        %v759 = vmul.f32 1.0, %v758
        %v760 = vrcp.pop %v742
        %v761 = vmul.f32 %v742, %v760
        %v762 = vsub.f32 1.0, %v761
        %v763 = vmul.f32 %v760, %v762
        %v764 = vadd.f32 %v760, %v763
        %vm765 = vweird.f32 %v742
        %vm766 = vweird.f32 %v760
        %vm767 = vmor %vm765, %vm766
        %v768 = vsel %vm767, %v760, %v764
        %v769 = vand.u32 2147483647, %v742
        %vm770 = vcmp.eq.f32.partialorder %v769, 8.507059e+37
        %v771 = vand.u32 %v742, 2147483648
        %v772 = vor.u32 1.1754944e-38, %v771
        %v773 = vsel %vm770, %v772, %v768
        %v774 = vmul.f32 1.0, %v773
        %v775 = vrcp.pop %v743
        %v776 = vmul.f32 %v743, %v775
        %v777 = vsub.f32 1.0, %v776
        %v778 = vmul.f32 %v775, %v777
        %v779 = vadd.f32 %v775, %v778
        %vm780 = vweird.f32 %v743
        %vm781 = vweird.f32 %v775
        %vm782 = vmor %vm780, %vm781
        %v783 = vsel %vm782, %v775, %v779
        %v784 = vand.u32 2147483647, %v743
        %vm785 = vcmp.eq.f32.partialorder %v784, 8.507059e+37
        %v786 = vand.u32 %v743, 2147483648
        %v787 = vor.u32 1.1754944e-38, %v786
        %v788 = vsel %vm785, %v787, %v783
        %v789 = vmul.f32 1.0, %v788
        %v790 = vrcp.pop %v744
        %v791 = vmul.f32 %v744, %v790
        %v792 = vsub.f32 1.0, %v791
        %v793 = vmul.f32 %v790, %v792
        %v794 = vadd.f32 %v790, %v793
        %vm795 = vweird.f32 %v744
        %vm796 = vweird.f32 %v790
        %vm797 = vmor %vm795, %vm796
        %v798 = vsel %vm797, %v790, %v794
        %v799 = vand.u32 2147483647, %v744
        %vm800 = vcmp.eq.f32.partialorder %v799, 8.507059e+37
        %v801 = vand.u32 %v744, 2147483648
        %v802 = vor.u32 1.1754944e-38, %v801
        %v803 = vsel %vm800, %v802, %v798
        %v804 = vmul.f32 1.0, %v803
        %v805 = vmul.f32 %v725, %v759
        %v806 = vmul.f32 %v726, %v774
        %v807 = vmul.f32 %v727, %v789
        %v808 = vmul.f32 %v728, %v804
        %809 = vst [vmem:[#allocation2 + $0x40] sm:$0xff] %v805
        %810 = vst [vmem:[#allocation2 + $0x48] sm:$0xff] %v806
        %811 = vst [vmem:[#allocation2 + $0x50] sm:$0xff] %v807
        %812 = vst [vmem:[#allocation2 + $0x58] sm:$0xff] %v808
        %s813 = scalar_lea.vmem %s502, 64 [#allocation4]
        %v814 = vld [vmem:[%s813] sm:$0xff]
        %v815 = vld [vmem:[%s813 + $0x8] sm:$0xff]
        %v816 = vld [vmem:[%s813 + $0x10] sm:$0xff]
        %v817 = vld [vmem:[%s813 + $0x18] sm:$0xff]
        %v818 = vmul.f32 %v814, %v587
        %v819 = vmul.f32 %v815, %v592
        %v820 = vmul.f32 %v816, %v597
        %v821 = vmul.f32 %v817, %v602
        %v822 = vadd.f32 %v818, %v611
        %v823 = vadd.f32 %v819, %v616
        %v824 = vadd.f32 %v820, %v621
        %v825 = vadd.f32 %v821, %v626
        %v826 = vxor.u32 %v822, 2147483648
        %v827 = vxor.u32 %v823, 2147483648
        %v828 = vxor.u32 %v824, 2147483648
        %v829 = vxor.u32 %v825, 2147483648
        %v830 = vmul.f32 %v826, 1.442695
        %v831 = vpow.pop %v830
        %v832 = vmul.f32 %v827, 1.442695
        %v833 = vpow.pop %v832
        %v834 = vmul.f32 %v828, 1.442695
        %v835 = vpow.pop %v834
        %v836 = vmul.f32 %v829, 1.442695
        %v837 = vpow.pop %v836
        %v838 = vadd.f32 %v831, 1.0
        %v839 = vadd.f32 %v833, 1.0
        %v840 = vadd.f32 %v835, 1.0
        %v841 = vadd.f32 %v837, 1.0
        %v842 = vrcp.pop %v838
        %v843 = vmul.f32 %v838, %v842
        %v844 = vsub.f32 1.0, %v843
        %v845 = vmul.f32 %v842, %v844
        %v846 = vadd.f32 %v842, %v845
        %vm847 = vweird.f32 %v838
        %vm848 = vweird.f32 %v842
        %vm849 = vmor %vm847, %vm848
        %v850 = vsel %vm849, %v842, %v846
        %v851 = vand.u32 2147483647, %v838
        %vm852 = vcmp.eq.f32.partialorder %v851, 8.507059e+37
        %v853 = vand.u32 %v838, 2147483648
        %v854 = vor.u32 1.1754944e-38, %v853
        %v855 = vsel %vm852, %v854, %v850
        %v856 = vmul.f32 1.0, %v855
        %v857 = vrcp.pop %v839
        %v858 = vmul.f32 %v839, %v857
        %v859 = vsub.f32 1.0, %v858
        %v860 = vmul.f32 %v857, %v859
        %v861 = vadd.f32 %v857, %v860
        %vm862 = vweird.f32 %v839
        %vm863 = vweird.f32 %v857
        %vm864 = vmor %vm862, %vm863
        %v865 = vsel %vm864, %v857, %v861
        %v866 = vand.u32 2147483647, %v839
        %vm867 = vcmp.eq.f32.partialorder %v866, 8.507059e+37
        %v868 = vand.u32 %v839, 2147483648
        %v869 = vor.u32 1.1754944e-38, %v868
        %v870 = vsel %vm867, %v869, %v865
        %v871 = vmul.f32 1.0, %v870
        %v872 = vrcp.pop %v840
        %v873 = vmul.f32 %v840, %v872
        %v874 = vsub.f32 1.0, %v873
        %v875 = vmul.f32 %v872, %v874
        %v876 = vadd.f32 %v872, %v875
        %vm877 = vweird.f32 %v840
        %vm878 = vweird.f32 %v872
        %vm879 = vmor %vm877, %vm878
        %v880 = vsel %vm879, %v872, %v876
        %v881 = vand.u32 2147483647, %v840
        %vm882 = vcmp.eq.f32.partialorder %v881, 8.507059e+37
        %v883 = vand.u32 %v840, 2147483648
        %v884 = vor.u32 1.1754944e-38, %v883
        %v885 = vsel %vm882, %v884, %v880
        %v886 = vmul.f32 1.0, %v885
        %v887 = vrcp.pop %v841
        %v888 = vmul.f32 %v841, %v887
        %v889 = vsub.f32 1.0, %v888
        %v890 = vmul.f32 %v887, %v889
        %v891 = vadd.f32 %v887, %v890
        %vm892 = vweird.f32 %v841
        %vm893 = vweird.f32 %v887
        %vm894 = vmor %vm892, %vm893
        %v895 = vsel %vm894, %v887, %v891
        %v896 = vand.u32 2147483647, %v841
        %vm897 = vcmp.eq.f32.partialorder %v896, 8.507059e+37
        %v898 = vand.u32 %v841, 2147483648
        %v899 = vor.u32 1.1754944e-38, %v898
        %v900 = vsel %vm897, %v899, %v895
        %v901 = vmul.f32 1.0, %v900
        %v902 = vmul.f32 %v822, %v856
        %v903 = vmul.f32 %v823, %v871
        %v904 = vmul.f32 %v824, %v886
        %v905 = vmul.f32 %v825, %v901
        %906 = vst [vmem:[#allocation2 + $0x60] sm:$0xff] %v902
        %907 = vst [vmem:[#allocation2 + $0x68] sm:$0xff] %v903
        %908 = vst [vmem:[#allocation2 + $0x70] sm:$0xff] %v904
        %909 = vst [vmem:[#allocation2 + $0x78] sm:$0xff] %v905
        %s910 = scalar_lea.vmem %s502, 96 [#allocation4]
        %v911 = vld [vmem:[%s910] sm:$0xff]
        %v912 = vld [vmem:[%s910 + $0x8] sm:$0xff]
        %v913 = vld [vmem:[%s910 + $0x10] sm:$0xff]
        %v914 = vld [vmem:[%s910 + $0x18] sm:$0xff]
        %v915 = vmul.f32 %v911, %v587
        %v916 = vmul.f32 %v912, %v592
        %v917 = vmul.f32 %v913, %v597
        %v918 = vmul.f32 %v914, %v602
        %v919 = vadd.f32 %v915, %v611
        %v920 = vadd.f32 %v916, %v616
        %v921 = vadd.f32 %v917, %v621
        %v922 = vadd.f32 %v918, %v626
        %v923 = vxor.u32 %v919, 2147483648
        %v924 = vxor.u32 %v920, 2147483648
        %v925 = vxor.u32 %v921, 2147483648
        %v926 = vxor.u32 %v922, 2147483648
        %v927 = vmul.f32 %v923, 1.442695
        %v928 = vpow.pop %v927
        %v929 = vmul.f32 %v924, 1.442695
        %v930 = vpow.pop %v929
        %v931 = vmul.f32 %v925, 1.442695
        %v932 = vpow.pop %v931
        %v933 = vmul.f32 %v926, 1.442695
        %v934 = vpow.pop %v933
        %v935 = vadd.f32 %v928, 1.0
        %v936 = vadd.f32 %v930, 1.0
        %v937 = vadd.f32 %v932, 1.0
        %v938 = vadd.f32 %v934, 1.0
        %v939 = vrcp.pop %v935
        %v940 = vmul.f32 %v935, %v939
        %v941 = vsub.f32 1.0, %v940
        %v942 = vmul.f32 %v939, %v941
        %v943 = vadd.f32 %v939, %v942
        %vm944 = vweird.f32 %v935
        %vm945 = vweird.f32 %v939
        %vm946 = vmor %vm944, %vm945
        %v947 = vsel %vm946, %v939, %v943
        %v948 = vand.u32 2147483647, %v935
        %vm949 = vcmp.eq.f32.partialorder %v948, 8.507059e+37
        %v950 = vand.u32 %v935, 2147483648
        %v951 = vor.u32 1.1754944e-38, %v950
        %v952 = vsel %vm949, %v951, %v947
        %v953 = vmul.f32 1.0, %v952
        %v954 = vrcp.pop %v936
        %v955 = vmul.f32 %v936, %v954
        %v956 = vsub.f32 1.0, %v955
        %v957 = vmul.f32 %v954, %v956
        %v958 = vadd.f32 %v954, %v957
        %vm959 = vweird.f32 %v936
        %vm960 = vweird.f32 %v954
        %vm961 = vmor %vm959, %vm960
        %v962 = vsel %vm961, %v954, %v958
        %v963 = vand.u32 2147483647, %v936
        %vm964 = vcmp.eq.f32.partialorder %v963, 8.507059e+37
        %v965 = vand.u32 %v936, 2147483648
        %v966 = vor.u32 1.1754944e-38, %v965
        %v967 = vsel %vm964, %v966, %v962
        %v968 = vmul.f32 1.0, %v967
        %v969 = vrcp.pop %v937
        %v970 = vmul.f32 %v937, %v969
        %v971 = vsub.f32 1.0, %v970
        %v972 = vmul.f32 %v969, %v971
        %v973 = vadd.f32 %v969, %v972
        %vm974 = vweird.f32 %v937
        %vm975 = vweird.f32 %v969
        %vm976 = vmor %vm974, %vm975
        %v977 = vsel %vm976, %v969, %v973
        %v978 = vand.u32 2147483647, %v937
        %vm979 = vcmp.eq.f32.partialorder %v978, 8.507059e+37
        %v980 = vand.u32 %v937, 2147483648
        %v981 = vor.u32 1.1754944e-38, %v980
        %v982 = vsel %vm979, %v981, %v977
        %v983 = vmul.f32 1.0, %v982
        %v984 = vrcp.pop %v938
        %v985 = vmul.f32 %v938, %v984
        %v986 = vsub.f32 1.0, %v985
        %v987 = vmul.f32 %v984, %v986
        %v988 = vadd.f32 %v984, %v987
        %vm989 = vweird.f32 %v938
        %vm990 = vweird.f32 %v984
        %vm991 = vmor %vm989, %vm990
        %v992 = vsel %vm991, %v984, %v988
        %v993 = vand.u32 2147483647, %v938
        %vm994 = vcmp.eq.f32.partialorder %v993, 8.507059e+37
        %v995 = vand.u32 %v938, 2147483648
        %v996 = vor.u32 1.1754944e-38, %v995
        %v997 = vsel %vm994, %v996, %v992
        %v998 = vmul.f32 1.0, %v997
        %v999 = vmul.f32 %v919, %v953
        %v1000 = vmul.f32 %v920, %v968
        %v1001 = vmul.f32 %v921, %v983
        %v1002 = vmul.f32 %v922, %v998
        %1003 = vst [vmem:[#allocation2 + $0x80] sm:$0xff] %v999
        %1004 = vst [vmem:[#allocation2 + $0x88] sm:$0xff] %v1000
        %1005 = vst [vmem:[#allocation2 + $0x90] sm:$0xff] %v1001
        %1006 = vst [vmem:[#allocation2 + $0x98] sm:$0xff] %v1002
        %v1007 = vld [vmem:[%s6] sm:$0xff]
        %v1008 = vld [vmem:[%s6 + $0x8] sm:$0xff]
        %v1009 = vld [vmem:[%s6 + $0x10] sm:$0xff]
        %v1010 = vld [vmem:[%s6 + $0x18] sm:$0xff]
        %s1011 = sld [smem:[#allocation3]]
        %s1012 = smax.f32 %s1011, 0.0
        %s1013 = smin.f32 %s1012, 1.0
        %v1014 = vld [vmem:[#allocation2] sm:$0xff]
        %v1015 = vld [vmem:[#allocation2 + $0x8] sm:$0xff]
        %v1016 = vld [vmem:[#allocation2 + $0x10] sm:$0xff]
        %v1017 = vld [vmem:[#allocation2 + $0x18] sm:$0xff]
        %v1018 = vld [vmem:[#allocation2 + $0x20] sm:$0xff]
        %v1019 = vld [vmem:[#allocation2 + $0x28] sm:$0xff]
        %v1020 = vld [vmem:[#allocation2 + $0x30] sm:$0xff]
        %v1021 = vld [vmem:[#allocation2 + $0x38] sm:$0xff]
        %v1022 = vld [vmem:[#allocation2 + $0x40] sm:$0xff]
        %v1023 = vld [vmem:[#allocation2 + $0x48] sm:$0xff]
        %v1024 = vld [vmem:[#allocation2 + $0x50] sm:$0xff]
        %v1025 = vld [vmem:[#allocation2 + $0x58] sm:$0xff]
        %v1026 = vld [vmem:[%s5] sm:$0xff]
        %v1027 = vld [vmem:[%s5 + $0x8] sm:$0xff]
        %v1028 = vld [vmem:[%s5 + $0x10] sm:$0xff]
        %v1029 = vld [vmem:[%s5 + $0x18] sm:$0xff]
        %1031 = vset.pattern.permute.xlu0 0
        %1032 = vperm.xlu0 %1031, %v1007
        %v1033 = vpop.permute.xlu0 %1032
        %1036 = vset.pattern.permute.xlu0 0
        %1037 = vperm.xlu0 %1036, %v1008
        %v1038 = vpop.permute.xlu0 %1037
        %1041 = vset.pattern.permute.xlu0 0
        %1042 = vperm.xlu0 %1041, %v1009
        %v1043 = vpop.permute.xlu0 %1042
        %1046 = vset.pattern.permute.xlu0 0
        %1047 = vperm.xlu0 %1046, %v1010
        %v1048 = vpop.permute.xlu0 %1047
        %vm1050 = vcmask 785408
        %v1052 = vsel %vm1050, %v1026, 0
        %v1055 = vsel %vm1050, %v1027, 0
        %v1058 = vsel %vm1050, %v1028, 0
        %v1061 = vsel %vm1050, %v1029, 0
        %1063 = vmatpush.msra.mxu0 0.0
        %1064 = vmatpush.msra.mxu0 0.0
        %1065 = vmatpush.msra.mxu0 0.0
        %1066 = vmatpush.msra.mxu0 0.0
        %1067 = vmatpush.msra.mxu0 %v1025
        %1068 = vmatpush.msra.mxu0 %v1024
        %1069 = vmatpush.msra.mxu0 %v1023
        %1070 = vmatpush.msra.mxu0 %v1022
        %1071 = vmatpush.msra.mxu0 %v1021
        %1072 = vmatpush.msra.mxu0 %v1020
        %1073 = vmatpush.msra.mxu0 %v1019
        %1074 = vmatpush.msra.mxu0 %v1018
        %1075 = vmatpush.msra.mxu0 %v1017
        %1076 = vmatpush.msra.mxu0 %v1016
        %1077 = vmatpush.msra.mxu0 %v1015
        %1078 = vmatpush.msra.mxu0 %v1014
        %1079 = vmatmul.f32.gmra.mxu0 %v1052
        %v1080 = vpop.f32.mrf.mxu0
        %v1081 = vadd.f32 %v1033, %v1080
        %1082 = vmatmul.f32.gmra.mxu0 %v1055
        %v1083 = vpop.f32.mrf.mxu0
        %v1084 = vadd.f32 %v1038, %v1083
        %1085 = vmatmul.f32.gmra.mxu0 %v1058
        %v1086 = vpop.f32.mrf.mxu0
        %v1087 = vadd.f32 %v1043, %v1086
        %1088 = vmatmul.f32.gmra.mxu0 %v1061
        %v1089 = vpop.f32.mrf.mxu0
        %v1090 = vadd.f32 %v1048, %v1089
        %1091 = vdwg.mxu0
        %v1092 = vld [vmem:[%s509] sm:$0xff]
        %v1093 = vld [vmem:[%s509 + $0x8] sm:$0xff]
        %v1094 = vld [vmem:[%s509 + $0x10] sm:$0xff]
        %v1095 = vld [vmem:[%s509 + $0x18] sm:$0xff]
        %v1096 = vstv %s1013
        %v1097 = vmul.f32 %v1096, %v1092
        %v1098 = vmul.f32 %v1096, %v1093
        %v1099 = vmul.f32 %v1096, %v1094
        %v1100 = vmul.f32 %v1096, %v1095
        %s1101 = ssub.f32 1.0, %s1013
        %v1102 = vstv %s1101
        %v1103 = vmul.f32 %v1102, %v1081
        %v1104 = vmul.f32 %v1102, %v1084
        %v1105 = vmul.f32 %v1102, %v1087
        %v1106 = vmul.f32 %v1102, %v1090
        %v1107 = vadd.f32 %v1097, %v1103
        %v1108 = vadd.f32 %v1098, %v1104
        %v1109 = vadd.f32 %v1099, %v1105
        %v1110 = vadd.f32 %v1100, %v1106
        %1111 = vst [vmem:[%s550] sm:$0xff] %v1107
        %1112 = vst [vmem:[%s550 + $0x8] sm:$0xff] %v1108
        %1113 = vst [vmem:[%s550 + $0x10] sm:$0xff] %v1109
        %1114 = vst [vmem:[%s550 + $0x18] sm:$0xff] %v1110
        %v1115 = vld [vmem:[#allocation2 + $0x20] sm:$0xff]
        %v1116 = vld [vmem:[#allocation2 + $0x28] sm:$0xff]
        %v1117 = vld [vmem:[#allocation2 + $0x30] sm:$0xff]
        %v1118 = vld [vmem:[#allocation2 + $0x38] sm:$0xff]
        %v1119 = vld [vmem:[#allocation2 + $0x40] sm:$0xff]
        %v1120 = vld [vmem:[#allocation2 + $0x48] sm:$0xff]
        %v1121 = vld [vmem:[#allocation2 + $0x50] sm:$0xff]
        %v1122 = vld [vmem:[#allocation2 + $0x58] sm:$0xff]
        %v1123 = vld [vmem:[#allocation2 + $0x60] sm:$0xff]
        %v1124 = vld [vmem:[#allocation2 + $0x68] sm:$0xff]
        %v1125 = vld [vmem:[#allocation2 + $0x70] sm:$0xff]
        %v1126 = vld [vmem:[#allocation2 + $0x78] sm:$0xff]
        %v1127 = vld [vmem:[%s5] sm:$0xff]
        %v1128 = vld [vmem:[%s5 + $0x8] sm:$0xff]
        %v1129 = vld [vmem:[%s5 + $0x10] sm:$0xff]
        %v1130 = vld [vmem:[%s5 + $0x18] sm:$0xff]
        %v1132 = vsel %vm1050, %v1127, 0
        %v1135 = vsel %vm1050, %v1128, 0
        %v1138 = vsel %vm1050, %v1129, 0
        %v1141 = vsel %vm1050, %v1130, 0
        %1143 = vmatpush.msra.mxu0 0.0
        %1144 = vmatpush.msra.mxu0 0.0
        %1145 = vmatpush.msra.mxu0 0.0
        %1146 = vmatpush.msra.mxu0 0.0
        %1147 = vmatpush.msra.mxu0 %v1126
        %1148 = vmatpush.msra.mxu0 %v1125
        %1149 = vmatpush.msra.mxu0 %v1124
        %1150 = vmatpush.msra.mxu0 %v1123
        %1151 = vmatpush.msra.mxu0 %v1122
        %1152 = vmatpush.msra.mxu0 %v1121
        %1153 = vmatpush.msra.mxu0 %v1120
        %1154 = vmatpush.msra.mxu0 %v1119
        %1155 = vmatpush.msra.mxu0 %v1118
        %1156 = vmatpush.msra.mxu0 %v1117
        %1157 = vmatpush.msra.mxu0 %v1116
        %1158 = vmatpush.msra.mxu0 %v1115
        %1159 = vmatmul.f32.gmra.mxu0 %v1132
        %v1160 = vpop.f32.mrf.mxu0
        %v1161 = vadd.f32 %v1033, %v1160
        %1162 = vmatmul.f32.gmra.mxu0 %v1135
        %v1163 = vpop.f32.mrf.mxu0
        %v1164 = vadd.f32 %v1038, %v1163
        %1165 = vmatmul.f32.gmra.mxu0 %v1138
        %v1166 = vpop.f32.mrf.mxu0
        %v1167 = vadd.f32 %v1043, %v1166
        %1168 = vmatmul.f32.gmra.mxu0 %v1141
        %v1169 = vpop.f32.mrf.mxu0
        %v1170 = vadd.f32 %v1048, %v1169
        %1171 = vdwg.mxu0
        %s1172 = scalar_lea.vmem %s509, 32 [#allocation5]
        %v1173 = vld [vmem:[%s1172] sm:$0xff]
        %v1174 = vld [vmem:[%s1172 + $0x8] sm:$0xff]
        %v1175 = vld [vmem:[%s1172 + $0x10] sm:$0xff]
        %v1176 = vld [vmem:[%s1172 + $0x18] sm:$0xff]
        %v1177 = vmul.f32 %v1096, %v1173
        %v1178 = vmul.f32 %v1096, %v1174
        %v1179 = vmul.f32 %v1096, %v1175
        %v1180 = vmul.f32 %v1096, %v1176
        %v1181 = vmul.f32 %v1102, %v1161
        %v1182 = vmul.f32 %v1102, %v1164
        %v1183 = vmul.f32 %v1102, %v1167
        %v1184 = vmul.f32 %v1102, %v1170
        %v1185 = vadd.f32 %v1177, %v1181
        %v1186 = vadd.f32 %v1178, %v1182
        %v1187 = vadd.f32 %v1179, %v1183
        %v1188 = vadd.f32 %v1180, %v1184
        %s1189 = scalar_lea.vmem %s550, 32 [#allocation6]
        %1190 = vst [vmem:[%s1189] sm:$0xff] %v1185
        %1191 = vst [vmem:[%s1189 + $0x8] sm:$0xff] %v1186
        %1192 = vst [vmem:[%s1189 + $0x10] sm:$0xff] %v1187
        %1193 = vst [vmem:[%s1189 + $0x18] sm:$0xff] %v1188
        %v1194 = vld [vmem:[#allocation2 + $0x40] sm:$0xff]
        %v1195 = vld [vmem:[#allocation2 + $0x48] sm:$0xff]
        %v1196 = vld [vmem:[#allocation2 + $0x50] sm:$0xff]
        %v1197 = vld [vmem:[#allocation2 + $0x58] sm:$0xff]
        %v1198 = vld [vmem:[#allocation2 + $0x60] sm:$0xff]
        %v1199 = vld [vmem:[#allocation2 + $0x68] sm:$0xff]
        %v1200 = vld [vmem:[#allocation2 + $0x70] sm:$0xff]
        %v1201 = vld [vmem:[#allocation2 + $0x78] sm:$0xff]
        %v1202 = vld [vmem:[#allocation2 + $0x80] sm:$0xff]
        %v1203 = vld [vmem:[#allocation2 + $0x88] sm:$0xff]
        %v1204 = vld [vmem:[#allocation2 + $0x90] sm:$0xff]
        %v1205 = vld [vmem:[#allocation2 + $0x98] sm:$0xff]
        %v1206 = vld [vmem:[%s5] sm:$0xff]
        %v1207 = vld [vmem:[%s5 + $0x8] sm:$0xff]
        %v1208 = vld [vmem:[%s5 + $0x10] sm:$0xff]
        %v1209 = vld [vmem:[%s5 + $0x18] sm:$0xff]
        %v1211 = vsel %vm1050, %v1206, 0
        %v1214 = vsel %vm1050, %v1207, 0
        %v1217 = vsel %vm1050, %v1208, 0
        %v1220 = vsel %vm1050, %v1209, 0
        %1222 = vmatpush.msra.mxu0 0.0
        %1223 = vmatpush.msra.mxu0 0.0
        %1224 = vmatpush.msra.mxu0 0.0
        %1225 = vmatpush.msra.mxu0 0.0
        %1226 = vmatpush.msra.mxu0 %v1205
        %1227 = vmatpush.msra.mxu0 %v1204
        %1228 = vmatpush.msra.mxu0 %v1203
        %1229 = vmatpush.msra.mxu0 %v1202
        %1230 = vmatpush.msra.mxu0 %v1201
        %1231 = vmatpush.msra.mxu0 %v1200
        %1232 = vmatpush.msra.mxu0 %v1199
        %1233 = vmatpush.msra.mxu0 %v1198
        %1234 = vmatpush.msra.mxu0 %v1197
        %1235 = vmatpush.msra.mxu0 %v1196
        %1236 = vmatpush.msra.mxu0 %v1195
        %1237 = vmatpush.msra.mxu0 %v1194
        %1238 = vmatmul.f32.gmra.mxu0 %v1211
        %v1239 = vpop.f32.mrf.mxu0
        %v1240 = vadd.f32 %v1033, %v1239
        %1241 = vmatmul.f32.gmra.mxu0 %v1214
        %v1242 = vpop.f32.mrf.mxu0
        %v1243 = vadd.f32 %v1038, %v1242
        %1244 = vmatmul.f32.gmra.mxu0 %v1217
        %v1245 = vpop.f32.mrf.mxu0
        %v1246 = vadd.f32 %v1043, %v1245
        %1247 = vmatmul.f32.gmra.mxu0 %v1220
        %v1248 = vpop.f32.mrf.mxu0
        %v1249 = vadd.f32 %v1048, %v1248
        %1250 = vdwg.mxu0
        %s1251 = scalar_lea.vmem %s509, 64 [#allocation5]
        %v1252 = vld [vmem:[%s1251] sm:$0xff]
        %v1253 = vld [vmem:[%s1251 + $0x8] sm:$0xff]
        %v1254 = vld [vmem:[%s1251 + $0x10] sm:$0xff]
        %v1255 = vld [vmem:[%s1251 + $0x18] sm:$0xff]
        %v1256 = vmul.f32 %v1096, %v1252
        %v1257 = vmul.f32 %v1096, %v1253
        %v1258 = vmul.f32 %v1096, %v1254
        %v1259 = vmul.f32 %v1096, %v1255
        %v1260 = vmul.f32 %v1102, %v1240
        %v1261 = vmul.f32 %v1102, %v1243
        %v1262 = vmul.f32 %v1102, %v1246
        %v1263 = vmul.f32 %v1102, %v1249
        %v1264 = vadd.f32 %v1256, %v1260
        %v1265 = vadd.f32 %v1257, %v1261
        %v1266 = vadd.f32 %v1258, %v1262
        %v1267 = vadd.f32 %v1259, %v1263
        %s1268 = scalar_lea.vmem %s550, 64 [#allocation6]
        %1269 = vst [vmem:[%s1268] sm:$0xff] %v1264
        %1270 = vst [vmem:[%s1268 + $0x8] sm:$0xff] %v1265
        %1271 = vst [vmem:[%s1268 + $0x10] sm:$0xff] %v1266
        %1272 = vst [vmem:[%s1268 + $0x18] sm:$0xff] %v1267
        %v1273 = vld [vmem:[#allocation2 + $0x60] sm:$0xff]
        %v1274 = vld [vmem:[#allocation2 + $0x68] sm:$0xff]
        %v1275 = vld [vmem:[#allocation2 + $0x70] sm:$0xff]
        %v1276 = vld [vmem:[#allocation2 + $0x78] sm:$0xff]
        %v1277 = vld [vmem:[#allocation2 + $0x80] sm:$0xff]
        %v1278 = vld [vmem:[#allocation2 + $0x88] sm:$0xff]
        %v1279 = vld [vmem:[#allocation2 + $0x90] sm:$0xff]
        %v1280 = vld [vmem:[#allocation2 + $0x98] sm:$0xff]
        %v1281 = vld [vmem:[#allocation2 + $0xa0] sm:$0xff]
        %v1282 = vld [vmem:[#allocation2 + $0xa8] sm:$0xff]
        %v1283 = vld [vmem:[#allocation2 + $0xb0] sm:$0xff]
        %v1284 = vld [vmem:[#allocation2 + $0xb8] sm:$0xff]
        %v1285 = vld [vmem:[%s5] sm:$0xff]
        %v1286 = vld [vmem:[%s5 + $0x8] sm:$0xff]
        %v1287 = vld [vmem:[%s5 + $0x10] sm:$0xff]
        %v1288 = vld [vmem:[%s5 + $0x18] sm:$0xff]
        %v1290 = vsel %vm1050, %v1285, 0
        %v1293 = vsel %vm1050, %v1286, 0
        %v1296 = vsel %vm1050, %v1287, 0
        %v1299 = vsel %vm1050, %v1288, 0
        %1301 = vmatpush.msra.mxu0 0.0
        %1302 = vmatpush.msra.mxu0 0.0
        %1303 = vmatpush.msra.mxu0 0.0
        %1304 = vmatpush.msra.mxu0 0.0
        %1305 = vmatpush.msra.mxu0 %v1284
        %1306 = vmatpush.msra.mxu0 %v1283
        %1307 = vmatpush.msra.mxu0 %v1282
        %1308 = vmatpush.msra.mxu0 %v1281
        %1309 = vmatpush.msra.mxu0 %v1280
        %1310 = vmatpush.msra.mxu0 %v1279
        %1311 = vmatpush.msra.mxu0 %v1278
        %1312 = vmatpush.msra.mxu0 %v1277
        %1313 = vmatpush.msra.mxu0 %v1276
        %1314 = vmatpush.msra.mxu0 %v1275
        %1315 = vmatpush.msra.mxu0 %v1274
        %1316 = vmatpush.msra.mxu0 %v1273
        %1317 = vmatmul.f32.gmra.mxu0 %v1290
        %v1318 = vpop.f32.mrf.mxu0
        %v1319 = vadd.f32 %v1033, %v1318
        %1320 = vmatmul.f32.gmra.mxu0 %v1293
        %v1321 = vpop.f32.mrf.mxu0
        %v1322 = vadd.f32 %v1038, %v1321
        %1323 = vmatmul.f32.gmra.mxu0 %v1296
        %v1324 = vpop.f32.mrf.mxu0
        %v1325 = vadd.f32 %v1043, %v1324
        %1326 = vmatmul.f32.gmra.mxu0 %v1299
        %v1327 = vpop.f32.mrf.mxu0
        %v1328 = vadd.f32 %v1048, %v1327
        %1329 = vdwg.mxu0
        %s1330 = scalar_lea.vmem %s509, 96 [#allocation5]
        %v1331 = vld [vmem:[%s1330] sm:$0xff]
        %v1332 = vld [vmem:[%s1330 + $0x8] sm:$0xff]
        %v1333 = vld [vmem:[%s1330 + $0x10] sm:$0xff]
        %v1334 = vld [vmem:[%s1330 + $0x18] sm:$0xff]
        %v1335 = vmul.f32 %v1096, %v1331
        %v1336 = vmul.f32 %v1096, %v1332
        %v1337 = vmul.f32 %v1096, %v1333
        %v1338 = vmul.f32 %v1096, %v1334
        %v1339 = vmul.f32 %v1102, %v1319
        %v1340 = vmul.f32 %v1102, %v1322
        %v1341 = vmul.f32 %v1102, %v1325
        %v1342 = vmul.f32 %v1102, %v1328
        %v1343 = vadd.f32 %v1335, %v1339
        %v1344 = vadd.f32 %v1336, %v1340
        %v1345 = vadd.f32 %v1337, %v1341
        %v1346 = vadd.f32 %v1338, %v1342
        %s1347 = scalar_lea.vmem %s550, 96 [#allocation6]
        %1348 = vst [vmem:[%s1347] sm:$0xff] %v1343
        %1349 = vst [vmem:[%s1347 + $0x8] sm:$0xff] %v1344
        %1350 = vst [vmem:[%s1347 + $0x10] sm:$0xff] %v1345
        %1351 = vst [vmem:[%s1347 + $0x18] sm:$0xff] %v1346
        %s1352 = sand.u32 %s225, 1
        %s1353 = sand.u32 %s225, 1
        %s1354 = smul.addr %s1353, 128
        %s1355 = scalar_lea.vmem [#allocation6], %s1354
        // Predicated region
        $region125: #{conv3d_layer_pallas.5} parent=115 // pred_check
          %p1356 = pneg %p235
        $region126: #{conv3d_layer_pallas.5} parent=115 // pred_check_branch
          %1358 = sbr.rel (%p1356) target = $region128
        $region127: #{conv3d_layer_pallas.5} parent=115 // pred_region
          %s1359 = sadd.s32 %s25, %s26
          %s1360 = smul.addr %s24, 32
          %s1361 = sadd.s32 %s1359, %s1360
          %s1362 = smul.addr %s1361, 8
          %s1363 = scalar_lea.vmem %s7, %s1362
          // Predicated region
          $region129: #{conv3d_layer_pallas.5} parent=127 // pred_check
            _
          $region130: #{conv3d_layer_pallas.5} parent=127 // pred_check_branch
            %1365 = sbr.rel (0) target = $region132
          $region131: #{conv3d_layer_pallas.5} parent=127 // pred_region
            // Predicated region
            $region133: #{conv3d_layer_pallas.5} parent=131 // pred_check
              _
            $region134: #{conv3d_layer_pallas.5} parent=131 // pred_check_branch
              %1367 = sbr.rel (0) target = $region136
            $region135: #{conv3d_layer_pallas.5} parent=131 // pred_region
              // Predicated region
              $region148: #{conv3d_layer_pallas.5} parent=135 // pred_check
                _
              $region149: #{conv3d_layer_pallas.5} parent=135 // pred_check_branch
                %1413 = sbr.rel (0) target = $region151
              $region150: #{conv3d_layer_pallas.5} parent=135 // pred_region
                loop: start=0, step=1, limit=1
                $region152: #{conv3d_layer_pallas.5} parent=150 // loop_pre_header
                  _
                $region153: #{conv3d_layer_pallas.5} parent=150 // loop_header
                  %s1415 = sphi 0, %s1419
                  %p1416 = scmp.ge.s32.totalorder %s1415, 1
                  %s1420 = sphi %s1355, %s1355
                  %s1421 = sphi %s1363, %s1363
                $region154: #{conv3d_layer_pallas.5} parent=150 // loop_header_branch
                  %1418 = sbr.rel (%p1416) target = $region158
                $region155: #{conv3d_layer_pallas.5} parent=150 // loop_body
                  %v1422 = vld [vmem:[%s1420] sm:$0xff]
                  %1423 = vst [vmem:[%s1421] sm:$0xff] %v1422
                  %v1424 = vld [vmem:[%s1420 + $0x8] sm:$0xff]
                  %1425 = vst [vmem:[%s1421 + $0x10] sm:$0xff] %v1424
                  %v1426 = vld [vmem:[%s1420 + $0x10] sm:$0xff]
                  %1427 = vst [vmem:[%s1421 + $0x20] sm:$0xff] %v1426
                  %v1428 = vld [vmem:[%s1420 + $0x18] sm:$0xff]
                  %1429 = vst [vmem:[%s1421 + $0x30] sm:$0xff] %v1428
                  %v1430 = vld [vmem:[%s1420 + $0x20] sm:$0xff]
                  %1431 = vst [vmem:[%s1421 + $0x40] sm:$0xff] %v1430
                  %v1432 = vld [vmem:[%s1420 + $0x28] sm:$0xff]
                  %1433 = vst [vmem:[%s1421 + $0x50] sm:$0xff] %v1432
                  %v1434 = vld [vmem:[%s1420 + $0x30] sm:$0xff]
                  %1435 = vst [vmem:[%s1421 + $0x60] sm:$0xff] %v1434
                  %v1436 = vld [vmem:[%s1420 + $0x38] sm:$0xff]
                  %1437 = vst [vmem:[%s1421 + $0x70] sm:$0xff] %v1436
                  %v1438 = vld [vmem:[%s1420 + $0x40] sm:$0xff]
                  %1439 = vst [vmem:[%s1421 + $0x80] sm:$0xff] %v1438
                  %v1440 = vld [vmem:[%s1420 + $0x48] sm:$0xff]
                  %1441 = vst [vmem:[%s1421 + $0x90] sm:$0xff] %v1440
                  %v1442 = vld [vmem:[%s1420 + $0x50] sm:$0xff]
                  %1443 = vst [vmem:[%s1421 + $0xa0] sm:$0xff] %v1442
                  %v1444 = vld [vmem:[%s1420 + $0x58] sm:$0xff]
                  %1445 = vst [vmem:[%s1421 + $0xb0] sm:$0xff] %v1444
                  %v1446 = vld [vmem:[%s1420 + $0x60] sm:$0xff]
                  %1447 = vst [vmem:[%s1421 + $0xc0] sm:$0xff] %v1446
                  %v1448 = vld [vmem:[%s1420 + $0x68] sm:$0xff]
                  %1449 = vst [vmem:[%s1421 + $0xd0] sm:$0xff] %v1448
                  %v1450 = vld [vmem:[%s1420 + $0x70] sm:$0xff]
                  %1451 = vst [vmem:[%s1421 + $0xe0] sm:$0xff] %v1450
                  %v1452 = vld [vmem:[%s1420 + $0x78] sm:$0xff]
                  %1453 = vst [vmem:[%s1421 + $0xf0] sm:$0xff] %v1452
                $region156: #{conv3d_layer_pallas.5} parent=150 // loop_footer
                  %s1419 = sadd.s32 1, %s1415
                $region157: #{conv3d_layer_pallas.5} parent=150 // loop_footer_branch
                  %1414 = sbr.rel target = $region153
                $region158: #{conv3d_layer_pallas.5} parent=150 // loop_exit
                  _
              $region151: #{conv3d_layer_pallas.5} parent=135 // pred_fallthru
                _
              // Predicated region
              $region159: #{conv3d_layer_pallas.5} parent=135 // pred_check
                _
              $region160: #{conv3d_layer_pallas.5} parent=135 // pred_check_branch
                %1455 = sbr.rel target = $region162
              $region161: #{conv3d_layer_pallas.5} parent=135 // pred_region
                _
              $region162: #{conv3d_layer_pallas.5} parent=135 // pred_fallthru
                _
            $region136: #{conv3d_layer_pallas.5} parent=131 // pred_fallthru
              _
            // Predicated region
            $region137: #{conv3d_layer_pallas.5} parent=131 // pred_check
              _
            $region138: #{conv3d_layer_pallas.5} parent=131 // pred_check_branch
              %1369 = sbr.rel target = $region140
            $region139: #{conv3d_layer_pallas.5} parent=131 // pred_region
              %s1371 = ssub.s32 256, 1
              loop: start=0, step=1, limit=1
              $region141: #{conv3d_layer_pallas.5} parent=139 // loop_pre_header
                _
              $region142: #{conv3d_layer_pallas.5} parent=139 // loop_header
                %s1373 = sphi 0, %s1377
                %p1374 = scmp.ge.s32.totalorder %s1373, 1
                %s1378 = sphi %s1355, %s1355
                %s1379 = sphi %s1363, %s1363
              $region143: #{conv3d_layer_pallas.5} parent=139 // loop_header_branch
                %1376 = sbr.rel (%p1374) target = $region147
              $region144: #{conv3d_layer_pallas.5} parent=139 // loop_body
                %v1380 = vld [vmem:[%s1378] sm:%s1371]
                %1381 = vst [vmem:[%s1379] sm:%s1371] %v1380
                %v1382 = vld [vmem:[%s1378 + $0x8] sm:%s1371]
                %1383 = vst [vmem:[%s1379 + $0x10] sm:%s1371] %v1382
                %v1384 = vld [vmem:[%s1378 + $0x10] sm:%s1371]
                %1385 = vst [vmem:[%s1379 + $0x20] sm:%s1371] %v1384
                %v1386 = vld [vmem:[%s1378 + $0x18] sm:%s1371]
                %1387 = vst [vmem:[%s1379 + $0x30] sm:%s1371] %v1386
                %v1388 = vld [vmem:[%s1378 + $0x20] sm:%s1371]
                %1389 = vst [vmem:[%s1379 + $0x40] sm:%s1371] %v1388
                %v1390 = vld [vmem:[%s1378 + $0x28] sm:%s1371]
                %1391 = vst [vmem:[%s1379 + $0x50] sm:%s1371] %v1390
                %v1392 = vld [vmem:[%s1378 + $0x30] sm:%s1371]
                %1393 = vst [vmem:[%s1379 + $0x60] sm:%s1371] %v1392
                %v1394 = vld [vmem:[%s1378 + $0x38] sm:%s1371]
                %1395 = vst [vmem:[%s1379 + $0x70] sm:%s1371] %v1394
                %v1396 = vld [vmem:[%s1378 + $0x40] sm:%s1371]
                %1397 = vst [vmem:[%s1379 + $0x80] sm:%s1371] %v1396
                %v1398 = vld [vmem:[%s1378 + $0x48] sm:%s1371]
                %1399 = vst [vmem:[%s1379 + $0x90] sm:%s1371] %v1398
                %v1400 = vld [vmem:[%s1378 + $0x50] sm:%s1371]
                %1401 = vst [vmem:[%s1379 + $0xa0] sm:%s1371] %v1400
                %v1402 = vld [vmem:[%s1378 + $0x58] sm:%s1371]
                %1403 = vst [vmem:[%s1379 + $0xb0] sm:%s1371] %v1402
                %v1404 = vld [vmem:[%s1378 + $0x60] sm:%s1371]
                %1405 = vst [vmem:[%s1379 + $0xc0] sm:%s1371] %v1404
                %v1406 = vld [vmem:[%s1378 + $0x68] sm:%s1371]
                %1407 = vst [vmem:[%s1379 + $0xd0] sm:%s1371] %v1406
                %v1408 = vld [vmem:[%s1378 + $0x70] sm:%s1371]
                %1409 = vst [vmem:[%s1379 + $0xe0] sm:%s1371] %v1408
                %v1410 = vld [vmem:[%s1378 + $0x78] sm:%s1371]
                %1411 = vst [vmem:[%s1379 + $0xf0] sm:%s1371] %v1410
              $region145: #{conv3d_layer_pallas.5} parent=139 // loop_footer
                %s1377 = sadd.s32 1, %s1373
              $region146: #{conv3d_layer_pallas.5} parent=139 // loop_footer_branch
                %1372 = sbr.rel target = $region142
              $region147: #{conv3d_layer_pallas.5} parent=139 // loop_exit
                _
            $region140: #{conv3d_layer_pallas.5} parent=131 // pred_fallthru
              _
          $region132: #{conv3d_layer_pallas.5} parent=127 // pred_fallthru
            _
          %1456 = vnop
        $region128: #{conv3d_layer_pallas.5} parent=115 // pred_fallthru
          _
      $region116: #{conv3d_layer_pallas.5} parent=5 // pred_fallthru
        _
      %p1457 = scmp.le.s32.totalorder 2, %s14
      // Predicated region
      $region163: #{conv3d_layer_pallas.5} parent=5 // pred_check
        %p1458 = pneg %p1457
      $region164: #{conv3d_layer_pallas.5} parent=5 // pred_check_branch
        %1460 = sbr.rel (%p1458) target = $region166
      $region165: #{conv3d_layer_pallas.5} parent=5 // pred_region
        %s1461 = ssub.s32 %s14, 2
        // Predicated region
        $region167: #{conv3d_layer_pallas.5} parent=165 // pred_check
          %p1462 = pneg %p241
        $region168: #{conv3d_layer_pallas.5} parent=165 // pred_check_branch
          %1464 = sbr.rel (%p1462) target = $region170
        $region169: #{conv3d_layer_pallas.5} parent=165 // pred_region
          %s1465 = sand.u32 %s226, 1
          %s1466 = sand.u32 %s226, 1
          %s1467 = smul.addr %s1466, 128
          %s1468 = scalar_lea.vmem [#allocation6], %s1467
        $region170: #{conv3d_layer_pallas.5} parent=165 // pred_fallthru
          _
      $region166: #{conv3d_layer_pallas.5} parent=5 // pred_fallthru
        _
    $region6: #{conv3d_layer_pallas.5} parent=1 // loop_footer
      %s18 = sadd.s32 1, %s14
    $region7: #{conv3d_layer_pallas.5} parent=1 // loop_footer_branch
      %13 = sbr.rel target = $region3
    $region8: #{conv3d_layer_pallas.5} parent=1 // loop_exit
      _

// kernel: conv3d_layer_pallas.4
$region0: #{conv3d_layer_pallas.4}
  #allocation0 [shape = 'u32[]', space=smem, size = 0x4, offset = 0x4, fixed_abs, tag = 'smem constant byte address 0x4 - core index']
  #allocation1 [shape = 'u32[72,128]{1,0:T(1,128)}', space=vmem, size = 0x9000, scoped, tag = 'internal scratch']
  #allocation2 [shape = 'f32[192,128]{1,0:T(8,128)}', space=vmem, size = 0x18000, scoped, tag = 'scratch operand']
  %s0 = inlined_call_operand.vmem [shape: f32[2,32,1], index: 0, kind: input, shape index: {}]
  %s1 = inlined_call_operand.vmem [shape: f32[2,32,1], index: 1, kind: input, shape index: {}]
  %s2 = inlined_call_operand.vmem [shape: f32[2,4,32,256], index: 2, kind: input, shape index: {}]
  %s3 = inlined_call_operand.vmem [shape: f32[32,96], index: 3, kind: input, shape index: {}]
  %s4 = inlined_call_operand.vmem [shape: f32[32,1], index: 4, kind: input, shape index: {}]
  %s5 = inlined_call_operand.vmem [shape: f32[2,4,32,256], index: 5, kind: output, shape index: {0}]
  %s6 = inlined_call_operand.vmem [shape: f32[2,2,32,1], index: 6, kind: output, shape index: {1}]
  %s7 = inlined_call_operand.vmem [shape: f32[2,2,32,1], index: 7, kind: output, shape index: {2}]
  %8 = xla_tuple %s5, %s6, %s7
  %s9 = sld [smem:[#allocation0]]
  $region145: #{conv3d_layer_pallas.4} parent=0
    _
  %s11 = ssub.s32 1, %s9
  %s12 = scalar_select 0, %s11, %s9
  $region1: #{conv3d_layer_pallas.4} parent=0
    #allocation3 [shape = 'u8[131072]{0}', space=vmem, size = 0x20000, scoped, tag = 'input window, operand 2']
    #allocation4 [shape = 'u8[131072]{0}', space=vmem, size = 0x20000, scoped, tag = 'output window, operand 0']
    loop: start=0, step=1, limit=6
    $region2: #{conv3d_layer_pallas.4} parent=1 // loop_pre_header
      _
    $region3: #{conv3d_layer_pallas.4} parent=1 // loop_header
      %s14 = sphi 0, %s18
      %p15 = scmp.ge.s32.totalorder %s14, 6
      %s21 = sphi 0, %s40
      %s22 = sphi 0, %s36
      %s23 = sphi 0, %s32
      %s24 = sphi 0, %s21
      %s25 = sphi 0, %s22
      %s26 = sphi 0, %s23
      %s27 = sphi 0, %s24
      %s28 = sphi 0, %s25
      %s29 = sphi 0, %s26
      %s43 = sphi 0, %s45
      %s46 = sphi 0, %s43
      %s47 = sphi 0, %s46
      %s63 = sphi 0, %s47
      %s69 = sphi 0, %s71
      %s72 = sphi 0, %s69
      %s73 = sphi 0, %s72
      %s89 = sphi 0, %s73
      %s99 = sphi 0, %s101
      %s102 = sphi 0, %s99
      %s103 = sphi 0, %s102
      %s119 = sphi 0, %s103
      %s123 = sphi 0, %s123
      %s125 = sphi 0, %s123
      %s126 = sphi 0, %s125
      %s140 = sphi 0, %s126
      %s144 = sphi 0, %s144
      %s146 = sphi 0, %s144
      %s147 = sphi 0, %s146
      %s161 = sphi 0, %s147
      %s171 = sphi 0, %s173
      %s174 = sphi 0, %s171
      %s175 = sphi 0, %s174
      %s191 = sphi 0, %s175
      %s199 = sphi 0, %s201
      %s202 = sphi 0, %s199
      %s203 = sphi 0, %s202
      %s219 = sphi 0, %s203
      %s227 = sphi 0, %s229
      %s230 = sphi 0, %s227
      %s231 = sphi 0, %s230
      %s247 = sphi 0, %s231
    $region4: #{conv3d_layer_pallas.4} parent=1 // loop_header_branch
      %17 = sbr.rel (%p15) target = $region8
    $region5: #{conv3d_layer_pallas.4} parent=1 // loop_body
      %s19 = ssub.s32 %s14, 1
      %s20 = ssub.s32 %s14, 2
      %s30 = sadd.s32 1, %s23
      %p31 = scmp.ge.s32.totalorder %s30, 1
      %s32 = scalar_select %p31, 0, %s30
      %s33 = sadd.s32 1, %s22
      %s34 = scalar_select %p31, %s33, %s22
      %p35 = scmp.ge.s32.totalorder %s34, 2
      %s36 = scalar_select %p35, 0, %s34
      %s37 = sadd.s32 1, %s21
      %s38 = scalar_select %p35, %s37, %s21
      %p39 = scmp.ge.s32.totalorder %s38, 2
      %s40 = scalar_select %p39, 0, %s38
      %s41 = ssub.s32 %s21, %s40
      %p42 = scmp.eq.s32.totalorder %s41, 0
      %s44 = sadd.s32 %s43, 1
      %s45 = scalar_select %p42, %s43, %s44
      %p48 = pneg %p42
      %p49 = scmp.eq.s32.totalorder %s14, 3
      %p50 = por %p48, %p49
      %p51 = scmp.ne.s32.totalorder %s43, %s46
      %p52 = scmp.eq.s32.totalorder %s14, 0
      %p53 = por %p51, %p52
      %p54 = scmp.ne.s32.totalorder %s43, %s46
      %p55 = scmp.eq.s32.totalorder %s19, 3
      %p56 = por %p54, %p55
      %p57 = scmp.ne.s32.totalorder %s46, %s47
      %p58 = scmp.eq.s32.totalorder %s19, 0
      %p59 = por %p57, %p58
      %p60 = scmp.ne.s32.totalorder %s46, %s47
      %p61 = scmp.eq.s32.totalorder %s20, 3
      %p62 = por %p60, %p61
      %p64 = scmp.ne.s32.totalorder %s47, %s63
      %p65 = scmp.eq.s32.totalorder %s20, 0
      %p66 = por %p64, %p65
      %s67 = ssub.s32 %s21, %s40
      %p68 = scmp.eq.s32.totalorder %s67, 0
      %s70 = sadd.s32 %s69, 1
      %s71 = scalar_select %p68, %s69, %s70
      %p74 = pneg %p68
      %p75 = scmp.eq.s32.totalorder %s14, 3
      %p76 = por %p74, %p75
      %p77 = scmp.ne.s32.totalorder %s69, %s72
      %p78 = scmp.eq.s32.totalorder %s14, 0
      %p79 = por %p77, %p78
      %p80 = scmp.ne.s32.totalorder %s69, %s72
      %p81 = scmp.eq.s32.totalorder %s19, 3
      %p82 = por %p80, %p81
      %p83 = scmp.ne.s32.totalorder %s72, %s73
      %p84 = scmp.eq.s32.totalorder %s19, 0
      %p85 = por %p83, %p84
      %p86 = scmp.ne.s32.totalorder %s72, %s73
      %p87 = scmp.eq.s32.totalorder %s20, 3
      %p88 = por %p86, %p87
      %p90 = scmp.ne.s32.totalorder %s73, %s89
      %p91 = scmp.eq.s32.totalorder %s20, 0
      %p92 = por %p90, %p91
      %s93 = sadd.s32 %s22, %s23
      %s94 = sadd.s32 %s36, %s32
      %s95 = ssub.s32 %s21, %s40
      %s96 = ssub.s32 %s93, %s94
      %s97 = sor.u32 %s95, %s96
      %p98 = scmp.eq.s32.totalorder %s97, 0
      %s100 = sadd.s32 %s99, 1
      %s101 = scalar_select %p98, %s99, %s100
      %p104 = pneg %p98
      %p105 = scmp.eq.s32.totalorder %s14, 3
      %p106 = por %p104, %p105
      %p107 = scmp.ne.s32.totalorder %s99, %s102
      %p108 = scmp.eq.s32.totalorder %s14, 0
      %p109 = por %p107, %p108
      %p110 = scmp.ne.s32.totalorder %s99, %s102
      %p111 = scmp.eq.s32.totalorder %s19, 3
      %p112 = por %p110, %p111
      %p113 = scmp.ne.s32.totalorder %s102, %s103
      %p114 = scmp.eq.s32.totalorder %s19, 0
      %p115 = por %p113, %p114
      %p116 = scmp.ne.s32.totalorder %s102, %s103
      %p117 = scmp.eq.s32.totalorder %s20, 3
      %p118 = por %p116, %p117
      %p120 = scmp.ne.s32.totalorder %s103, %s119
      %p121 = scmp.eq.s32.totalorder %s20, 0
      %p122 = por %p120, %p121
      %s124 = sadd.s32 %s123, 1
      %p127 = scmp.eq.s32.totalorder %s14, 3
      %p128 = scmp.ne.s32.totalorder %s123, %s125
      %p129 = scmp.eq.s32.totalorder %s14, 0
      %p130 = por %p128, %p129
      %p131 = scmp.ne.s32.totalorder %s123, %s125
      %p132 = scmp.eq.s32.totalorder %s19, 3
      %p133 = por %p131, %p132
      %p134 = scmp.ne.s32.totalorder %s125, %s126
      %p135 = scmp.eq.s32.totalorder %s19, 0
      %p136 = por %p134, %p135
      %p137 = scmp.ne.s32.totalorder %s125, %s126
      %p138 = scmp.eq.s32.totalorder %s20, 3
      %p139 = por %p137, %p138
      %p141 = scmp.ne.s32.totalorder %s126, %s140
      %p142 = scmp.eq.s32.totalorder %s20, 0
      %p143 = por %p141, %p142
      %s145 = sadd.s32 %s144, 1
      %p148 = scmp.eq.s32.totalorder %s14, 3
      %p149 = scmp.ne.s32.totalorder %s144, %s146
      %p150 = scmp.eq.s32.totalorder %s14, 0
      %p151 = por %p149, %p150
      %p152 = scmp.ne.s32.totalorder %s144, %s146
      %p153 = scmp.eq.s32.totalorder %s19, 3
      %p154 = por %p152, %p153
      %p155 = scmp.ne.s32.totalorder %s146, %s147
      %p156 = scmp.eq.s32.totalorder %s19, 0
      %p157 = por %p155, %p156
      %p158 = scmp.ne.s32.totalorder %s146, %s147
      %p159 = scmp.eq.s32.totalorder %s20, 3
      %p160 = por %p158, %p159
      %p162 = scmp.ne.s32.totalorder %s147, %s161
      %p163 = scmp.eq.s32.totalorder %s20, 0
      %p164 = por %p162, %p163
      %s165 = sadd.s32 %s22, %s23
      %s166 = sadd.s32 %s36, %s32
      %s167 = ssub.s32 %s21, %s40
      %s168 = ssub.s32 %s165, %s166
      %s169 = sor.u32 %s167, %s168
      %p170 = scmp.eq.s32.totalorder %s169, 0
      %s172 = sadd.s32 %s171, 1
      %s173 = scalar_select %p170, %s171, %s172
      %p176 = pneg %p170
      %p177 = scmp.eq.s32.totalorder %s14, 3
      %p178 = por %p176, %p177
      %p179 = scmp.ne.s32.totalorder %s171, %s174
      %p180 = scmp.eq.s32.totalorder %s14, 0
      %p181 = por %p179, %p180
      %p182 = scmp.ne.s32.totalorder %s171, %s174
      %p183 = scmp.eq.s32.totalorder %s19, 3
      %p184 = por %p182, %p183
      %p185 = scmp.ne.s32.totalorder %s174, %s175
      %p186 = scmp.eq.s32.totalorder %s19, 0
      %p187 = por %p185, %p186
      %p188 = scmp.ne.s32.totalorder %s174, %s175
      %p189 = scmp.eq.s32.totalorder %s20, 3
      %p190 = por %p188, %p189
      %p192 = scmp.ne.s32.totalorder %s175, %s191
      %p193 = scmp.eq.s32.totalorder %s20, 0
      %p194 = por %p192, %p193
      %s195 = ssub.s32 %s21, %s40
      %s196 = ssub.s32 %s22, %s36
      %s197 = sor.u32 %s195, %s196
      %p198 = scmp.eq.s32.totalorder %s197, 0
      %s200 = sadd.s32 %s199, 1
      %s201 = scalar_select %p198, %s199, %s200
      %p204 = pneg %p198
      %p205 = scmp.eq.s32.totalorder %s14, 3
      %p206 = por %p204, %p205
      %p207 = scmp.ne.s32.totalorder %s199, %s202
      %p208 = scmp.eq.s32.totalorder %s14, 0
      %p209 = por %p207, %p208
      %p210 = scmp.ne.s32.totalorder %s199, %s202
      %p211 = scmp.eq.s32.totalorder %s19, 3
      %p212 = por %p210, %p211
      %p213 = scmp.ne.s32.totalorder %s202, %s203
      %p214 = scmp.eq.s32.totalorder %s19, 0
      %p215 = por %p213, %p214
      %p216 = scmp.ne.s32.totalorder %s202, %s203
      %p217 = scmp.eq.s32.totalorder %s20, 3
      %p218 = por %p216, %p217
      %p220 = scmp.ne.s32.totalorder %s203, %s219
      %p221 = scmp.eq.s32.totalorder %s20, 0
      %p222 = por %p220, %p221
      %s223 = ssub.s32 %s21, %s40
      %s224 = ssub.s32 %s22, %s36
      %s225 = sor.u32 %s223, %s224
      %p226 = scmp.eq.s32.totalorder %s225, 0
      %s228 = sadd.s32 %s227, 1
      %s229 = scalar_select %p226, %s227, %s228
      %p232 = pneg %p226
      %p233 = scmp.eq.s32.totalorder %s14, 3
      %p234 = por %p232, %p233
      %p235 = scmp.ne.s32.totalorder %s227, %s230
      %p236 = scmp.eq.s32.totalorder %s14, 0
      %p237 = por %p235, %p236
      %p238 = scmp.ne.s32.totalorder %s227, %s230
      %p239 = scmp.eq.s32.totalorder %s19, 3
      %p240 = por %p238, %p239
      %p241 = scmp.ne.s32.totalorder %s230, %s231
      %p242 = scmp.eq.s32.totalorder %s19, 0
      %p243 = por %p241, %p242
      %p244 = scmp.ne.s32.totalorder %s230, %s231
      %p245 = scmp.eq.s32.totalorder %s20, 3
      %p246 = por %p244, %p245
      %p248 = scmp.ne.s32.totalorder %s231, %s247
      %p249 = scmp.eq.s32.totalorder %s20, 0
      %p250 = por %p248, %p249
      %p251 = scmp.le.s32.totalorder 1, %s14
      %p252 = scmp.lt.s32.totalorder %s14, 5
      %p253 = pnand %p251, %p252
      %p254 = pneg %p253
      // Predicated region
      $region9: #{conv3d_layer_pallas.4} parent=5 // pred_check
        _
      $region10: #{conv3d_layer_pallas.4} parent=5 // pred_check_branch
        %256 = sbr.rel (%p253) target = $region12
      $region11: #{conv3d_layer_pallas.4} parent=5 // pred_region
        %s257 = ssub.s32 %s14, 1
        // Predicated region
        $region13: #{conv3d_layer_pallas.4} parent=11 // pred_check
          %p258 = pneg %p136
        $region14: #{conv3d_layer_pallas.4} parent=11 // pred_check_branch
          %260 = sbr.rel (%p258) target = $region16
        $region15: #{conv3d_layer_pallas.4} parent=11 // pred_region
          _
        $region16: #{conv3d_layer_pallas.4} parent=11 // pred_fallthru
          _
        // Predicated region
        $region17: #{conv3d_layer_pallas.4} parent=11 // pred_check
          %p261 = pneg %p157
        $region18: #{conv3d_layer_pallas.4} parent=11 // pred_check_branch
          %263 = sbr.rel (%p261) target = $region20
        $region19: #{conv3d_layer_pallas.4} parent=11 // pred_region
          _
        $region20: #{conv3d_layer_pallas.4} parent=11 // pred_fallthru
          _
      $region12: #{conv3d_layer_pallas.4} parent=5 // pred_fallthru
        _
      %p264 = scmp.lt.s32.totalorder %s14, 4
      // Predicated region
      $region21: #{conv3d_layer_pallas.4} parent=5 // pred_check
        %p265 = pneg %p264
      $region22: #{conv3d_layer_pallas.4} parent=5 // pred_check_branch
        %267 = sbr.rel (%p265) target = $region24
      $region23: #{conv3d_layer_pallas.4} parent=5 // pred_region
        // Predicated region
        $region25: #{conv3d_layer_pallas.4} parent=23 // pred_check
          %p268 = pneg %p53
        $region26: #{conv3d_layer_pallas.4} parent=23 // pred_check_branch
          %270 = sbr.rel (%p268) target = $region28
        $region27: #{conv3d_layer_pallas.4} parent=23 // pred_region
          %p271 = scmp.lt.s32.totalorder %s21, 1
          %s272 = scalar_select %p271, %s21, 1
          %s273 = smul.addr %s272, 4
          %s274 = smul.addr %s273, 8
          %s275 = scalar_lea.vmem %s0, %s274
        $region28: #{conv3d_layer_pallas.4} parent=23 // pred_fallthru
          _
        // Predicated region
        $region29: #{conv3d_layer_pallas.4} parent=23 // pred_check
          %p276 = pneg %p79
        $region30: #{conv3d_layer_pallas.4} parent=23 // pred_check_branch
          %278 = sbr.rel (%p276) target = $region32
        $region31: #{conv3d_layer_pallas.4} parent=23 // pred_region
          %p279 = scmp.lt.s32.totalorder %s21, 1
          %s280 = scalar_select %p279, %s21, 1
          %s281 = smul.addr %s280, 4
          %s282 = smul.addr %s281, 8
          %s283 = scalar_lea.vmem %s1, %s282
        $region32: #{conv3d_layer_pallas.4} parent=23 // pred_fallthru
          _
        // Predicated region
        $region33: #{conv3d_layer_pallas.4} parent=23 // pred_check
          %p284 = pneg %p109
        $region34: #{conv3d_layer_pallas.4} parent=23 // pred_check_branch
          %286 = sbr.rel (%p284) target = $region36
        $region35: #{conv3d_layer_pallas.4} parent=23 // pred_region
          %s287 = sand.u32 %s99, 1
          %s288 = sand.u32 %s99, 1
          %s289 = smul.addr %s288, 128
          %s290 = scalar_lea.vmem [#allocation3], %s289
          %s291 = sadd.s32 %s22, %s23
          %s292 = smul.addr %s21, 32
          %s293 = sadd.s32 %s291, %s292
          %s294 = smul.addr %s293, 8
          %s295 = scalar_lea.vmem %s2, %s294
          // Predicated region
          $region37: #{conv3d_layer_pallas.4} parent=35 // pred_check
            _
          $region38: #{conv3d_layer_pallas.4} parent=35 // pred_check_branch
            %297 = sbr.rel (0) target = $region40
          $region39: #{conv3d_layer_pallas.4} parent=35 // pred_region
            // Predicated region
            $region41: #{conv3d_layer_pallas.4} parent=39 // pred_check
              _
            $region42: #{conv3d_layer_pallas.4} parent=39 // pred_check_branch
              %299 = sbr.rel (0) target = $region44
            $region43: #{conv3d_layer_pallas.4} parent=39 // pred_region
              // Predicated region
              $region56: #{conv3d_layer_pallas.4} parent=43 // pred_check
                _
              $region57: #{conv3d_layer_pallas.4} parent=43 // pred_check_branch
                %345 = sbr.rel (0) target = $region59
              $region58: #{conv3d_layer_pallas.4} parent=43 // pred_region
                loop: start=0, step=1, limit=1
                $region60: #{conv3d_layer_pallas.4} parent=58 // loop_pre_header
                  _
                $region61: #{conv3d_layer_pallas.4} parent=58 // loop_header
                  %s347 = sphi 0, %s351
                  %p348 = scmp.ge.s32.totalorder %s347, 1
                  %s352 = sphi %s295, %s295
                  %s353 = sphi %s290, %s290
                $region62: #{conv3d_layer_pallas.4} parent=58 // loop_header_branch
                  %350 = sbr.rel (%p348) target = $region66
                $region63: #{conv3d_layer_pallas.4} parent=58 // loop_body
                  %v354 = vld [vmem:[%s352] sm:$0xff]
                  %355 = vst [vmem:[%s353] sm:$0xff] %v354
                  %v356 = vld [vmem:[%s352 + $0x10] sm:$0xff]
                  %357 = vst [vmem:[%s353 + $0x8] sm:$0xff] %v356
                  %v358 = vld [vmem:[%s352 + $0x20] sm:$0xff]
                  %359 = vst [vmem:[%s353 + $0x10] sm:$0xff] %v358
                  %v360 = vld [vmem:[%s352 + $0x30] sm:$0xff]
                  %361 = vst [vmem:[%s353 + $0x18] sm:$0xff] %v360
                  %v362 = vld [vmem:[%s352 + $0x40] sm:$0xff]
                  %363 = vst [vmem:[%s353 + $0x20] sm:$0xff] %v362
                  %v364 = vld [vmem:[%s352 + $0x50] sm:$0xff]
                  %365 = vst [vmem:[%s353 + $0x28] sm:$0xff] %v364
                  %v366 = vld [vmem:[%s352 + $0x60] sm:$0xff]
                  %367 = vst [vmem:[%s353 + $0x30] sm:$0xff] %v366
                  %v368 = vld [vmem:[%s352 + $0x70] sm:$0xff]
                  %369 = vst [vmem:[%s353 + $0x38] sm:$0xff] %v368
                  %v370 = vld [vmem:[%s352 + $0x80] sm:$0xff]
                  %371 = vst [vmem:[%s353 + $0x40] sm:$0xff] %v370
                  %v372 = vld [vmem:[%s352 + $0x90] sm:$0xff]
                  %373 = vst [vmem:[%s353 + $0x48] sm:$0xff] %v372
                  %v374 = vld [vmem:[%s352 + $0xa0] sm:$0xff]
                  %375 = vst [vmem:[%s353 + $0x50] sm:$0xff] %v374
                  %v376 = vld [vmem:[%s352 + $0xb0] sm:$0xff]
                  %377 = vst [vmem:[%s353 + $0x58] sm:$0xff] %v376
                  %v378 = vld [vmem:[%s352 + $0xc0] sm:$0xff]
                  %379 = vst [vmem:[%s353 + $0x60] sm:$0xff] %v378
                  %v380 = vld [vmem:[%s352 + $0xd0] sm:$0xff]
                  %381 = vst [vmem:[%s353 + $0x68] sm:$0xff] %v380
                  %v382 = vld [vmem:[%s352 + $0xe0] sm:$0xff]
                  %383 = vst [vmem:[%s353 + $0x70] sm:$0xff] %v382
                  %v384 = vld [vmem:[%s352 + $0xf0] sm:$0xff]
                  %385 = vst [vmem:[%s353 + $0x78] sm:$0xff] %v384
                $region64: #{conv3d_layer_pallas.4} parent=58 // loop_footer
                  %s351 = sadd.s32 1, %s347
                $region65: #{conv3d_layer_pallas.4} parent=58 // loop_footer_branch
                  %346 = sbr.rel target = $region61
                $region66: #{conv3d_layer_pallas.4} parent=58 // loop_exit
                  _
              $region59: #{conv3d_layer_pallas.4} parent=43 // pred_fallthru
                _
              // Predicated region
              $region67: #{conv3d_layer_pallas.4} parent=43 // pred_check
                _
              $region68: #{conv3d_layer_pallas.4} parent=43 // pred_check_branch
                %387 = sbr.rel target = $region70
              $region69: #{conv3d_layer_pallas.4} parent=43 // pred_region
                _
              $region70: #{conv3d_layer_pallas.4} parent=43 // pred_fallthru
                _
            $region44: #{conv3d_layer_pallas.4} parent=39 // pred_fallthru
              _
            // Predicated region
            $region45: #{conv3d_layer_pallas.4} parent=39 // pred_check
              _
            $region46: #{conv3d_layer_pallas.4} parent=39 // pred_check_branch
              %301 = sbr.rel target = $region48
            $region47: #{conv3d_layer_pallas.4} parent=39 // pred_region
              %s303 = ssub.s32 256, 1
              loop: start=0, step=1, limit=1
              $region49: #{conv3d_layer_pallas.4} parent=47 // loop_pre_header
                _
              $region50: #{conv3d_layer_pallas.4} parent=47 // loop_header
                %s305 = sphi 0, %s309
                %p306 = scmp.ge.s32.totalorder %s305, 1
                %s310 = sphi %s295, %s295
                %s311 = sphi %s290, %s290
              $region51: #{conv3d_layer_pallas.4} parent=47 // loop_header_branch
                %308 = sbr.rel (%p306) target = $region55
              $region52: #{conv3d_layer_pallas.4} parent=47 // loop_body
                %v312 = vld [vmem:[%s310] sm:%s303]
                %313 = vst [vmem:[%s311] sm:%s303] %v312
                %v314 = vld [vmem:[%s310 + $0x10] sm:%s303]
                %315 = vst [vmem:[%s311 + $0x8] sm:%s303] %v314
                %v316 = vld [vmem:[%s310 + $0x20] sm:%s303]
                %317 = vst [vmem:[%s311 + $0x10] sm:%s303] %v316
                %v318 = vld [vmem:[%s310 + $0x30] sm:%s303]
                %319 = vst [vmem:[%s311 + $0x18] sm:%s303] %v318
                %v320 = vld [vmem:[%s310 + $0x40] sm:%s303]
                %321 = vst [vmem:[%s311 + $0x20] sm:%s303] %v320
                %v322 = vld [vmem:[%s310 + $0x50] sm:%s303]
                %323 = vst [vmem:[%s311 + $0x28] sm:%s303] %v322
                %v324 = vld [vmem:[%s310 + $0x60] sm:%s303]
                %325 = vst [vmem:[%s311 + $0x30] sm:%s303] %v324
                %v326 = vld [vmem:[%s310 + $0x70] sm:%s303]
                %327 = vst [vmem:[%s311 + $0x38] sm:%s303] %v326
                %v328 = vld [vmem:[%s310 + $0x80] sm:%s303]
                %329 = vst [vmem:[%s311 + $0x40] sm:%s303] %v328
                %v330 = vld [vmem:[%s310 + $0x90] sm:%s303]
                %331 = vst [vmem:[%s311 + $0x48] sm:%s303] %v330
                %v332 = vld [vmem:[%s310 + $0xa0] sm:%s303]
                %333 = vst [vmem:[%s311 + $0x50] sm:%s303] %v332
                %v334 = vld [vmem:[%s310 + $0xb0] sm:%s303]
                %335 = vst [vmem:[%s311 + $0x58] sm:%s303] %v334
                %v336 = vld [vmem:[%s310 + $0xc0] sm:%s303]
                %337 = vst [vmem:[%s311 + $0x60] sm:%s303] %v336
                %v338 = vld [vmem:[%s310 + $0xd0] sm:%s303]
                %339 = vst [vmem:[%s311 + $0x68] sm:%s303] %v338
                %v340 = vld [vmem:[%s310 + $0xe0] sm:%s303]
                %341 = vst [vmem:[%s311 + $0x70] sm:%s303] %v340
                %v342 = vld [vmem:[%s310 + $0xf0] sm:%s303]
                %343 = vst [vmem:[%s311 + $0x78] sm:%s303] %v342
              $region53: #{conv3d_layer_pallas.4} parent=47 // loop_footer
                %s309 = sadd.s32 1, %s305
              $region54: #{conv3d_layer_pallas.4} parent=47 // loop_footer_branch
                %304 = sbr.rel target = $region50
              $region55: #{conv3d_layer_pallas.4} parent=47 // loop_exit
                _
            $region48: #{conv3d_layer_pallas.4} parent=39 // pred_fallthru
              _
          $region40: #{conv3d_layer_pallas.4} parent=35 // pred_fallthru
            _
          %388 = vnop
        $region36: #{conv3d_layer_pallas.4} parent=23 // pred_fallthru
          _
      $region24: #{conv3d_layer_pallas.4} parent=5 // pred_fallthru
        _
      %p389 = scmp.le.s32.totalorder 1, %s14
      %p390 = scmp.lt.s32.totalorder %s14, 5
      %p391 = pnand %p389, %p390
      %p392 = pneg %p391
      // Predicated region
      $region71: #{conv3d_layer_pallas.4} parent=5 // pred_check
        _
      $region72: #{conv3d_layer_pallas.4} parent=5 // pred_check_branch
        %394 = sbr.rel (%p391) target = $region74
      $region73: #{conv3d_layer_pallas.4} parent=5 // pred_region
        %s395 = ssub.s32 %s14, 1
        %s396 = sand.u32 %s102, 1
        %s397 = sand.u32 %s102, 1
        %s398 = smul.addr %s397, 128
        %s399 = scalar_lea.vmem [#allocation3], %s398
        // Predicated region
        $region75: #{conv3d_layer_pallas.4} parent=73 // pred_check
          %p400 = pneg %p115
        $region76: #{conv3d_layer_pallas.4} parent=73 // pred_check_branch
          %402 = sbr.rel (%p400) target = $region78
        $region77: #{conv3d_layer_pallas.4} parent=73 // pred_region
          _
        $region78: #{conv3d_layer_pallas.4} parent=73 // pred_fallthru
          _
        %p403 = scmp.lt.s32.totalorder %s24, 1
        %s404 = scalar_select %p403, %s24, 1
        %s405 = smul.addr %s404, 4
        %s406 = smul.addr %s405, 8
        %s407 = scalar_lea.vmem %s0, %s406
        %p408 = pneg %p59
        %p409 = pneg %p56
        %p410 = scmp.lt.s32.totalorder %s24, 1
        %s411 = scalar_select %p410, %s24, 1
        %s412 = smul.addr %s411, 4
        %s413 = smul.addr %s412, 8
        %s414 = scalar_lea.vmem %s1, %s413
        %p415 = pneg %p85
        %p416 = pneg %p82
        %s417 = sand.u32 %s102, 1
        %s418 = sand.u32 %s102, 1
        %s419 = smul.addr %s418, 128
        %s420 = scalar_lea.vmem [#allocation3], %s419
        %p421 = pneg %p115
        %p422 = pneg %p112
        %p423 = pneg %p136
        %p424 = pneg %p133
        %p425 = pneg %p157
        %p426 = pneg %p154
        %p427 = pneg %p187
        %p428 = pneg %p184
        %s429 = sand.u32 %s174, 1
        %s430 = sand.u32 %s174, 1
        %s431 = smul.addr %s430, 128
        %s432 = scalar_lea.vmem [#allocation4], %s431
        %p433 = pneg %p215
        %p434 = pneg %p212
        %p435 = scmp.lt.s32.totalorder %s24, 1
        %s436 = scalar_select %p435, %s24, 1
        %p437 = scmp.lt.s32.totalorder %s25, 1
        %s438 = scalar_select %p437, %s25, 1
        %s439 = smul.addr %s438, 4
        %s440 = smul.addr %s436, 8
        %s441 = sadd.s32 %s439, %s440
        %s442 = smul.addr %s441, 8
        %s443 = scalar_lea.vmem %s6, %s442
        %p444 = pneg %p243
        %p445 = pneg %p240
        %p446 = scmp.lt.s32.totalorder %s24, 1
        %s447 = scalar_select %p446, %s24, 1
        %p448 = scmp.lt.s32.totalorder %s25, 1
        %s449 = scalar_select %p448, %s25, 1
        %s450 = smul.addr %s449, 4
        %s451 = smul.addr %s447, 8
        %s452 = sadd.s32 %s450, %s451
        %s453 = smul.addr %s452, 8
        %s454 = scalar_lea.vmem %s7, %s453
        %p455 = scmp.lt.s32.totalorder %s24, 1
        %s456 = scalar_select %p455, %s24, 1
        %s457 = smul.addr %s456, 4
        %s458 = smul.addr %s457, 8
        %s459 = scalar_lea.vmem %s0, %s458
        %p460 = scmp.lt.s32.totalorder %s24, 1
        %s461 = scalar_select %p460, %s24, 1
        %s462 = smul.addr %s461, 4
        %s463 = smul.addr %s462, 8
        %s464 = scalar_lea.vmem %s1, %s463
        %s465 = sadd.s32 %s25, %s26
        %s466 = sadd.s32 %s25, %s26
        %p467 = scmp.lt.s32.totalorder %s24, 1
        %s468 = scalar_select %p467, %s24, 1
        %p469 = scmp.lt.s32.totalorder %s25, 1
        %s470 = scalar_select %p469, %s25, 1
        %s471 = smul.addr %s470, 4
        %s472 = smul.addr %s468, 8
        %s473 = sadd.s32 %s471, %s472
        %s474 = smul.addr %s473, 8
        %s475 = scalar_lea.vmem %s6, %s474
        %p476 = scmp.lt.s32.totalorder %s24, 1
        %s477 = scalar_select %p476, %s24, 1
        %p478 = scmp.lt.s32.totalorder %s25, 1
        %s479 = scalar_select %p478, %s25, 1
        %s480 = smul.addr %s479, 4
        %s481 = smul.addr %s477, 8
        %s482 = sadd.s32 %s480, %s481
        %s483 = smul.addr %s482, 8
        %s484 = scalar_lea.vmem %s7, %s483
        %p485 = scmp.eq.s32.totalorder %s26, 0
        // Predicated region
        $region79: #{conv3d_layer_pallas.4} parent=73 // pred_check
          %p486 = pneg %p485
        $region80: #{conv3d_layer_pallas.4} parent=73 // pred_check_branch
          %488 = sbr.rel (%p486) target = $region82
        $region81: #{conv3d_layer_pallas.4} parent=73 // pred_region
          %vm489 = vcmask 7168
          %490 = vst.msk [vmem:[%s475] sm:$0xff] %vm489, 0.0
          %491 = vst.msk [vmem:[%s475 + $0x8] sm:$0xff] %vm489, 0.0
          %492 = vst.msk [vmem:[%s475 + $0x10] sm:$0xff] %vm489, 0.0
          %493 = vst.msk [vmem:[%s475 + $0x18] sm:$0xff] %vm489, 0.0
          %494 = vst.msk [vmem:[%s484] sm:$0xff] %vm489, 0.0
          %495 = vst.msk [vmem:[%s484 + $0x8] sm:$0xff] %vm489, 0.0
          %496 = vst.msk [vmem:[%s484 + $0x10] sm:$0xff] %vm489, 0.0
          %497 = vst.msk [vmem:[%s484 + $0x18] sm:$0xff] %vm489, 0.0
        $region82: #{conv3d_layer_pallas.4} parent=73 // pred_fallthru
          _
        %v498 = vld [vmem:[%s459] sm:$0xff]
        %v499 = vld [vmem:[%s459 + $0x8] sm:$0xff]
        %v500 = vld [vmem:[%s459 + $0x10] sm:$0xff]
        %v501 = vld [vmem:[%s459 + $0x18] sm:$0xff]
        %v502 = vld [vmem:[%s464] sm:$0xff]
        %v503 = vld [vmem:[%s464 + $0x8] sm:$0xff]
        %v504 = vld [vmem:[%s464 + $0x10] sm:$0xff]
        %v505 = vld [vmem:[%s464 + $0x18] sm:$0xff]
        %506 = vst [vmem:[#allocation2] sm:$0xff] 0.0
        %507 = vst [vmem:[#allocation2 + $0x8] sm:$0xff] 0.0
        %508 = vst [vmem:[#allocation2 + $0x10] sm:$0xff] 0.0
        %509 = vst [vmem:[#allocation2 + $0x18] sm:$0xff] 0.0
        %510 = vst [vmem:[#allocation2 + $0xa0] sm:$0xff] 0.0
        %511 = vst [vmem:[#allocation2 + $0xa8] sm:$0xff] 0.0
        %512 = vst [vmem:[#allocation2 + $0xb0] sm:$0xff] 0.0
        %513 = vst [vmem:[#allocation2 + $0xb8] sm:$0xff] 0.0
        %v514 = vld [vmem:[%s399] sm:$0xff]
        %v515 = vld [vmem:[%s399 + $0x8] sm:$0xff]
        %v516 = vld [vmem:[%s399 + $0x10] sm:$0xff]
        %v517 = vld [vmem:[%s399 + $0x18] sm:$0xff]
        %519 = vset.pattern.permute.xlu0 0
        %520 = vperm.xlu0 %519, %v498
        %v521 = vpop.permute.xlu0 %520
        %524 = vset.pattern.permute.xlu0 0
        %525 = vperm.xlu0 %524, %v499
        %v526 = vpop.permute.xlu0 %525
        %529 = vset.pattern.permute.xlu0 0
        %530 = vperm.xlu0 %529, %v500
        %v531 = vpop.permute.xlu0 %530
        %534 = vset.pattern.permute.xlu0 0
        %535 = vperm.xlu0 %534, %v501
        %v536 = vpop.permute.xlu0 %535
        %v538 = vmul.f32 %v514, %v521
        %v539 = vmul.f32 %v515, %v526
        %v540 = vmul.f32 %v516, %v531
        %v541 = vmul.f32 %v517, %v536
        %543 = vset.pattern.permute.xlu0 0
        %544 = vperm.xlu0 %543, %v502
        %v545 = vpop.permute.xlu0 %544
        %548 = vset.pattern.permute.xlu0 0
        %549 = vperm.xlu0 %548, %v503
        %v550 = vpop.permute.xlu0 %549
        %553 = vset.pattern.permute.xlu0 0
        %554 = vperm.xlu0 %553, %v504
        %v555 = vpop.permute.xlu0 %554
        %558 = vset.pattern.permute.xlu0 0
        %559 = vperm.xlu0 %558, %v505
        %v560 = vpop.permute.xlu0 %559
        %v562 = vadd.f32 %v538, %v545
        %v563 = vadd.f32 %v539, %v550
        %v564 = vadd.f32 %v540, %v555
        %v565 = vadd.f32 %v541, %v560
        %v566 = vxor.u32 %v562, 2147483648
        %v567 = vxor.u32 %v563, 2147483648
        %v568 = vxor.u32 %v564, 2147483648
        %v569 = vxor.u32 %v565, 2147483648
        %v570 = vmul.f32 %v566, 1.442695
        %v571 = vpow.pop %v570
        %v572 = vmul.f32 %v567, 1.442695
        %v573 = vpow.pop %v572
        %v574 = vmul.f32 %v568, 1.442695
        %v575 = vpow.pop %v574
        %v576 = vmul.f32 %v569, 1.442695
        %v577 = vpow.pop %v576
        %v578 = vadd.f32 %v571, 1.0
        %v579 = vadd.f32 %v573, 1.0
        %v580 = vadd.f32 %v575, 1.0
        %v581 = vadd.f32 %v577, 1.0
        %v582 = vrcp.pop %v578
        %v583 = vmul.f32 %v578, %v582
        %v584 = vsub.f32 1.0, %v583
        %v585 = vmul.f32 %v582, %v584
        %v586 = vadd.f32 %v582, %v585
        %vm587 = vweird.f32 %v578
        %vm588 = vweird.f32 %v582
        %vm589 = vmor %vm587, %vm588
        %v590 = vsel %vm589, %v582, %v586
        %v591 = vand.u32 2147483647, %v578
        %vm592 = vcmp.eq.f32.partialorder %v591, 8.507059e+37
        %v593 = vand.u32 %v578, 2147483648
        %v594 = vor.u32 1.1754944e-38, %v593
        %v595 = vsel %vm592, %v594, %v590
        %v596 = vmul.f32 1.0, %v595
        %v597 = vrcp.pop %v579
        %v598 = vmul.f32 %v579, %v597
        %v599 = vsub.f32 1.0, %v598
        %v600 = vmul.f32 %v597, %v599
        %v601 = vadd.f32 %v597, %v600
        %vm602 = vweird.f32 %v579
        %vm603 = vweird.f32 %v597
        %vm604 = vmor %vm602, %vm603
        %v605 = vsel %vm604, %v597, %v601
        %v606 = vand.u32 2147483647, %v579
        %vm607 = vcmp.eq.f32.partialorder %v606, 8.507059e+37
        %v608 = vand.u32 %v579, 2147483648
        %v609 = vor.u32 1.1754944e-38, %v608
        %v610 = vsel %vm607, %v609, %v605
        %v611 = vmul.f32 1.0, %v610
        %v612 = vrcp.pop %v580
        %v613 = vmul.f32 %v580, %v612
        %v614 = vsub.f32 1.0, %v613
        %v615 = vmul.f32 %v612, %v614
        %v616 = vadd.f32 %v612, %v615
        %vm617 = vweird.f32 %v580
        %vm618 = vweird.f32 %v612
        %vm619 = vmor %vm617, %vm618
        %v620 = vsel %vm619, %v612, %v616
        %v621 = vand.u32 2147483647, %v580
        %vm622 = vcmp.eq.f32.partialorder %v621, 8.507059e+37
        %v623 = vand.u32 %v580, 2147483648
        %v624 = vor.u32 1.1754944e-38, %v623
        %v625 = vsel %vm622, %v624, %v620
        %v626 = vmul.f32 1.0, %v625
        %v627 = vrcp.pop %v581
        %v628 = vmul.f32 %v581, %v627
        %v629 = vsub.f32 1.0, %v628
        %v630 = vmul.f32 %v627, %v629
        %v631 = vadd.f32 %v627, %v630
        %vm632 = vweird.f32 %v581
        %vm633 = vweird.f32 %v627
        %vm634 = vmor %vm632, %vm633
        %v635 = vsel %vm634, %v627, %v631
        %v636 = vand.u32 2147483647, %v581
        %vm637 = vcmp.eq.f32.partialorder %v636, 8.507059e+37
        %v638 = vand.u32 %v581, 2147483648
        %v639 = vor.u32 1.1754944e-38, %v638
        %v640 = vsel %vm637, %v639, %v635
        %v641 = vmul.f32 1.0, %v640
        %v642 = vmul.f32 %v562, %v596
        %v643 = vmul.f32 %v563, %v611
        %v644 = vmul.f32 %v564, %v626
        %v645 = vmul.f32 %v565, %v641
        %646 = vst [vmem:[#allocation2 + $0x20] sm:$0xff] %v642
        %647 = vst [vmem:[#allocation2 + $0x28] sm:$0xff] %v643
        %648 = vst [vmem:[#allocation2 + $0x30] sm:$0xff] %v644
        %649 = vst [vmem:[#allocation2 + $0x38] sm:$0xff] %v645
        %s650 = scalar_lea.vmem %s399, 32 [#allocation3]
        %v651 = vld [vmem:[%s650] sm:$0xff]
        %v652 = vld [vmem:[%s650 + $0x8] sm:$0xff]
        %v653 = vld [vmem:[%s650 + $0x10] sm:$0xff]
        %v654 = vld [vmem:[%s650 + $0x18] sm:$0xff]
        %v655 = vmul.f32 %v651, %v521
        %v656 = vmul.f32 %v652, %v526
        %v657 = vmul.f32 %v653, %v531
        %v658 = vmul.f32 %v654, %v536
        %v659 = vadd.f32 %v655, %v545
        %v660 = vadd.f32 %v656, %v550
        %v661 = vadd.f32 %v657, %v555
        %v662 = vadd.f32 %v658, %v560
        %v663 = vxor.u32 %v659, 2147483648
        %v664 = vxor.u32 %v660, 2147483648
        %v665 = vxor.u32 %v661, 2147483648
        %v666 = vxor.u32 %v662, 2147483648
        %v667 = vmul.f32 %v663, 1.442695
        %v668 = vpow.pop %v667
        %v669 = vmul.f32 %v664, 1.442695
        %v670 = vpow.pop %v669
        %v671 = vmul.f32 %v665, 1.442695
        %v672 = vpow.pop %v671
        %v673 = vmul.f32 %v666, 1.442695
        %v674 = vpow.pop %v673
        %v675 = vadd.f32 %v668, 1.0
        %v676 = vadd.f32 %v670, 1.0
        %v677 = vadd.f32 %v672, 1.0
        %v678 = vadd.f32 %v674, 1.0
        %v679 = vrcp.pop %v675
        %v680 = vmul.f32 %v675, %v679
        %v681 = vsub.f32 1.0, %v680
        %v682 = vmul.f32 %v679, %v681
        %v683 = vadd.f32 %v679, %v682
        %vm684 = vweird.f32 %v675
        %vm685 = vweird.f32 %v679
        %vm686 = vmor %vm684, %vm685
        %v687 = vsel %vm686, %v679, %v683
        %v688 = vand.u32 2147483647, %v675
        %vm689 = vcmp.eq.f32.partialorder %v688, 8.507059e+37
        %v690 = vand.u32 %v675, 2147483648
        %v691 = vor.u32 1.1754944e-38, %v690
        %v692 = vsel %vm689, %v691, %v687
        %v693 = vmul.f32 1.0, %v692
        %v694 = vrcp.pop %v676
        %v695 = vmul.f32 %v676, %v694
        %v696 = vsub.f32 1.0, %v695
        %v697 = vmul.f32 %v694, %v696
        %v698 = vadd.f32 %v694, %v697
        %vm699 = vweird.f32 %v676
        %vm700 = vweird.f32 %v694
        %vm701 = vmor %vm699, %vm700
        %v702 = vsel %vm701, %v694, %v698
        %v703 = vand.u32 2147483647, %v676
        %vm704 = vcmp.eq.f32.partialorder %v703, 8.507059e+37
        %v705 = vand.u32 %v676, 2147483648
        %v706 = vor.u32 1.1754944e-38, %v705
        %v707 = vsel %vm704, %v706, %v702
        %v708 = vmul.f32 1.0, %v707
        %v709 = vrcp.pop %v677
        %v710 = vmul.f32 %v677, %v709
        %v711 = vsub.f32 1.0, %v710
        %v712 = vmul.f32 %v709, %v711
        %v713 = vadd.f32 %v709, %v712
        %vm714 = vweird.f32 %v677
        %vm715 = vweird.f32 %v709
        %vm716 = vmor %vm714, %vm715
        %v717 = vsel %vm716, %v709, %v713
        %v718 = vand.u32 2147483647, %v677
        %vm719 = vcmp.eq.f32.partialorder %v718, 8.507059e+37
        %v720 = vand.u32 %v677, 2147483648
        %v721 = vor.u32 1.1754944e-38, %v720
        %v722 = vsel %vm719, %v721, %v717
        %v723 = vmul.f32 1.0, %v722
        %v724 = vrcp.pop %v678
        %v725 = vmul.f32 %v678, %v724
        %v726 = vsub.f32 1.0, %v725
        %v727 = vmul.f32 %v724, %v726
        %v728 = vadd.f32 %v724, %v727
        %vm729 = vweird.f32 %v678
        %vm730 = vweird.f32 %v724
        %vm731 = vmor %vm729, %vm730
        %v732 = vsel %vm731, %v724, %v728
        %v733 = vand.u32 2147483647, %v678
        %vm734 = vcmp.eq.f32.partialorder %v733, 8.507059e+37
        %v735 = vand.u32 %v678, 2147483648
        %v736 = vor.u32 1.1754944e-38, %v735
        %v737 = vsel %vm734, %v736, %v732
        %v738 = vmul.f32 1.0, %v737
        %v739 = vmul.f32 %v659, %v693
        %v740 = vmul.f32 %v660, %v708
        %v741 = vmul.f32 %v661, %v723
        %v742 = vmul.f32 %v662, %v738
        %743 = vst [vmem:[#allocation2 + $0x40] sm:$0xff] %v739
        %744 = vst [vmem:[#allocation2 + $0x48] sm:$0xff] %v740
        %745 = vst [vmem:[#allocation2 + $0x50] sm:$0xff] %v741
        %746 = vst [vmem:[#allocation2 + $0x58] sm:$0xff] %v742
        %s747 = scalar_lea.vmem %s399, 64 [#allocation3]
        %v748 = vld [vmem:[%s747] sm:$0xff]
        %v749 = vld [vmem:[%s747 + $0x8] sm:$0xff]
        %v750 = vld [vmem:[%s747 + $0x10] sm:$0xff]
        %v751 = vld [vmem:[%s747 + $0x18] sm:$0xff]
        %v752 = vmul.f32 %v748, %v521
        %v753 = vmul.f32 %v749, %v526
        %v754 = vmul.f32 %v750, %v531
        %v755 = vmul.f32 %v751, %v536
        %v756 = vadd.f32 %v752, %v545
        %v757 = vadd.f32 %v753, %v550
        %v758 = vadd.f32 %v754, %v555
        %v759 = vadd.f32 %v755, %v560
        %v760 = vxor.u32 %v756, 2147483648
        %v761 = vxor.u32 %v757, 2147483648
        %v762 = vxor.u32 %v758, 2147483648
        %v763 = vxor.u32 %v759, 2147483648
        %v764 = vmul.f32 %v760, 1.442695
        %v765 = vpow.pop %v764
        %v766 = vmul.f32 %v761, 1.442695
        %v767 = vpow.pop %v766
        %v768 = vmul.f32 %v762, 1.442695
        %v769 = vpow.pop %v768
        %v770 = vmul.f32 %v763, 1.442695
        %v771 = vpow.pop %v770
        %v772 = vadd.f32 %v765, 1.0
        %v773 = vadd.f32 %v767, 1.0
        %v774 = vadd.f32 %v769, 1.0
        %v775 = vadd.f32 %v771, 1.0
        %v776 = vrcp.pop %v772
        %v777 = vmul.f32 %v772, %v776
        %v778 = vsub.f32 1.0, %v777
        %v779 = vmul.f32 %v776, %v778
        %v780 = vadd.f32 %v776, %v779
        %vm781 = vweird.f32 %v772
        %vm782 = vweird.f32 %v776
        %vm783 = vmor %vm781, %vm782
        %v784 = vsel %vm783, %v776, %v780
        %v785 = vand.u32 2147483647, %v772
        %vm786 = vcmp.eq.f32.partialorder %v785, 8.507059e+37
        %v787 = vand.u32 %v772, 2147483648
        %v788 = vor.u32 1.1754944e-38, %v787
        %v789 = vsel %vm786, %v788, %v784
        %v790 = vmul.f32 1.0, %v789
        %v791 = vrcp.pop %v773
        %v792 = vmul.f32 %v773, %v791
        %v793 = vsub.f32 1.0, %v792
        %v794 = vmul.f32 %v791, %v793
        %v795 = vadd.f32 %v791, %v794
        %vm796 = vweird.f32 %v773
        %vm797 = vweird.f32 %v791
        %vm798 = vmor %vm796, %vm797
        %v799 = vsel %vm798, %v791, %v795
        %v800 = vand.u32 2147483647, %v773
        %vm801 = vcmp.eq.f32.partialorder %v800, 8.507059e+37
        %v802 = vand.u32 %v773, 2147483648
        %v803 = vor.u32 1.1754944e-38, %v802
        %v804 = vsel %vm801, %v803, %v799
        %v805 = vmul.f32 1.0, %v804
        %v806 = vrcp.pop %v774
        %v807 = vmul.f32 %v774, %v806
        %v808 = vsub.f32 1.0, %v807
        %v809 = vmul.f32 %v806, %v808
        %v810 = vadd.f32 %v806, %v809
        %vm811 = vweird.f32 %v774
        %vm812 = vweird.f32 %v806
        %vm813 = vmor %vm811, %vm812
        %v814 = vsel %vm813, %v806, %v810
        %v815 = vand.u32 2147483647, %v774
        %vm816 = vcmp.eq.f32.partialorder %v815, 8.507059e+37
        %v817 = vand.u32 %v774, 2147483648
        %v818 = vor.u32 1.1754944e-38, %v817
        %v819 = vsel %vm816, %v818, %v814
        %v820 = vmul.f32 1.0, %v819
        %v821 = vrcp.pop %v775
        %v822 = vmul.f32 %v775, %v821
        %v823 = vsub.f32 1.0, %v822
        %v824 = vmul.f32 %v821, %v823
        %v825 = vadd.f32 %v821, %v824
        %vm826 = vweird.f32 %v775
        %vm827 = vweird.f32 %v821
        %vm828 = vmor %vm826, %vm827
        %v829 = vsel %vm828, %v821, %v825
        %v830 = vand.u32 2147483647, %v775
        %vm831 = vcmp.eq.f32.partialorder %v830, 8.507059e+37
        %v832 = vand.u32 %v775, 2147483648
        %v833 = vor.u32 1.1754944e-38, %v832
        %v834 = vsel %vm831, %v833, %v829
        %v835 = vmul.f32 1.0, %v834
        %v836 = vmul.f32 %v756, %v790
        %v837 = vmul.f32 %v757, %v805
        %v838 = vmul.f32 %v758, %v820
        %v839 = vmul.f32 %v759, %v835
        %840 = vst [vmem:[#allocation2 + $0x60] sm:$0xff] %v836
        %841 = vst [vmem:[#allocation2 + $0x68] sm:$0xff] %v837
        %842 = vst [vmem:[#allocation2 + $0x70] sm:$0xff] %v838
        %843 = vst [vmem:[#allocation2 + $0x78] sm:$0xff] %v839
        %s844 = scalar_lea.vmem %s399, 96 [#allocation3]
        %v845 = vld [vmem:[%s844] sm:$0xff]
        %v846 = vld [vmem:[%s844 + $0x8] sm:$0xff]
        %v847 = vld [vmem:[%s844 + $0x10] sm:$0xff]
        %v848 = vld [vmem:[%s844 + $0x18] sm:$0xff]
        %v849 = vmul.f32 %v845, %v521
        %v850 = vmul.f32 %v846, %v526
        %v851 = vmul.f32 %v847, %v531
        %v852 = vmul.f32 %v848, %v536
        %v853 = vadd.f32 %v849, %v545
        %v854 = vadd.f32 %v850, %v550
        %v855 = vadd.f32 %v851, %v555
        %v856 = vadd.f32 %v852, %v560
        %v857 = vxor.u32 %v853, 2147483648
        %v858 = vxor.u32 %v854, 2147483648
        %v859 = vxor.u32 %v855, 2147483648
        %v860 = vxor.u32 %v856, 2147483648
        %v861 = vmul.f32 %v857, 1.442695
        %v862 = vpow.pop %v861
        %v863 = vmul.f32 %v858, 1.442695
        %v864 = vpow.pop %v863
        %v865 = vmul.f32 %v859, 1.442695
        %v866 = vpow.pop %v865
        %v867 = vmul.f32 %v860, 1.442695
        %v868 = vpow.pop %v867
        %v869 = vadd.f32 %v862, 1.0
        %v870 = vadd.f32 %v864, 1.0
        %v871 = vadd.f32 %v866, 1.0
        %v872 = vadd.f32 %v868, 1.0
        %v873 = vrcp.pop %v869
        %v874 = vmul.f32 %v869, %v873
        %v875 = vsub.f32 1.0, %v874
        %v876 = vmul.f32 %v873, %v875
        %v877 = vadd.f32 %v873, %v876
        %vm878 = vweird.f32 %v869
        %vm879 = vweird.f32 %v873
        %vm880 = vmor %vm878, %vm879
        %v881 = vsel %vm880, %v873, %v877
        %v882 = vand.u32 2147483647, %v869
        %vm883 = vcmp.eq.f32.partialorder %v882, 8.507059e+37
        %v884 = vand.u32 %v869, 2147483648
        %v885 = vor.u32 1.1754944e-38, %v884
        %v886 = vsel %vm883, %v885, %v881
        %v887 = vmul.f32 1.0, %v886
        %v888 = vrcp.pop %v870
        %v889 = vmul.f32 %v870, %v888
        %v890 = vsub.f32 1.0, %v889
        %v891 = vmul.f32 %v888, %v890
        %v892 = vadd.f32 %v888, %v891
        %vm893 = vweird.f32 %v870
        %vm894 = vweird.f32 %v888
        %vm895 = vmor %vm893, %vm894
        %v896 = vsel %vm895, %v888, %v892
        %v897 = vand.u32 2147483647, %v870
        %vm898 = vcmp.eq.f32.partialorder %v897, 8.507059e+37
        %v899 = vand.u32 %v870, 2147483648
        %v900 = vor.u32 1.1754944e-38, %v899
        %v901 = vsel %vm898, %v900, %v896
        %v902 = vmul.f32 1.0, %v901
        %v903 = vrcp.pop %v871
        %v904 = vmul.f32 %v871, %v903
        %v905 = vsub.f32 1.0, %v904
        %v906 = vmul.f32 %v903, %v905
        %v907 = vadd.f32 %v903, %v906
        %vm908 = vweird.f32 %v871
        %vm909 = vweird.f32 %v903
        %vm910 = vmor %vm908, %vm909
        %v911 = vsel %vm910, %v903, %v907
        %v912 = vand.u32 2147483647, %v871
        %vm913 = vcmp.eq.f32.partialorder %v912, 8.507059e+37
        %v914 = vand.u32 %v871, 2147483648
        %v915 = vor.u32 1.1754944e-38, %v914
        %v916 = vsel %vm913, %v915, %v911
        %v917 = vmul.f32 1.0, %v916
        %v918 = vrcp.pop %v872
        %v919 = vmul.f32 %v872, %v918
        %v920 = vsub.f32 1.0, %v919
        %v921 = vmul.f32 %v918, %v920
        %v922 = vadd.f32 %v918, %v921
        %vm923 = vweird.f32 %v872
        %vm924 = vweird.f32 %v918
        %vm925 = vmor %vm923, %vm924
        %v926 = vsel %vm925, %v918, %v922
        %v927 = vand.u32 2147483647, %v872
        %vm928 = vcmp.eq.f32.partialorder %v927, 8.507059e+37
        %v929 = vand.u32 %v872, 2147483648
        %v930 = vor.u32 1.1754944e-38, %v929
        %v931 = vsel %vm928, %v930, %v926
        %v932 = vmul.f32 1.0, %v931
        %v933 = vmul.f32 %v853, %v887
        %v934 = vmul.f32 %v854, %v902
        %v935 = vmul.f32 %v855, %v917
        %v936 = vmul.f32 %v856, %v932
        %937 = vst [vmem:[#allocation2 + $0x80] sm:$0xff] %v933
        %938 = vst [vmem:[#allocation2 + $0x88] sm:$0xff] %v934
        %939 = vst [vmem:[#allocation2 + $0x90] sm:$0xff] %v935
        %940 = vst [vmem:[#allocation2 + $0x98] sm:$0xff] %v936
        %v941 = vld [vmem:[%s4] sm:$0xff]
        %v942 = vld [vmem:[%s4 + $0x8] sm:$0xff]
        %v943 = vld [vmem:[%s4 + $0x10] sm:$0xff]
        %v944 = vld [vmem:[%s4 + $0x18] sm:$0xff]
        %v945 = vld [vmem:[#allocation2] sm:$0xff]
        %v946 = vld [vmem:[#allocation2 + $0x8] sm:$0xff]
        %v947 = vld [vmem:[#allocation2 + $0x10] sm:$0xff]
        %v948 = vld [vmem:[#allocation2 + $0x18] sm:$0xff]
        %v949 = vld [vmem:[#allocation2 + $0x20] sm:$0xff]
        %v950 = vld [vmem:[#allocation2 + $0x28] sm:$0xff]
        %v951 = vld [vmem:[#allocation2 + $0x30] sm:$0xff]
        %v952 = vld [vmem:[#allocation2 + $0x38] sm:$0xff]
        %v953 = vld [vmem:[#allocation2 + $0x40] sm:$0xff]
        %v954 = vld [vmem:[#allocation2 + $0x48] sm:$0xff]
        %v955 = vld [vmem:[#allocation2 + $0x50] sm:$0xff]
        %v956 = vld [vmem:[#allocation2 + $0x58] sm:$0xff]
        %v957 = vld [vmem:[%s3] sm:$0xff]
        %v958 = vld [vmem:[%s3 + $0x8] sm:$0xff]
        %v959 = vld [vmem:[%s3 + $0x10] sm:$0xff]
        %v960 = vld [vmem:[%s3 + $0x18] sm:$0xff]
        %962 = vset.pattern.permute.xlu0 0
        %963 = vperm.xlu0 %962, %v941
        %v964 = vpop.permute.xlu0 %963
        %967 = vset.pattern.permute.xlu0 0
        %968 = vperm.xlu0 %967, %v942
        %v969 = vpop.permute.xlu0 %968
        %972 = vset.pattern.permute.xlu0 0
        %973 = vperm.xlu0 %972, %v943
        %v974 = vpop.permute.xlu0 %973
        %977 = vset.pattern.permute.xlu0 0
        %978 = vperm.xlu0 %977, %v944
        %v979 = vpop.permute.xlu0 %978
        %vm981 = vcmask 785408
        %v983 = vsel %vm981, %v957, 0
        %v986 = vsel %vm981, %v958, 0
        %v989 = vsel %vm981, %v959, 0
        %v992 = vsel %vm981, %v960, 0
        %994 = vmatpush.msra.mxu0 0.0
        %995 = vmatpush.msra.mxu0 0.0
        %996 = vmatpush.msra.mxu0 0.0
        %997 = vmatpush.msra.mxu0 0.0
        %998 = vmatpush.msra.mxu0 %v956
        %999 = vmatpush.msra.mxu0 %v955
        %1000 = vmatpush.msra.mxu0 %v954
        %1001 = vmatpush.msra.mxu0 %v953
        %1002 = vmatpush.msra.mxu0 %v952
        %1003 = vmatpush.msra.mxu0 %v951
        %1004 = vmatpush.msra.mxu0 %v950
        %1005 = vmatpush.msra.mxu0 %v949
        %1006 = vmatpush.msra.mxu0 %v948
        %1007 = vmatpush.msra.mxu0 %v947
        %1008 = vmatpush.msra.mxu0 %v946
        %1009 = vmatpush.msra.mxu0 %v945
        %1010 = vmatmul.f32.gmra.mxu0 %v983
        %v1011 = vpop.f32.mrf.mxu0
        %v1012 = vadd.f32 %v964, %v1011
        %1013 = vmatmul.f32.gmra.mxu0 %v986
        %v1014 = vpop.f32.mrf.mxu0
        %v1015 = vadd.f32 %v969, %v1014
        %1016 = vmatmul.f32.gmra.mxu0 %v989
        %v1017 = vpop.f32.mrf.mxu0
        %v1018 = vadd.f32 %v974, %v1017
        %1019 = vmatmul.f32.gmra.mxu0 %v992
        %v1020 = vpop.f32.mrf.mxu0
        %v1021 = vadd.f32 %v979, %v1020
        %1022 = vdwg.mxu0
        %1023 = vst [vmem:[%s432] sm:$0xff] %v1012
        %1024 = vst [vmem:[%s432 + $0x8] sm:$0xff] %v1015
        %1025 = vst [vmem:[%s432 + $0x10] sm:$0xff] %v1018
        %1026 = vst [vmem:[%s432 + $0x18] sm:$0xff] %v1021
        %1027 = vadd.xlane.f32.xlu0 %v1012
        %v1028 = vpop.xlane.xlu0 %1027
        %1029 = vadd.xlane.f32.xlu0 %v1015
        %v1030 = vpop.xlane.xlu0 %1029
        %1031 = vadd.xlane.f32.xlu0 %v1018
        %v1032 = vpop.xlane.xlu0 %1031
        %1033 = vadd.xlane.f32.xlu0 %v1021
        %v1034 = vpop.xlane.xlu0 %1033
        %v1035 = vadd.f32 %v1028, 0.0
        %v1036 = vadd.f32 %v1030, 0.0
        %v1037 = vadd.f32 %v1032, 0.0
        %v1038 = vadd.f32 %v1034, 0.0
        %v1039 = vmul.f32 %v1012, %v1012
        %v1040 = vmul.f32 %v1015, %v1015
        %v1041 = vmul.f32 %v1018, %v1018
        %v1042 = vmul.f32 %v1021, %v1021
        %1043 = vadd.xlane.f32.xlu0 %v1039
        %v1044 = vpop.xlane.xlu0 %1043
        %1045 = vadd.xlane.f32.xlu0 %v1040
        %v1046 = vpop.xlane.xlu0 %1045
        %1047 = vadd.xlane.f32.xlu0 %v1041
        %v1048 = vpop.xlane.xlu0 %1047
        %1049 = vadd.xlane.f32.xlu0 %v1042
        %v1050 = vpop.xlane.xlu0 %1049
        %v1051 = vadd.f32 %v1044, 0.0
        %v1052 = vadd.f32 %v1046, 0.0
        %v1053 = vadd.f32 %v1048, 0.0
        %v1054 = vadd.f32 %v1050, 0.0
        %v1055 = vld [vmem:[#allocation2 + $0x20] sm:$0xff]
        %v1056 = vld [vmem:[#allocation2 + $0x28] sm:$0xff]
        %v1057 = vld [vmem:[#allocation2 + $0x30] sm:$0xff]
        %v1058 = vld [vmem:[#allocation2 + $0x38] sm:$0xff]
        %v1059 = vld [vmem:[#allocation2 + $0x40] sm:$0xff]
        %v1060 = vld [vmem:[#allocation2 + $0x48] sm:$0xff]
        %v1061 = vld [vmem:[#allocation2 + $0x50] sm:$0xff]
        %v1062 = vld [vmem:[#allocation2 + $0x58] sm:$0xff]
        %v1063 = vld [vmem:[#allocation2 + $0x60] sm:$0xff]
        %v1064 = vld [vmem:[#allocation2 + $0x68] sm:$0xff]
        %v1065 = vld [vmem:[#allocation2 + $0x70] sm:$0xff]
        %v1066 = vld [vmem:[#allocation2 + $0x78] sm:$0xff]
        %v1067 = vld [vmem:[%s3] sm:$0xff]
        %v1068 = vld [vmem:[%s3 + $0x8] sm:$0xff]
        %v1069 = vld [vmem:[%s3 + $0x10] sm:$0xff]
        %v1070 = vld [vmem:[%s3 + $0x18] sm:$0xff]
        %v1072 = vsel %vm981, %v1067, 0
        %v1075 = vsel %vm981, %v1068, 0
        %v1078 = vsel %vm981, %v1069, 0
        %v1081 = vsel %vm981, %v1070, 0
        %1083 = vmatpush.msra.mxu0 0.0
        %1084 = vmatpush.msra.mxu0 0.0
        %1085 = vmatpush.msra.mxu0 0.0
        %1086 = vmatpush.msra.mxu0 0.0
        %1087 = vmatpush.msra.mxu0 %v1066
        %1088 = vmatpush.msra.mxu0 %v1065
        %1089 = vmatpush.msra.mxu0 %v1064
        %1090 = vmatpush.msra.mxu0 %v1063
        %1091 = vmatpush.msra.mxu0 %v1062
        %1092 = vmatpush.msra.mxu0 %v1061
        %1093 = vmatpush.msra.mxu0 %v1060
        %1094 = vmatpush.msra.mxu0 %v1059
        %1095 = vmatpush.msra.mxu0 %v1058
        %1096 = vmatpush.msra.mxu0 %v1057
        %1097 = vmatpush.msra.mxu0 %v1056
        %1098 = vmatpush.msra.mxu0 %v1055
        %1099 = vmatmul.f32.gmra.mxu0 %v1072
        %v1100 = vpop.f32.mrf.mxu0
        %v1101 = vadd.f32 %v964, %v1100
        %1102 = vmatmul.f32.gmra.mxu0 %v1075
        %v1103 = vpop.f32.mrf.mxu0
        %v1104 = vadd.f32 %v969, %v1103
        %1105 = vmatmul.f32.gmra.mxu0 %v1078
        %v1106 = vpop.f32.mrf.mxu0
        %v1107 = vadd.f32 %v974, %v1106
        %1108 = vmatmul.f32.gmra.mxu0 %v1081
        %v1109 = vpop.f32.mrf.mxu0
        %v1110 = vadd.f32 %v979, %v1109
        %1111 = vdwg.mxu0
        %s1112 = scalar_lea.vmem %s432, 32 [#allocation4]
        %1113 = vst [vmem:[%s1112] sm:$0xff] %v1101
        %1114 = vst [vmem:[%s1112 + $0x8] sm:$0xff] %v1104
        %1115 = vst [vmem:[%s1112 + $0x10] sm:$0xff] %v1107
        %1116 = vst [vmem:[%s1112 + $0x18] sm:$0xff] %v1110
        %1117 = vadd.xlane.f32.xlu0 %v1101
        %v1118 = vpop.xlane.xlu0 %1117
        %1119 = vadd.xlane.f32.xlu0 %v1104
        %v1120 = vpop.xlane.xlu0 %1119
        %1121 = vadd.xlane.f32.xlu0 %v1107
        %v1122 = vpop.xlane.xlu0 %1121
        %1123 = vadd.xlane.f32.xlu0 %v1110
        %v1124 = vpop.xlane.xlu0 %1123
        %v1125 = vadd.f32 %v1035, %v1118
        %v1126 = vadd.f32 %v1036, %v1120
        %v1127 = vadd.f32 %v1037, %v1122
        %v1128 = vadd.f32 %v1038, %v1124
        %v1129 = vmul.f32 %v1101, %v1101
        %v1130 = vmul.f32 %v1104, %v1104
        %v1131 = vmul.f32 %v1107, %v1107
        %v1132 = vmul.f32 %v1110, %v1110
        %1133 = vadd.xlane.f32.xlu0 %v1129
        %v1134 = vpop.xlane.xlu0 %1133
        %1135 = vadd.xlane.f32.xlu0 %v1130
        %v1136 = vpop.xlane.xlu0 %1135
        %1137 = vadd.xlane.f32.xlu0 %v1131
        %v1138 = vpop.xlane.xlu0 %1137
        %1139 = vadd.xlane.f32.xlu0 %v1132
        %v1140 = vpop.xlane.xlu0 %1139
        %v1141 = vadd.f32 %v1051, %v1134
        %v1142 = vadd.f32 %v1052, %v1136
        %v1143 = vadd.f32 %v1053, %v1138
        %v1144 = vadd.f32 %v1054, %v1140
        %v1145 = vld [vmem:[#allocation2 + $0x40] sm:$0xff]
        %v1146 = vld [vmem:[#allocation2 + $0x48] sm:$0xff]
        %v1147 = vld [vmem:[#allocation2 + $0x50] sm:$0xff]
        %v1148 = vld [vmem:[#allocation2 + $0x58] sm:$0xff]
        %v1149 = vld [vmem:[#allocation2 + $0x60] sm:$0xff]
        %v1150 = vld [vmem:[#allocation2 + $0x68] sm:$0xff]
        %v1151 = vld [vmem:[#allocation2 + $0x70] sm:$0xff]
        %v1152 = vld [vmem:[#allocation2 + $0x78] sm:$0xff]
        %v1153 = vld [vmem:[#allocation2 + $0x80] sm:$0xff]
        %v1154 = vld [vmem:[#allocation2 + $0x88] sm:$0xff]
        %v1155 = vld [vmem:[#allocation2 + $0x90] sm:$0xff]
        %v1156 = vld [vmem:[#allocation2 + $0x98] sm:$0xff]
        %v1157 = vld [vmem:[%s3] sm:$0xff]
        %v1158 = vld [vmem:[%s3 + $0x8] sm:$0xff]
        %v1159 = vld [vmem:[%s3 + $0x10] sm:$0xff]
        %v1160 = vld [vmem:[%s3 + $0x18] sm:$0xff]
        %v1162 = vsel %vm981, %v1157, 0
        %v1165 = vsel %vm981, %v1158, 0
        %v1168 = vsel %vm981, %v1159, 0
        %v1171 = vsel %vm981, %v1160, 0
        %1173 = vmatpush.msra.mxu0 0.0
        %1174 = vmatpush.msra.mxu0 0.0
        %1175 = vmatpush.msra.mxu0 0.0
        %1176 = vmatpush.msra.mxu0 0.0
        %1177 = vmatpush.msra.mxu0 %v1156
        %1178 = vmatpush.msra.mxu0 %v1155
        %1179 = vmatpush.msra.mxu0 %v1154
        %1180 = vmatpush.msra.mxu0 %v1153
        %1181 = vmatpush.msra.mxu0 %v1152
        %1182 = vmatpush.msra.mxu0 %v1151
        %1183 = vmatpush.msra.mxu0 %v1150
        %1184 = vmatpush.msra.mxu0 %v1149
        %1185 = vmatpush.msra.mxu0 %v1148
        %1186 = vmatpush.msra.mxu0 %v1147
        %1187 = vmatpush.msra.mxu0 %v1146
        %1188 = vmatpush.msra.mxu0 %v1145
        %1189 = vmatmul.f32.gmra.mxu0 %v1162
        %v1190 = vpop.f32.mrf.mxu0
        %v1191 = vadd.f32 %v964, %v1190
        %1192 = vmatmul.f32.gmra.mxu0 %v1165
        %v1193 = vpop.f32.mrf.mxu0
        %v1194 = vadd.f32 %v969, %v1193
        %1195 = vmatmul.f32.gmra.mxu0 %v1168
        %v1196 = vpop.f32.mrf.mxu0
        %v1197 = vadd.f32 %v974, %v1196
        %1198 = vmatmul.f32.gmra.mxu0 %v1171
        %v1199 = vpop.f32.mrf.mxu0
        %v1200 = vadd.f32 %v979, %v1199
        %1201 = vdwg.mxu0
        %s1202 = scalar_lea.vmem %s432, 64 [#allocation4]
        %1203 = vst [vmem:[%s1202] sm:$0xff] %v1191
        %1204 = vst [vmem:[%s1202 + $0x8] sm:$0xff] %v1194
        %1205 = vst [vmem:[%s1202 + $0x10] sm:$0xff] %v1197
        %1206 = vst [vmem:[%s1202 + $0x18] sm:$0xff] %v1200
        %1207 = vadd.xlane.f32.xlu0 %v1191
        %v1208 = vpop.xlane.xlu0 %1207
        %1209 = vadd.xlane.f32.xlu0 %v1194
        %v1210 = vpop.xlane.xlu0 %1209
        %1211 = vadd.xlane.f32.xlu0 %v1197
        %v1212 = vpop.xlane.xlu0 %1211
        %1213 = vadd.xlane.f32.xlu0 %v1200
        %v1214 = vpop.xlane.xlu0 %1213
        %v1215 = vadd.f32 %v1125, %v1208
        %v1216 = vadd.f32 %v1126, %v1210
        %v1217 = vadd.f32 %v1127, %v1212
        %v1218 = vadd.f32 %v1128, %v1214
        %v1219 = vmul.f32 %v1191, %v1191
        %v1220 = vmul.f32 %v1194, %v1194
        %v1221 = vmul.f32 %v1197, %v1197
        %v1222 = vmul.f32 %v1200, %v1200
        %1223 = vadd.xlane.f32.xlu0 %v1219
        %v1224 = vpop.xlane.xlu0 %1223
        %1225 = vadd.xlane.f32.xlu0 %v1220
        %v1226 = vpop.xlane.xlu0 %1225
        %1227 = vadd.xlane.f32.xlu0 %v1221
        %v1228 = vpop.xlane.xlu0 %1227
        %1229 = vadd.xlane.f32.xlu0 %v1222
        %v1230 = vpop.xlane.xlu0 %1229
        %v1231 = vadd.f32 %v1141, %v1224
        %v1232 = vadd.f32 %v1142, %v1226
        %v1233 = vadd.f32 %v1143, %v1228
        %v1234 = vadd.f32 %v1144, %v1230
        %v1235 = vld [vmem:[#allocation2 + $0x60] sm:$0xff]
        %v1236 = vld [vmem:[#allocation2 + $0x68] sm:$0xff]
        %v1237 = vld [vmem:[#allocation2 + $0x70] sm:$0xff]
        %v1238 = vld [vmem:[#allocation2 + $0x78] sm:$0xff]
        %v1239 = vld [vmem:[#allocation2 + $0x80] sm:$0xff]
        %v1240 = vld [vmem:[#allocation2 + $0x88] sm:$0xff]
        %v1241 = vld [vmem:[#allocation2 + $0x90] sm:$0xff]
        %v1242 = vld [vmem:[#allocation2 + $0x98] sm:$0xff]
        %v1243 = vld [vmem:[#allocation2 + $0xa0] sm:$0xff]
        %v1244 = vld [vmem:[#allocation2 + $0xa8] sm:$0xff]
        %v1245 = vld [vmem:[#allocation2 + $0xb0] sm:$0xff]
        %v1246 = vld [vmem:[#allocation2 + $0xb8] sm:$0xff]
        %v1247 = vld [vmem:[%s3] sm:$0xff]
        %v1248 = vld [vmem:[%s3 + $0x8] sm:$0xff]
        %v1249 = vld [vmem:[%s3 + $0x10] sm:$0xff]
        %v1250 = vld [vmem:[%s3 + $0x18] sm:$0xff]
        %v1252 = vsel %vm981, %v1247, 0
        %v1255 = vsel %vm981, %v1248, 0
        %v1258 = vsel %vm981, %v1249, 0
        %v1261 = vsel %vm981, %v1250, 0
        %1263 = vmatpush.msra.mxu0 0.0
        %1264 = vmatpush.msra.mxu0 0.0
        %1265 = vmatpush.msra.mxu0 0.0
        %1266 = vmatpush.msra.mxu0 0.0
        %1267 = vmatpush.msra.mxu0 %v1246
        %1268 = vmatpush.msra.mxu0 %v1245
        %1269 = vmatpush.msra.mxu0 %v1244
        %1270 = vmatpush.msra.mxu0 %v1243
        %1271 = vmatpush.msra.mxu0 %v1242
        %1272 = vmatpush.msra.mxu0 %v1241
        %1273 = vmatpush.msra.mxu0 %v1240
        %1274 = vmatpush.msra.mxu0 %v1239
        %1275 = vmatpush.msra.mxu0 %v1238
        %1276 = vmatpush.msra.mxu0 %v1237
        %1277 = vmatpush.msra.mxu0 %v1236
        %1278 = vmatpush.msra.mxu0 %v1235
        %1279 = vmatmul.f32.gmra.mxu0 %v1252
        %v1280 = vpop.f32.mrf.mxu0
        %v1281 = vadd.f32 %v964, %v1280
        %1282 = vmatmul.f32.gmra.mxu0 %v1255
        %v1283 = vpop.f32.mrf.mxu0
        %v1284 = vadd.f32 %v969, %v1283
        %1285 = vmatmul.f32.gmra.mxu0 %v1258
        %v1286 = vpop.f32.mrf.mxu0
        %v1287 = vadd.f32 %v974, %v1286
        %1288 = vmatmul.f32.gmra.mxu0 %v1261
        %v1289 = vpop.f32.mrf.mxu0
        %v1290 = vadd.f32 %v979, %v1289
        %1291 = vdwg.mxu0
        %s1292 = scalar_lea.vmem %s432, 96 [#allocation4]
        %1293 = vst [vmem:[%s1292] sm:$0xff] %v1281
        %1294 = vst [vmem:[%s1292 + $0x8] sm:$0xff] %v1284
        %1295 = vst [vmem:[%s1292 + $0x10] sm:$0xff] %v1287
        %1296 = vst [vmem:[%s1292 + $0x18] sm:$0xff] %v1290
        %1297 = vadd.xlane.f32.xlu0 %v1281
        %v1298 = vpop.xlane.xlu0 %1297
        %1299 = vadd.xlane.f32.xlu0 %v1284
        %v1300 = vpop.xlane.xlu0 %1299
        %1301 = vadd.xlane.f32.xlu0 %v1287
        %v1302 = vpop.xlane.xlu0 %1301
        %1303 = vadd.xlane.f32.xlu0 %v1290
        %v1304 = vpop.xlane.xlu0 %1303
        %v1305 = vadd.f32 %v1215, %v1298
        %v1306 = vadd.f32 %v1216, %v1300
        %v1307 = vadd.f32 %v1217, %v1302
        %v1308 = vadd.f32 %v1218, %v1304
        %v1309 = vmul.f32 %v1281, %v1281
        %v1310 = vmul.f32 %v1284, %v1284
        %v1311 = vmul.f32 %v1287, %v1287
        %v1312 = vmul.f32 %v1290, %v1290
        %1313 = vadd.xlane.f32.xlu0 %v1309
        %v1314 = vpop.xlane.xlu0 %1313
        %1315 = vadd.xlane.f32.xlu0 %v1310
        %v1316 = vpop.xlane.xlu0 %1315
        %1317 = vadd.xlane.f32.xlu0 %v1311
        %v1318 = vpop.xlane.xlu0 %1317
        %1319 = vadd.xlane.f32.xlu0 %v1312
        %v1320 = vpop.xlane.xlu0 %1319
        %v1321 = vadd.f32 %v1231, %v1314
        %v1322 = vadd.f32 %v1232, %v1316
        %v1323 = vadd.f32 %v1233, %v1318
        %v1324 = vadd.f32 %v1234, %v1320
        %v1325 = vld [vmem:[%s475] sm:$0xff]
        %v1326 = vld [vmem:[%s475 + $0x8] sm:$0xff]
        %v1327 = vld [vmem:[%s475 + $0x10] sm:$0xff]
        %v1328 = vld [vmem:[%s475 + $0x18] sm:$0xff]
        %v1329 = vadd.f32 %v1325, %v1305
        %v1330 = vadd.f32 %v1326, %v1306
        %v1331 = vadd.f32 %v1327, %v1307
        %v1332 = vadd.f32 %v1328, %v1308
        %vm1333 = vcmask 7168
        %1334 = vst.msk [vmem:[%s475] sm:$0xff] %vm1333, %v1329
        %1335 = vst.msk [vmem:[%s475 + $0x8] sm:$0xff] %vm1333, %v1330
        %1336 = vst.msk [vmem:[%s475 + $0x10] sm:$0xff] %vm1333, %v1331
        %1337 = vst.msk [vmem:[%s475 + $0x18] sm:$0xff] %vm1333, %v1332
        %v1338 = vld [vmem:[%s484] sm:$0xff]
        %v1339 = vld [vmem:[%s484 + $0x8] sm:$0xff]
        %v1340 = vld [vmem:[%s484 + $0x10] sm:$0xff]
        %v1341 = vld [vmem:[%s484 + $0x18] sm:$0xff]
        %v1342 = vadd.f32 %v1338, %v1321
        %v1343 = vadd.f32 %v1339, %v1322
        %v1344 = vadd.f32 %v1340, %v1323
        %v1345 = vadd.f32 %v1341, %v1324
        %1346 = vst.msk [vmem:[%s484] sm:$0xff] %vm1333, %v1342
        %1347 = vst.msk [vmem:[%s484 + $0x8] sm:$0xff] %vm1333, %v1343
        %1348 = vst.msk [vmem:[%s484 + $0x10] sm:$0xff] %vm1333, %v1344
        %1349 = vst.msk [vmem:[%s484 + $0x18] sm:$0xff] %vm1333, %v1345
        %s1350 = sand.u32 %s174, 1
        %s1351 = sand.u32 %s174, 1
        %s1352 = smul.addr %s1351, 128
        %s1353 = scalar_lea.vmem [#allocation4], %s1352
        %p1354 = scmp.lt.s32.totalorder %s24, 1
        %s1355 = scalar_select %p1354, %s24, 1
        %p1356 = scmp.lt.s32.totalorder %s25, 1
        %s1357 = scalar_select %p1356, %s25, 1
        %s1358 = smul.addr %s1357, 4
        %s1359 = smul.addr %s1355, 8
        %s1360 = sadd.s32 %s1358, %s1359
        %s1361 = smul.addr %s1360, 8
        %s1362 = scalar_lea.vmem %s6, %s1361
        %p1363 = scmp.lt.s32.totalorder %s24, 1
        %s1364 = scalar_select %p1363, %s24, 1
        %p1365 = scmp.lt.s32.totalorder %s25, 1
        %s1366 = scalar_select %p1365, %s25, 1
        %s1367 = smul.addr %s1366, 4
        %s1368 = smul.addr %s1364, 8
        %s1369 = sadd.s32 %s1367, %s1368
        %s1370 = smul.addr %s1369, 8
        %s1371 = scalar_lea.vmem %s7, %s1370
        // Predicated region
        $region83: #{conv3d_layer_pallas.4} parent=73 // pred_check
          %p1372 = pneg %p184
        $region84: #{conv3d_layer_pallas.4} parent=73 // pred_check_branch
          %1374 = sbr.rel (%p1372) target = $region86
        $region85: #{conv3d_layer_pallas.4} parent=73 // pred_region
          %s1375 = sadd.s32 %s25, %s26
          %s1376 = smul.addr %s24, 32
          %s1377 = sadd.s32 %s1375, %s1376
          %s1378 = smul.addr %s1377, 8
          %s1379 = scalar_lea.vmem %s5, %s1378
          // Predicated region
          $region87: #{conv3d_layer_pallas.4} parent=85 // pred_check
            _
          $region88: #{conv3d_layer_pallas.4} parent=85 // pred_check_branch
            %1381 = sbr.rel (0) target = $region90
          $region89: #{conv3d_layer_pallas.4} parent=85 // pred_region
            // Predicated region
            $region91: #{conv3d_layer_pallas.4} parent=89 // pred_check
              _
            $region92: #{conv3d_layer_pallas.4} parent=89 // pred_check_branch
              %1383 = sbr.rel (0) target = $region94
            $region93: #{conv3d_layer_pallas.4} parent=89 // pred_region
              // Predicated region
              $region106: #{conv3d_layer_pallas.4} parent=93 // pred_check
                _
              $region107: #{conv3d_layer_pallas.4} parent=93 // pred_check_branch
                %1429 = sbr.rel (0) target = $region109
              $region108: #{conv3d_layer_pallas.4} parent=93 // pred_region
                loop: start=0, step=1, limit=1
                $region110: #{conv3d_layer_pallas.4} parent=108 // loop_pre_header
                  _
                $region111: #{conv3d_layer_pallas.4} parent=108 // loop_header
                  %s1431 = sphi 0, %s1435
                  %p1432 = scmp.ge.s32.totalorder %s1431, 1
                  %s1436 = sphi %s1353, %s1353
                  %s1437 = sphi %s1379, %s1379
                $region112: #{conv3d_layer_pallas.4} parent=108 // loop_header_branch
                  %1434 = sbr.rel (%p1432) target = $region116
                $region113: #{conv3d_layer_pallas.4} parent=108 // loop_body
                  %v1438 = vld [vmem:[%s1436] sm:$0xff]
                  %1439 = vst [vmem:[%s1437] sm:$0xff] %v1438
                  %v1440 = vld [vmem:[%s1436 + $0x8] sm:$0xff]
                  %1441 = vst [vmem:[%s1437 + $0x10] sm:$0xff] %v1440
                  %v1442 = vld [vmem:[%s1436 + $0x10] sm:$0xff]
                  %1443 = vst [vmem:[%s1437 + $0x20] sm:$0xff] %v1442
                  %v1444 = vld [vmem:[%s1436 + $0x18] sm:$0xff]
                  %1445 = vst [vmem:[%s1437 + $0x30] sm:$0xff] %v1444
                  %v1446 = vld [vmem:[%s1436 + $0x20] sm:$0xff]
                  %1447 = vst [vmem:[%s1437 + $0x40] sm:$0xff] %v1446
                  %v1448 = vld [vmem:[%s1436 + $0x28] sm:$0xff]
                  %1449 = vst [vmem:[%s1437 + $0x50] sm:$0xff] %v1448
                  %v1450 = vld [vmem:[%s1436 + $0x30] sm:$0xff]
                  %1451 = vst [vmem:[%s1437 + $0x60] sm:$0xff] %v1450
                  %v1452 = vld [vmem:[%s1436 + $0x38] sm:$0xff]
                  %1453 = vst [vmem:[%s1437 + $0x70] sm:$0xff] %v1452
                  %v1454 = vld [vmem:[%s1436 + $0x40] sm:$0xff]
                  %1455 = vst [vmem:[%s1437 + $0x80] sm:$0xff] %v1454
                  %v1456 = vld [vmem:[%s1436 + $0x48] sm:$0xff]
                  %1457 = vst [vmem:[%s1437 + $0x90] sm:$0xff] %v1456
                  %v1458 = vld [vmem:[%s1436 + $0x50] sm:$0xff]
                  %1459 = vst [vmem:[%s1437 + $0xa0] sm:$0xff] %v1458
                  %v1460 = vld [vmem:[%s1436 + $0x58] sm:$0xff]
                  %1461 = vst [vmem:[%s1437 + $0xb0] sm:$0xff] %v1460
                  %v1462 = vld [vmem:[%s1436 + $0x60] sm:$0xff]
                  %1463 = vst [vmem:[%s1437 + $0xc0] sm:$0xff] %v1462
                  %v1464 = vld [vmem:[%s1436 + $0x68] sm:$0xff]
                  %1465 = vst [vmem:[%s1437 + $0xd0] sm:$0xff] %v1464
                  %v1466 = vld [vmem:[%s1436 + $0x70] sm:$0xff]
                  %1467 = vst [vmem:[%s1437 + $0xe0] sm:$0xff] %v1466
                  %v1468 = vld [vmem:[%s1436 + $0x78] sm:$0xff]
                  %1469 = vst [vmem:[%s1437 + $0xf0] sm:$0xff] %v1468
                $region114: #{conv3d_layer_pallas.4} parent=108 // loop_footer
                  %s1435 = sadd.s32 1, %s1431
                $region115: #{conv3d_layer_pallas.4} parent=108 // loop_footer_branch
                  %1430 = sbr.rel target = $region111
                $region116: #{conv3d_layer_pallas.4} parent=108 // loop_exit
                  _
              $region109: #{conv3d_layer_pallas.4} parent=93 // pred_fallthru
                _
              // Predicated region
              $region117: #{conv3d_layer_pallas.4} parent=93 // pred_check
                _
              $region118: #{conv3d_layer_pallas.4} parent=93 // pred_check_branch
                %1471 = sbr.rel target = $region120
              $region119: #{conv3d_layer_pallas.4} parent=93 // pred_region
                _
              $region120: #{conv3d_layer_pallas.4} parent=93 // pred_fallthru
                _
            $region94: #{conv3d_layer_pallas.4} parent=89 // pred_fallthru
              _
            // Predicated region
            $region95: #{conv3d_layer_pallas.4} parent=89 // pred_check
              _
            $region96: #{conv3d_layer_pallas.4} parent=89 // pred_check_branch
              %1385 = sbr.rel target = $region98
            $region97: #{conv3d_layer_pallas.4} parent=89 // pred_region
              %s1387 = ssub.s32 256, 1
              loop: start=0, step=1, limit=1
              $region99: #{conv3d_layer_pallas.4} parent=97 // loop_pre_header
                _
              $region100: #{conv3d_layer_pallas.4} parent=97 // loop_header
                %s1389 = sphi 0, %s1393
                %p1390 = scmp.ge.s32.totalorder %s1389, 1
                %s1394 = sphi %s1353, %s1353
                %s1395 = sphi %s1379, %s1379
              $region101: #{conv3d_layer_pallas.4} parent=97 // loop_header_branch
                %1392 = sbr.rel (%p1390) target = $region105
              $region102: #{conv3d_layer_pallas.4} parent=97 // loop_body
                %v1396 = vld [vmem:[%s1394] sm:%s1387]
                %1397 = vst [vmem:[%s1395] sm:%s1387] %v1396
                %v1398 = vld [vmem:[%s1394 + $0x8] sm:%s1387]
                %1399 = vst [vmem:[%s1395 + $0x10] sm:%s1387] %v1398
                %v1400 = vld [vmem:[%s1394 + $0x10] sm:%s1387]
                %1401 = vst [vmem:[%s1395 + $0x20] sm:%s1387] %v1400
                %v1402 = vld [vmem:[%s1394 + $0x18] sm:%s1387]
                %1403 = vst [vmem:[%s1395 + $0x30] sm:%s1387] %v1402
                %v1404 = vld [vmem:[%s1394 + $0x20] sm:%s1387]
                %1405 = vst [vmem:[%s1395 + $0x40] sm:%s1387] %v1404
                %v1406 = vld [vmem:[%s1394 + $0x28] sm:%s1387]
                %1407 = vst [vmem:[%s1395 + $0x50] sm:%s1387] %v1406
                %v1408 = vld [vmem:[%s1394 + $0x30] sm:%s1387]
                %1409 = vst [vmem:[%s1395 + $0x60] sm:%s1387] %v1408
                %v1410 = vld [vmem:[%s1394 + $0x38] sm:%s1387]
                %1411 = vst [vmem:[%s1395 + $0x70] sm:%s1387] %v1410
                %v1412 = vld [vmem:[%s1394 + $0x40] sm:%s1387]
                %1413 = vst [vmem:[%s1395 + $0x80] sm:%s1387] %v1412
                %v1414 = vld [vmem:[%s1394 + $0x48] sm:%s1387]
                %1415 = vst [vmem:[%s1395 + $0x90] sm:%s1387] %v1414
                %v1416 = vld [vmem:[%s1394 + $0x50] sm:%s1387]
                %1417 = vst [vmem:[%s1395 + $0xa0] sm:%s1387] %v1416
                %v1418 = vld [vmem:[%s1394 + $0x58] sm:%s1387]
                %1419 = vst [vmem:[%s1395 + $0xb0] sm:%s1387] %v1418
                %v1420 = vld [vmem:[%s1394 + $0x60] sm:%s1387]
                %1421 = vst [vmem:[%s1395 + $0xc0] sm:%s1387] %v1420
                %v1422 = vld [vmem:[%s1394 + $0x68] sm:%s1387]
                %1423 = vst [vmem:[%s1395 + $0xd0] sm:%s1387] %v1422
                %v1424 = vld [vmem:[%s1394 + $0x70] sm:%s1387]
                %1425 = vst [vmem:[%s1395 + $0xe0] sm:%s1387] %v1424
                %v1426 = vld [vmem:[%s1394 + $0x78] sm:%s1387]
                %1427 = vst [vmem:[%s1395 + $0xf0] sm:%s1387] %v1426
              $region103: #{conv3d_layer_pallas.4} parent=97 // loop_footer
                %s1393 = sadd.s32 1, %s1389
              $region104: #{conv3d_layer_pallas.4} parent=97 // loop_footer_branch
                %1388 = sbr.rel target = $region100
              $region105: #{conv3d_layer_pallas.4} parent=97 // loop_exit
                _
            $region98: #{conv3d_layer_pallas.4} parent=89 // pred_fallthru
              _
          $region90: #{conv3d_layer_pallas.4} parent=85 // pred_fallthru
            _
          %1472 = vnop
        $region86: #{conv3d_layer_pallas.4} parent=73 // pred_fallthru
          _
        // Predicated region
        $region121: #{conv3d_layer_pallas.4} parent=73 // pred_check
          %p1473 = pneg %p212
        $region122: #{conv3d_layer_pallas.4} parent=73 // pred_check_branch
          %1475 = sbr.rel (%p1473) target = $region124
        $region123: #{conv3d_layer_pallas.4} parent=73 // pred_region
          _
        $region124: #{conv3d_layer_pallas.4} parent=73 // pred_fallthru
          _
        // Predicated region
        $region125: #{conv3d_layer_pallas.4} parent=73 // pred_check
          %p1476 = pneg %p240
        $region126: #{conv3d_layer_pallas.4} parent=73 // pred_check_branch
          %1478 = sbr.rel (%p1476) target = $region128
        $region127: #{conv3d_layer_pallas.4} parent=73 // pred_region
          _
        $region128: #{conv3d_layer_pallas.4} parent=73 // pred_fallthru
          _
      $region74: #{conv3d_layer_pallas.4} parent=5 // pred_fallthru
        _
      %p1479 = scmp.le.s32.totalorder 2, %s14
      // Predicated region
      $region129: #{conv3d_layer_pallas.4} parent=5 // pred_check
        %p1480 = pneg %p1479
      $region130: #{conv3d_layer_pallas.4} parent=5 // pred_check_branch
        %1482 = sbr.rel (%p1480) target = $region132
      $region131: #{conv3d_layer_pallas.4} parent=5 // pred_region
        %s1483 = ssub.s32 %s14, 2
        // Predicated region
        $region133: #{conv3d_layer_pallas.4} parent=131 // pred_check
          %p1484 = pneg %p190
        $region134: #{conv3d_layer_pallas.4} parent=131 // pred_check_branch
          %1486 = sbr.rel (%p1484) target = $region136
        $region135: #{conv3d_layer_pallas.4} parent=131 // pred_region
          %s1487 = sand.u32 %s175, 1
          %s1488 = sand.u32 %s175, 1
          %s1489 = smul.addr %s1488, 128
          %s1490 = scalar_lea.vmem [#allocation4], %s1489
        $region136: #{conv3d_layer_pallas.4} parent=131 // pred_fallthru
          _
        // Predicated region
        $region137: #{conv3d_layer_pallas.4} parent=131 // pred_check
          %p1491 = pneg %p218
        $region138: #{conv3d_layer_pallas.4} parent=131 // pred_check_branch
          %1493 = sbr.rel (%p1491) target = $region140
        $region139: #{conv3d_layer_pallas.4} parent=131 // pred_region
          %p1494 = scmp.lt.s32.totalorder %s27, 1
          %s1495 = scalar_select %p1494, %s27, 1
          %p1496 = scmp.lt.s32.totalorder %s28, 1
          %s1497 = scalar_select %p1496, %s28, 1
          %s1498 = smul.addr %s1497, 4
          %s1499 = smul.addr %s1495, 8
          %s1500 = sadd.s32 %s1498, %s1499
          %s1501 = smul.addr %s1500, 8
          %s1502 = scalar_lea.vmem %s6, %s1501
        $region140: #{conv3d_layer_pallas.4} parent=131 // pred_fallthru
          _
        // Predicated region
        $region141: #{conv3d_layer_pallas.4} parent=131 // pred_check
          %p1503 = pneg %p246
        $region142: #{conv3d_layer_pallas.4} parent=131 // pred_check_branch
          %1505 = sbr.rel (%p1503) target = $region144
        $region143: #{conv3d_layer_pallas.4} parent=131 // pred_region
          %p1506 = scmp.lt.s32.totalorder %s27, 1
          %s1507 = scalar_select %p1506, %s27, 1
          %p1508 = scmp.lt.s32.totalorder %s28, 1
          %s1509 = scalar_select %p1508, %s28, 1
          %s1510 = smul.addr %s1509, 4
          %s1511 = smul.addr %s1507, 8
          %s1512 = sadd.s32 %s1510, %s1511
          %s1513 = smul.addr %s1512, 8
          %s1514 = scalar_lea.vmem %s7, %s1513
        $region144: #{conv3d_layer_pallas.4} parent=131 // pred_fallthru
          _
      $region132: #{conv3d_layer_pallas.4} parent=5 // pred_fallthru
        _
    $region6: #{conv3d_layer_pallas.4} parent=1 // loop_footer
      %s18 = sadd.s32 1, %s14
    $region7: #{conv3d_layer_pallas.4} parent=1 // loop_footer_branch
      %13 = sbr.rel target = $region3
    $region8: #{conv3d_layer_pallas.4} parent=1 // loop_exit
      _

</llo_original>
